<compile_context>
chip_gen: v7x
topology: tpu7x:2x2x1
jax: 0.10.0
libtpu: 0.0.40
codegen_flags: <defaults>
</compile_context>

<pallas_src>
import numpy as np
import jax
import jax.numpy as jnp
from jax import lax
from jax.experimental import pallas as pl
from jax.experimental.pallas import tpu as pltpu


# ----------------------------------------------------------------------------
# Diffusion schedule (cosine), computed in numpy float64 then cast to float32.
# ----------------------------------------------------------------------------
def cosine_beta_schedule(timesteps, s=0.008):
    steps = timesteps + 1
    x = np.linspace(0, steps, steps)
    alphas_cumprod = np.cos(((x / steps) + s) / (1 + s) * np.pi * 0.5) ** 2
    alphas_cumprod = alphas_cumprod / alphas_cumprod[0]
    betas = 1.0 - (alphas_cumprod[1:] / alphas_cumprod[:-1])
    return np.clip(betas, a_min=0.0, a_max=0.999)


def make_diffusion_constants(n_timesteps):
    betas = cosine_beta_schedule(n_timesteps)
    alphas = 1.0 - betas
    alphas_cumprod = np.cumprod(alphas, axis=0)
    alphas_cumprod_prev = np.concatenate([np.ones(1), alphas_cumprod[:-1]])

    sqrt_recip_ac = np.sqrt(1.0 / alphas_cumprod)
    sqrt_recipm1_ac = np.sqrt(1.0 / alphas_cumprod - 1.0)
    posterior_variance = betas * (1.0 - alphas_cumprod_prev) / (1.0 - alphas_cumprod)
    posterior_log_var = np.log(np.clip(posterior_variance, 1e-20, None))
    coef1 = betas * np.sqrt(alphas_cumprod_prev) / (1.0 - alphas_cumprod)
    coef2 = (1.0 - alphas_cumprod_prev) * np.sqrt(alphas) / (1.0 - alphas_cumprod)
    return dict(
        sqrt_recip_ac=sqrt_recip_ac,
        sqrt_recipm1_ac=sqrt_recipm1_ac,
        posterior_log_var=posterior_log_var,
        coef1=coef1,
        coef2=coef2,
    )


# ----------------------------------------------------------------------------
# Masks (get_mask_mode / get_mask_from_batch) -- pure index glue, done in JAX.
# ----------------------------------------------------------------------------
def build_masks(horizon, transition_dim, observation_dim, task_dim, mode):
    idx = jnp.arange(transition_dim)[None, :]                      # (1, T)
    mask_0 = (idx >= transition_dim - task_dim).astype(jnp.float32)
    mask_0 = jnp.broadcast_to(mask_0, (horizon, transition_dim))
    mask_0 = mask_0.at[0, :observation_dim].set(1.0)
    mask_1 = (idx < transition_dim - task_dim).astype(jnp.float32)
    mask_1 = jnp.broadcast_to(mask_1, (horizon, transition_dim))
    stacked = jnp.stack([mask_0, mask_1])                          # (2, H, T)
    return stacked[mode]                                           # (B, H, T)


def pad_to(x, shape, value=0.0):
    pads = [(0, s - d) for d, s in zip(x.shape, shape)]
    return jnp.pad(x, pads, constant_values=value)


# ----------------------------------------------------------------------------
# Pallas kernel: the WHOLE reverse-diffusion loop in one invocation.
# ----------------------------------------------------------------------------
COEF_STRIDE = 8   # flattened SMEM table stride per step


def ddpm_loop_kernel(coefs_ref,           # SMEM (n_steps*COEF_STRIDE,) f32
                     traj_ref, mask_ref, init_ref, noise_ref,   # VMEM (lane-padded)
                     w1_ref, tb_ref, mb_ref, w2_ref, b2_ref,    # VMEM (lane-padded)
                     out_ref):
    n_steps = noise_ref.shape[0]

    m = mask_ref[...]                        # (BHP, TP)
    one_minus_m = 1.0 - m
    traj_m = traj_ref[...] * m               # hoisted: constant across all steps
    mode_bias = mb_ref[...]                  # hoisted (BHP, HdP)
    w1 = w1_ref[...]
    w2 = w2_ref[...]
    b2 = b2_ref[...]
    x0 = traj_m + init_ref[...] * one_minus_m

    def body(s, x):
        base = s * COEF_STRIDE
        sr    = coefs_ref[base + 1]          # sqrt_recip_alphas_cumprod[t]
        srm1  = coefs_ref[base + 2]          # sqrt_recipm1_alphas_cumprod[t]
        c1    = coefs_ref[base + 3]          # posterior_mean_coef1[t]
        c2    = coefs_ref[base + 4]          # posterior_mean_coef2[t]
        sigma = coefs_ref[base + 5]          # exp(0.5*log_var[t]) * (t > 0), host-precomputed

        # ---- synthetic epsilon model: 2-layer MLP, time/mode biases pre-folded
        h = jnp.dot(x, w1, preferred_element_type=jnp.float32)
        h = jnp.tanh(h + mode_bias + tb_ref[pl.ds(s, 1), :])
        eps = jnp.dot(h, w2, preferred_element_type=jnp.float32) + b2

        # ---- predict_start_from_noise + clamp (clip_denoised=True) ----------
        x_recon = jnp.clip(sr * x - srm1 * eps, -1.0, 1.0)

        # ---- q_posterior mean + p_sample -------------------------------------
        mean = c1 * x_recon + c2 * x
        x_new = mean + sigma * noise_ref[s]

        # ---- re-apply conditioning mask --------------------------------------
        return traj_m + x_new * one_minus_m

    x_final = lax.fori_loop(0, n_steps, body, x0, unroll=True)
    out_ref[...] = x_final


# ----------------------------------------------------------------------------
# Wrapper (glue): builds constants / masks / noise / padded layouts, one call.
# ----------------------------------------------------------------------------
def gaussian_diffusion_task_forward(traj_known, mode, params, *,
                                    observation_dim, action_dim, task_dim,
                                    n_timesteps, rng):
    B, H, T = traj_known.shape
    BH = B * H
    Hd = params["w1"].shape[1]

    LANE, SUB = 128, 8
    TP = ((T + LANE - 1) // LANE) * LANE          # lane-dense transition dim
    HdP = ((Hd + LANE - 1) // LANE) * LANE        # lane-dense hidden dim
    BHP = ((BH + SUB - 1) // SUB) * SUB           # sublane-aligned row count

    consts = make_diffusion_constants(n_timesteps)

    # per-step scalar table, ordered by loop step s (t = n_steps-1-s); flat 1D SMEM
    coefs = np.zeros((n_timesteps, COEF_STRIDE), dtype=np.float32)
    for s in range(n_timesteps):
        t = n_timesteps - 1 - s
        coefs[s, 0] = float(t)
        coefs[s, 1] = consts["sqrt_recip_ac"][t]
        coefs[s, 2] = consts["sqrt_recipm1_ac"][t]
        coefs[s, 3] = consts["coef1"][t]
        coefs[s, 4] = consts["coef2"][t]
        coefs[s, 5] = np.exp(0.5 * consts["posterior_log_var"][t]) if t > 0 else 0.0
    coefs_flat = jnp.asarray(coefs.reshape(-1))

    mask = build_masks(H, T, observation_dim, task_dim, mode)       # (B, H, T)

    k_init, k_steps = jax.random.split(rng)
    init_noise = jax.random.normal(k_init, (B, H, T), dtype=jnp.float32)
    step_noise = jax.random.normal(k_steps, (n_timesteps, B, H, T),
                                   dtype=jnp.float32)

    # flatten to kernel row layout (B*H, T)
    traj2 = traj_known.reshape(BH, T).astype(jnp.float32)
    mask2 = mask.reshape(BH, T)
    init2 = init_noise.reshape(BH, T)
    noise2 = step_noise.reshape(n_timesteps, BH, T)
    mode_rows = jnp.repeat(mode.astype(jnp.float32)[:, None], H, axis=0)  # (BH, 1)

    w1, b1, wt, wm, w2, b2 = (params["w1"], params["b1"], params["wt"],
                              params["wm"], params["w2"], params["b2"])

    # hoisted bias tables (avoid re-emitting broadcasts inside the loop)
    t_vals = jnp.asarray([float(n_timesteps - 1 - s) for s in range(n_timesteps)],
                         jnp.float32)                                # (n_steps,)
    tb = b1 + t_vals[:, None] * wt                                   # (n_steps, Hd)
    mode_bias = mode_rows * wm                                       # (BH, Hd)

    # lane-dense zero-padded layouts (mask padded with 1.0 so padded lanes stay 0)
    traj_p = pad_to(traj2, (BHP, TP), 0.0)
    mask_p = pad_to(mask2, (BHP, TP), 1.0)
    init_p = pad_to(init2, (BHP, TP), 0.0)
    noise_p = pad_to(noise2, (n_timesteps, BHP, TP), 0.0)
    w1_p = pad_to(w1, (TP, HdP), 0.0)
    tb_p = pad_to(tb, (n_timesteps, HdP), 0.0)
    mb_p = pad_to(mode_bias, (BHP, HdP), 0.0)
    w2_p = pad_to(w2, (HdP, TP), 0.0)
    b2_p = pad_to(b2, (1, TP), 0.0)

    vmem = pl.BlockSpec(memory_space=pltpu.MemorySpace.VMEM)
    smem = pl.BlockSpec(memory_space=pltpu.MemorySpace.SMEM)

    out_p = pl.pallas_call(
        ddpm_loop_kernel,
        out_shape=jax.ShapeDtypeStruct((BHP, TP), jnp.float32),
        in_specs=[smem] + [vmem] * 9,
        out_specs=vmem,
        compiler_params=pltpu.CompilerParams(vmem_limit_bytes=16 * 1024 * 1024),
    )(coefs_flat, traj_p, mask_p, init_p, noise_p,
      w1_p, tb_p, mb_p, w2_p, b2_p)

    out2 = out_p[:BH, :T]

    # pure-JAX reference of the same loop (for correctness checking).
    # NOTE: reference matmuls use Precision.HIGHEST while the kernel uses the
    # Mosaic default f32 path; the 1e-2 tolerance in __main__ covers that.
    def reference():
        x = traj2 * mask2 + init2 * (1.0 - mask2)
        for s in range(n_timesteps):
            sr, srm1, c1, c2, sigma = (float(coefs[s, k]) for k in (1, 2, 3, 4, 5))
            h = jnp.tanh(
                jnp.dot(x, w1, precision=jax.lax.Precision.HIGHEST)
                + mode_bias + tb[s][None, :])
            eps = jnp.dot(h, w2, precision=jax.lax.Precision.HIGHEST) + b2
            x_recon = jnp.clip(sr * x - srm1 * eps, -1.0, 1.0)
            mean = c1 * x_recon + c2 * x
            x = mean + sigma * noise2[s]
            x = traj2 * mask2 + x * (1.0 - mask2)
        return x

    return out2.reshape(B, H, T), reference().reshape(B, H, T)


if __name__ == "__main__":
    # small, module-consistent shapes
    B = 2
    horizon = 8
    observation_dim = 4
    action_dim = 2
    task_dim = 3
    transition_dim = observation_dim + action_dim + 1 + task_dim + 1   # 11
    hidden = 32
    n_timesteps = 20

    key = jax.random.PRNGKey(0)
    k_traj, k_w1, k_b1, k_wt, k_wm, k_w2, k_b2, k_noise = jax.random.split(key, 8)

    traj_known = jax.random.uniform(k_traj, (B, horizon, transition_dim),
                                    minval=-1.0, maxval=1.0, dtype=jnp.float32)
    mode = jnp.array([0, 1], dtype=jnp.int32)                           # (B,)

    params = dict(
        w1=0.3 * jax.random.normal(k_w1, (transition_dim, hidden), jnp.float32),
        b1=0.1 * jax.random.normal(k_b1, (1, hidden), jnp.float32),
        wt=0.05 * jax.random.normal(k_wt, (1, hidden), jnp.float32),
        wm=0.1 * jax.random.normal(k_wm, (1, hidden), jnp.float32),
        w2=0.3 * jax.random.normal(k_w2, (hidden, transition_dim), jnp.float32),
        b2=0.1 * jax.random.normal(k_b2, (1, transition_dim), jnp.float32),
    )

    out, ref = gaussian_diffusion_task_forward(
        traj_known, mode, params,
        observation_dim=observation_dim, action_dim=action_dim,
        task_dim=task_dim, n_timesteps=n_timesteps, rng=k_noise)

    out = jax.block_until_ready(out)
    ref = jax.block_until_ready(ref)
    np.testing.assert_allclose(np.asarray(out), np.asarray(ref),
                               rtol=1e-2, atol=1e-2)
    print("KERNEL_OK")
</pallas_src>

<mosaic_0001>
module attributes {stable_mosaic.version = 11 : i64} {
  func.func @ddpm_loop_kernel(%arg0: memref<160xf32, #tpu.memory_space<smem>>, %arg1: memref<16x128xf32, #tpu.memory_space<vmem>>, %arg2: memref<16x128xf32, #tpu.memory_space<vmem>>, %arg3: memref<16x128xf32, #tpu.memory_space<vmem>>, %arg4: memref<20x16x128xf32, #tpu.memory_space<vmem>>, %arg5: memref<128x128xf32, #tpu.memory_space<vmem>>, %arg6: memref<20x128xf32, #tpu.memory_space<vmem>>, %arg7: memref<16x128xf32, #tpu.memory_space<vmem>>, %arg8: memref<128x128xf32, #tpu.memory_space<vmem>>, %arg9: memref<1x128xf32, #tpu.memory_space<vmem>>, %arg10: memref<16x128xf32, #tpu.memory_space<vmem>>) attributes {dimension_semantics = [], scalar_prefetch = 0 : i64, scratch_operands = 0 : i64, tpu.core_type = #tpu.core_type<tc>} {
    %c0 = arith.constant 0 : index
    %c0_0 = arith.constant 0 : index
    %0 = vector.load %arg2[%c0, %c0_0] : memref<16x128xf32, #tpu.memory_space<vmem>>, vector<16x128xf32>
    %cst = arith.constant 1.000000e+00 : f32
    %1 = vector.broadcast %cst : f32 to vector<16x128xf32>
    %2 = arith.subf %1, %0 : vector<16x128xf32>
    %c0_1 = arith.constant 0 : index
    %c0_2 = arith.constant 0 : index
    %3 = vector.load %arg1[%c0_1, %c0_2] : memref<16x128xf32, #tpu.memory_space<vmem>>, vector<16x128xf32>
    %4 = arith.mulf %3, %0 : vector<16x128xf32>
    %c0_3 = arith.constant 0 : index
    %c0_4 = arith.constant 0 : index
    %5 = vector.load %arg7[%c0_3, %c0_4] : memref<16x128xf32, #tpu.memory_space<vmem>>, vector<16x128xf32>
    %c0_5 = arith.constant 0 : index
    %c0_6 = arith.constant 0 : index
    %6 = vector.load %arg5[%c0_5, %c0_6] : memref<128x128xf32, #tpu.memory_space<vmem>>, vector<128x128xf32>
    %c0_7 = arith.constant 0 : index
    %c0_8 = arith.constant 0 : index
    %7 = vector.load %arg8[%c0_7, %c0_8] : memref<128x128xf32, #tpu.memory_space<vmem>>, vector<128x128xf32>
    %c0_9 = arith.constant 0 : index
    %c0_10 = arith.constant 0 : index
    %8 = vector.load %arg9[%c0_9, %c0_10] : memref<1x128xf32, #tpu.memory_space<vmem>>, vector<1x128xf32>
    %c0_11 = arith.constant 0 : index
    %c0_12 = arith.constant 0 : index
    %9 = vector.load %arg3[%c0_11, %c0_12] : memref<16x128xf32, #tpu.memory_space<vmem>>, vector<16x128xf32>
    %10 = arith.mulf %9, %2 : vector<16x128xf32>
    %11 = arith.addf %4, %10 : vector<16x128xf32>
    %c0_i32 = arith.constant 0 : i32
    %c8_i32 = arith.constant 8 : i32
    %12 = arith.muli %c0_i32, %c8_i32 : i32
    %c1_i32 = arith.constant 1 : i32
    %13 = arith.addi %12, %c1_i32 : i32
    %14 = arith.index_cast %13 : i32 to index
    %15 = memref.load %arg0[%14] : memref<160xf32, #tpu.memory_space<smem>>
    %c2_i32 = arith.constant 2 : i32
    %16 = arith.addi %12, %c2_i32 : i32
    %17 = arith.index_cast %16 : i32 to index
    %18 = memref.load %arg0[%17] : memref<160xf32, #tpu.memory_space<smem>>
    %c3_i32 = arith.constant 3 : i32
    %19 = arith.addi %12, %c3_i32 : i32
    %20 = arith.index_cast %19 : i32 to index
    %21 = memref.load %arg0[%20] : memref<160xf32, #tpu.memory_space<smem>>
    %c4_i32 = arith.constant 4 : i32
    %22 = arith.addi %12, %c4_i32 : i32
    %23 = arith.index_cast %22 : i32 to index
    %24 = memref.load %arg0[%23] : memref<160xf32, #tpu.memory_space<smem>>
    %c5_i32 = arith.constant 5 : i32
    %25 = arith.addi %12, %c5_i32 : i32
    %26 = arith.index_cast %25 : i32 to index
    %27 = memref.load %arg0[%26] : memref<160xf32, #tpu.memory_space<smem>>
    %cst_13 = arith.constant dense<0.000000e+00> : vector<16x128xf32>
    %28 = tpu.matmul %11, %6, %cst_13 {dimension_numbers = #tpu.dot_dimension_numbers<[1], [0], [0], [1], [0, 0, 1, 1], [], []>} : vector<16x128xf32>, vector<128x128xf32>, vector<16x128xf32> -> vector<16x128xf32>
    %29 = arith.addf %28, %5 : vector<16x128xf32>
    %30 = arith.index_cast %c0_i32 : i32 to index
    %c0_14 = arith.constant 0 : index
    %31 = vector.load %arg6[%30, %c0_14] : memref<20x128xf32, #tpu.memory_space<vmem>>, vector<1x128xf32>
    %32 = vector.broadcast %31 : vector<1x128xf32> to vector<16x128xf32>
    %33 = arith.addf %29, %32 : vector<16x128xf32>
    %34 = math.tanh %33 : vector<16x128xf32>
    %cst_15 = arith.constant dense<0.000000e+00> : vector<16x128xf32>
    %35 = tpu.matmul %34, %7, %cst_15 {dimension_numbers = #tpu.dot_dimension_numbers<[1], [0], [0], [1], [0, 0, 1, 1], [], []>} : vector<16x128xf32>, vector<128x128xf32>, vector<16x128xf32> -> vector<16x128xf32>
    %36 = vector.broadcast %8 : vector<1x128xf32> to vector<16x128xf32>
    %37 = arith.addf %35, %36 : vector<16x128xf32>
    %38 = vector.broadcast %15 : f32 to vector<16x128xf32>
    %39 = arith.mulf %38, %11 : vector<16x128xf32>
    %40 = vector.broadcast %18 : f32 to vector<16x128xf32>
    %41 = arith.mulf %40, %37 : vector<16x128xf32>
    %42 = arith.subf %39, %41 : vector<16x128xf32>
    %cst_16 = arith.constant -1.000000e+00 : f32
    %cst_17 = arith.constant 1.000000e+00 : f32
    %43 = vector.broadcast %cst_16 : f32 to vector<16x128xf32>
    %44 = arith.maximumf %43, %42 : vector<16x128xf32>
    %45 = vector.broadcast %cst_17 : f32 to vector<16x128xf32>
    %46 = arith.minimumf %45, %44 : vector<16x128xf32>
    %47 = vector.broadcast %21 : f32 to vector<16x128xf32>
    %48 = arith.mulf %47, %46 : vector<16x128xf32>
    %49 = vector.broadcast %24 : f32 to vector<16x128xf32>
    %50 = arith.mulf %49, %11 : vector<16x128xf32>
    %51 = arith.addf %48, %50 : vector<16x128xf32>
    %52 = arith.index_cast %c0_i32 : i32 to index
    %c0_18 = arith.constant 0 : index
    %c0_19 = arith.constant 0 : index
    %53 = vector.load %arg4[%52, %c0_18, %c0_19] : memref<20x16x128xf32, #tpu.memory_space<vmem>>, vector<1x16x128xf32>
    %54 = vector.shape_cast %53 : vector<1x16x128xf32> to vector<16x128xf32>
    %55 = vector.broadcast %27 : f32 to vector<16x128xf32>
    %56 = arith.mulf %55, %54 : vector<16x128xf32>
    %57 = arith.addf %51, %56 : vector<16x128xf32>
    %58 = arith.mulf %57, %2 : vector<16x128xf32>
    %59 = arith.addf %4, %58 : vector<16x128xf32>
    %c1_i32_20 = arith.constant 1 : i32
    %c8_i32_21 = arith.constant 8 : i32
    %60 = arith.muli %c1_i32_20, %c8_i32_21 : i32
    %c1_i32_22 = arith.constant 1 : i32
    %61 = arith.addi %60, %c1_i32_22 : i32
    %62 = arith.index_cast %61 : i32 to index
    %63 = memref.load %arg0[%62] : memref<160xf32, #tpu.memory_space<smem>>
    %c2_i32_23 = arith.constant 2 : i32
    %64 = arith.addi %60, %c2_i32_23 : i32
    %65 = arith.index_cast %64 : i32 to index
    %66 = memref.load %arg0[%65] : memref<160xf32, #tpu.memory_space<smem>>
    %c3_i32_24 = arith.constant 3 : i32
    %67 = arith.addi %60, %c3_i32_24 : i32
    %68 = arith.index_cast %67 : i32 to index
    %69 = memref.load %arg0[%68] : memref<160xf32, #tpu.memory_space<smem>>
    %c4_i32_25 = arith.constant 4 : i32
    %70 = arith.addi %60, %c4_i32_25 : i32
    %71 = arith.index_cast %70 : i32 to index
    %72 = memref.load %arg0[%71] : memref<160xf32, #tpu.memory_space<smem>>
    %c5_i32_26 = arith.constant 5 : i32
    %73 = arith.addi %60, %c5_i32_26 : i32
    %74 = arith.index_cast %73 : i32 to index
    %75 = memref.load %arg0[%74] : memref<160xf32, #tpu.memory_space<smem>>
    %cst_27 = arith.constant dense<0.000000e+00> : vector<16x128xf32>
    %76 = tpu.matmul %59, %6, %cst_27 {dimension_numbers = #tpu.dot_dimension_numbers<[1], [0], [0], [1], [0, 0, 1, 1], [], []>} : vector<16x128xf32>, vector<128x128xf32>, vector<16x128xf32> -> vector<16x128xf32>
    %77 = arith.addf %76, %5 : vector<16x128xf32>
    %78 = arith.index_cast %c1_i32_20 : i32 to index
    %c0_28 = arith.constant 0 : index
    %79 = vector.load %arg6[%78, %c0_28] : memref<20x128xf32, #tpu.memory_space<vmem>>, vector<1x128xf32>
    %80 = vector.broadcast %79 : vector<1x128xf32> to vector<16x128xf32>
    %81 = arith.addf %77, %80 : vector<16x128xf32>
    %82 = math.tanh %81 : vector<16x128xf32>
    %cst_29 = arith.constant dense<0.000000e+00> : vector<16x128xf32>
    %83 = tpu.matmul %82, %7, %cst_29 {dimension_numbers = #tpu.dot_dimension_numbers<[1], [0], [0], [1], [0, 0, 1, 1], [], []>} : vector<16x128xf32>, vector<128x128xf32>, vector<16x128xf32> -> vector<16x128xf32>
    %84 = vector.broadcast %8 : vector<1x128xf32> to vector<16x128xf32>
    %85 = arith.addf %83, %84 : vector<16x128xf32>
    %86 = vector.broadcast %63 : f32 to vector<16x128xf32>
    %87 = arith.mulf %86, %59 : vector<16x128xf32>
    %88 = vector.broadcast %66 : f32 to vector<16x128xf32>
    %89 = arith.mulf %88, %85 : vector<16x128xf32>
    %90 = arith.subf %87, %89 : vector<16x128xf32>
    %cst_30 = arith.constant -1.000000e+00 : f32
    %cst_31 = arith.constant 1.000000e+00 : f32
    %91 = vector.broadcast %cst_30 : f32 to vector<16x128xf32>
    %92 = arith.maximumf %91, %90 : vector<16x128xf32>
    %93 = vector.broadcast %cst_31 : f32 to vector<16x128xf32>
    %94 = arith.minimumf %93, %92 : vector<16x128xf32>
    %95 = vector.broadcast %69 : f32 to vector<16x128xf32>
    %96 = arith.mulf %95, %94 : vector<16x128xf32>
    %97 = vector.broadcast %72 : f32 to vector<16x128xf32>
    %98 = arith.mulf %97, %59 : vector<16x128xf32>
    %99 = arith.addf %96, %98 : vector<16x128xf32>
    %100 = arith.index_cast %c1_i32_20 : i32 to index
    %c0_32 = arith.constant 0 : index
    %c0_33 = arith.constant 0 : index
    %101 = vector.load %arg4[%100, %c0_32, %c0_33] : memref<20x16x128xf32, #tpu.memory_space<vmem>>, vector<1x16x128xf32>
    %102 = vector.shape_cast %101 : vector<1x16x128xf32> to vector<16x128xf32>
    %103 = vector.broadcast %75 : f32 to vector<16x128xf32>
    %104 = arith.mulf %103, %102 : vector<16x128xf32>
    %105 = arith.addf %99, %104 : vector<16x128xf32>
    %106 = arith.mulf %105, %2 : vector<16x128xf32>
    %107 = arith.addf %4, %106 : vector<16x128xf32>
    %c2_i32_34 = arith.constant 2 : i32
    %c8_i32_35 = arith.constant 8 : i32
    %108 = arith.muli %c2_i32_34, %c8_i32_35 : i32
    %c1_i32_36 = arith.constant 1 : i32
    %109 = arith.addi %108, %c1_i32_36 : i32
    %110 = arith.index_cast %109 : i32 to index
    %111 = memref.load %arg0[%110] : memref<160xf32, #tpu.memory_space<smem>>
    %c2_i32_37 = arith.constant 2 : i32
    %112 = arith.addi %108, %c2_i32_37 : i32
    %113 = arith.index_cast %112 : i32 to index
    %114 = memref.load %arg0[%113] : memref<160xf32, #tpu.memory_space<smem>>
    %c3_i32_38 = arith.constant 3 : i32
    %115 = arith.addi %108, %c3_i32_38 : i32
    %116 = arith.index_cast %115 : i32 to index
    %117 = memref.load %arg0[%116] : memref<160xf32, #tpu.memory_space<smem>>
    %c4_i32_39 = arith.constant 4 : i32
    %118 = arith.addi %108, %c4_i32_39 : i32
    %119 = arith.index_cast %118 : i32 to index
    %120 = memref.load %arg0[%119] : memref<160xf32, #tpu.memory_space<smem>>
    %c5_i32_40 = arith.constant 5 : i32
    %121 = arith.addi %108, %c5_i32_40 : i32
    %122 = arith.index_cast %121 : i32 to index
    %123 = memref.load %arg0[%122] : memref<160xf32, #tpu.memory_space<smem>>
    %cst_41 = arith.constant dense<0.000000e+00> : vector<16x128xf32>
    %124 = tpu.matmul %107, %6, %cst_41 {dimension_numbers = #tpu.dot_dimension_numbers<[1], [0], [0], [1], [0, 0, 1, 1], [], []>} : vector<16x128xf32>, vector<128x128xf32>, vector<16x128xf32> -> vector<16x128xf32>
    %125 = arith.addf %124, %5 : vector<16x128xf32>
    %126 = arith.index_cast %c2_i32_34 : i32 to index
    %c0_42 = arith.constant 0 : index
    %127 = vector.load %arg6[%126, %c0_42] : memref<20x128xf32, #tpu.memory_space<vmem>>, vector<1x128xf32>
    %128 = vector.broadcast %127 : vector<1x128xf32> to vector<16x128xf32>
    %129 = arith.addf %125, %128 : vector<16x128xf32>
    %130 = math.tanh %129 : vector<16x128xf32>
    %cst_43 = arith.constant dense<0.000000e+00> : vector<16x128xf32>
    %131 = tpu.matmul %130, %7, %cst_43 {dimension_numbers = #tpu.dot_dimension_numbers<[1], [0], [0], [1], [0, 0, 1, 1], [], []>} : vector<16x128xf32>, vector<128x128xf32>, vector<16x128xf32> -> vector<16x128xf32>
    %132 = vector.broadcast %8 : vector<1x128xf32> to vector<16x128xf32>
    %133 = arith.addf %131, %132 : vector<16x128xf32>
    %134 = vector.broadcast %111 : f32 to vector<16x128xf32>
    %135 = arith.mulf %134, %107 : vector<16x128xf32>
    %136 = vector.broadcast %114 : f32 to vector<16x128xf32>
    %137 = arith.mulf %136, %133 : vector<16x128xf32>
    %138 = arith.subf %135, %137 : vector<16x128xf32>
    %cst_44 = arith.constant -1.000000e+00 : f32
    %cst_45 = arith.constant 1.000000e+00 : f32
    %139 = vector.broadcast %cst_44 : f32 to vector<16x128xf32>
    %140 = arith.maximumf %139, %138 : vector<16x128xf32>
    %141 = vector.broadcast %cst_45 : f32 to vector<16x128xf32>
    %142 = arith.minimumf %141, %140 : vector<16x128xf32>
    %143 = vector.broadcast %117 : f32 to vector<16x128xf32>
    %144 = arith.mulf %143, %142 : vector<16x128xf32>
    %145 = vector.broadcast %120 : f32 to vector<16x128xf32>
    %146 = arith.mulf %145, %107 : vector<16x128xf32>
    %147 = arith.addf %144, %146 : vector<16x128xf32>
    %148 = arith.index_cast %c2_i32_34 : i32 to index
    %c0_46 = arith.constant 0 : index
    %c0_47 = arith.constant 0 : index
    %149 = vector.load %arg4[%148, %c0_46, %c0_47] : memref<20x16x128xf32, #tpu.memory_space<vmem>>, vector<1x16x128xf32>
    %150 = vector.shape_cast %149 : vector<1x16x128xf32> to vector<16x128xf32>
    %151 = vector.broadcast %123 : f32 to vector<16x128xf32>
    %152 = arith.mulf %151, %150 : vector<16x128xf32>
    %153 = arith.addf %147, %152 : vector<16x128xf32>
    %154 = arith.mulf %153, %2 : vector<16x128xf32>
    %155 = arith.addf %4, %154 : vector<16x128xf32>
    %c3_i32_48 = arith.constant 3 : i32
    %c8_i32_49 = arith.constant 8 : i32
    %156 = arith.muli %c3_i32_48, %c8_i32_49 : i32
    %c1_i32_50 = arith.constant 1 : i32
    %157 = arith.addi %156, %c1_i32_50 : i32
    %158 = arith.index_cast %157 : i32 to index
    %159 = memref.load %arg0[%158] : memref<160xf32, #tpu.memory_space<smem>>
    %c2_i32_51 = arith.constant 2 : i32
    %160 = arith.addi %156, %c2_i32_51 : i32
    %161 = arith.index_cast %160 : i32 to index
    %162 = memref.load %arg0[%161] : memref<160xf32, #tpu.memory_space<smem>>
    %c3_i32_52 = arith.constant 3 : i32
    %163 = arith.addi %156, %c3_i32_52 : i32
    %164 = arith.index_cast %163 : i32 to index
    %165 = memref.load %arg0[%164] : memref<160xf32, #tpu.memory_space<smem>>
    %c4_i32_53 = arith.constant 4 : i32
    %166 = arith.addi %156, %c4_i32_53 : i32
    %167 = arith.index_cast %166 : i32 to index
    %168 = memref.load %arg0[%167] : memref<160xf32, #tpu.memory_space<smem>>
    %c5_i32_54 = arith.constant 5 : i32
    %169 = arith.addi %156, %c5_i32_54 : i32
    %170 = arith.index_cast %169 : i32 to index
    %171 = memref.load %arg0[%170] : memref<160xf32, #tpu.memory_space<smem>>
    %cst_55 = arith.constant dense<0.000000e+00> : vector<16x128xf32>
    %172 = tpu.matmul %155, %6, %cst_55 {dimension_numbers = #tpu.dot_dimension_numbers<[1], [0], [0], [1], [0, 0, 1, 1], [], []>} : vector<16x128xf32>, vector<128x128xf32>, vector<16x128xf32> -> vector<16x128xf32>
    %173 = arith.addf %172, %5 : vector<16x128xf32>
    %174 = arith.index_cast %c3_i32_48 : i32 to index
    %c0_56 = arith.constant 0 : index
    %175 = vector.load %arg6[%174, %c0_56] : memref<20x128xf32, #tpu.memory_space<vmem>>, vector<1x128xf32>
    %176 = vector.broadcast %175 : vector<1x128xf32> to vector<16x128xf32>
    %177 = arith.addf %173, %176 : vector<16x128xf32>
    %178 = math.tanh %177 : vector<16x128xf32>
    %cst_57 = arith.constant dense<0.000000e+00> : vector<16x128xf32>
    %179 = tpu.matmul %178, %7, %cst_57 {dimension_numbers = #tpu.dot_dimension_numbers<[1], [0], [0], [1], [0, 0, 1, 1], [], []>} : vector<16x128xf32>, vector<128x128xf32>, vector<16x128xf32> -> vector<16x128xf32>
    %180 = vector.broadcast %8 : vector<1x128xf32> to vector<16x128xf32>
    %181 = arith.addf %179, %180 : vector<16x128xf32>
    %182 = vector.broadcast %159 : f32 to vector<16x128xf32>
    %183 = arith.mulf %182, %155 : vector<16x128xf32>
    %184 = vector.broadcast %162 : f32 to vector<16x128xf32>
    %185 = arith.mulf %184, %181 : vector<16x128xf32>
    %186 = arith.subf %183, %185 : vector<16x128xf32>
    %cst_58 = arith.constant -1.000000e+00 : f32
    %cst_59 = arith.constant 1.000000e+00 : f32
    %187 = vector.broadcast %cst_58 : f32 to vector<16x128xf32>
    %188 = arith.maximumf %187, %186 : vector<16x128xf32>
    %189 = vector.broadcast %cst_59 : f32 to vector<16x128xf32>
    %190 = arith.minimumf %189, %188 : vector<16x128xf32>
    %191 = vector.broadcast %165 : f32 to vector<16x128xf32>
    %192 = arith.mulf %191, %190 : vector<16x128xf32>
    %193 = vector.broadcast %168 : f32 to vector<16x128xf32>
    %194 = arith.mulf %193, %155 : vector<16x128xf32>
    %195 = arith.addf %192, %194 : vector<16x128xf32>
    %196 = arith.index_cast %c3_i32_48 : i32 to index
    %c0_60 = arith.constant 0 : index
    %c0_61 = arith.constant 0 : index
    %197 = vector.load %arg4[%196, %c0_60, %c0_61] : memref<20x16x128xf32, #tpu.memory_space<vmem>>, vector<1x16x128xf32>
    %198 = vector.shape_cast %197 : vector<1x16x128xf32> to vector<16x128xf32>
    %199 = vector.broadcast %171 : f32 to vector<16x128xf32>
    %200 = arith.mulf %199, %198 : vector<16x128xf32>
    %201 = arith.addf %195, %200 : vector<16x128xf32>
    %202 = arith.mulf %201, %2 : vector<16x128xf32>
    %203 = arith.addf %4, %202 : vector<16x128xf32>
    %c4_i32_62 = arith.constant 4 : i32
    %c8_i32_63 = arith.constant 8 : i32
    %204 = arith.muli %c4_i32_62, %c8_i32_63 : i32
    %c1_i32_64 = arith.constant 1 : i32
    %205 = arith.addi %204, %c1_i32_64 : i32
    %206 = arith.index_cast %205 : i32 to index
    %207 = memref.load %arg0[%206] : memref<160xf32, #tpu.memory_space<smem>>
    %c2_i32_65 = arith.constant 2 : i32
    %208 = arith.addi %204, %c2_i32_65 : i32
    %209 = arith.index_cast %208 : i32 to index
    %210 = memref.load %arg0[%209] : memref<160xf32, #tpu.memory_space<smem>>
    %c3_i32_66 = arith.constant 3 : i32
    %211 = arith.addi %204, %c3_i32_66 : i32
    %212 = arith.index_cast %211 : i32 to index
    %213 = memref.load %arg0[%212] : memref<160xf32, #tpu.memory_space<smem>>
    %c4_i32_67 = arith.constant 4 : i32
    %214 = arith.addi %204, %c4_i32_67 : i32
    %215 = arith.index_cast %214 : i32 to index
    %216 = memref.load %arg0[%215] : memref<160xf32, #tpu.memory_space<smem>>
    %c5_i32_68 = arith.constant 5 : i32
    %217 = arith.addi %204, %c5_i32_68 : i32
    %218 = arith.index_cast %217 : i32 to index
    %219 = memref.load %arg0[%218] : memref<160xf32, #tpu.memory_space<smem>>
    %cst_69 = arith.constant dense<0.000000e+00> : vector<16x128xf32>
    %220 = tpu.matmul %203, %6, %cst_69 {dimension_numbers = #tpu.dot_dimension_numbers<[1], [0], [0], [1], [0, 0, 1, 1], [], []>} : vector<16x128xf32>, vector<128x128xf32>, vector<16x128xf32> -> vector<16x128xf32>
    %221 = arith.addf %220, %5 : vector<16x128xf32>
    %222 = arith.index_cast %c4_i32_62 : i32 to index
    %c0_70 = arith.constant 0 : index
    %223 = vector.load %arg6[%222, %c0_70] : memref<20x128xf32, #tpu.memory_space<vmem>>, vector<1x128xf32>
    %224 = vector.broadcast %223 : vector<1x128xf32> to vector<16x128xf32>
    %225 = arith.addf %221, %224 : vector<16x128xf32>
    %226 = math.tanh %225 : vector<16x128xf32>
    %cst_71 = arith.constant dense<0.000000e+00> : vector<16x128xf32>
    %227 = tpu.matmul %226, %7, %cst_71 {dimension_numbers = #tpu.dot_dimension_numbers<[1], [0], [0], [1], [0, 0, 1, 1], [], []>} : vector<16x128xf32>, vector<128x128xf32>, vector<16x128xf32> -> vector<16x128xf32>
    %228 = vector.broadcast %8 : vector<1x128xf32> to vector<16x128xf32>
    %229 = arith.addf %227, %228 : vector<16x128xf32>
    %230 = vector.broadcast %207 : f32 to vector<16x128xf32>
    %231 = arith.mulf %230, %203 : vector<16x128xf32>
    %232 = vector.broadcast %210 : f32 to vector<16x128xf32>
    %233 = arith.mulf %232, %229 : vector<16x128xf32>
    %234 = arith.subf %231, %233 : vector<16x128xf32>
    %cst_72 = arith.constant -1.000000e+00 : f32
    %cst_73 = arith.constant 1.000000e+00 : f32
    %235 = vector.broadcast %cst_72 : f32 to vector<16x128xf32>
    %236 = arith.maximumf %235, %234 : vector<16x128xf32>
    %237 = vector.broadcast %cst_73 : f32 to vector<16x128xf32>
    %238 = arith.minimumf %237, %236 : vector<16x128xf32>
    %239 = vector.broadcast %213 : f32 to vector<16x128xf32>
    %240 = arith.mulf %239, %238 : vector<16x128xf32>
    %241 = vector.broadcast %216 : f32 to vector<16x128xf32>
    %242 = arith.mulf %241, %203 : vector<16x128xf32>
    %243 = arith.addf %240, %242 : vector<16x128xf32>
    %244 = arith.index_cast %c4_i32_62 : i32 to index
    %c0_74 = arith.constant 0 : index
    %c0_75 = arith.constant 0 : index
    %245 = vector.load %arg4[%244, %c0_74, %c0_75] : memref<20x16x128xf32, #tpu.memory_space<vmem>>, vector<1x16x128xf32>
    %246 = vector.shape_cast %245 : vector<1x16x128xf32> to vector<16x128xf32>
    %247 = vector.broadcast %219 : f32 to vector<16x128xf32>
    %248 = arith.mulf %247, %246 : vector<16x128xf32>
    %249 = arith.addf %243, %248 : vector<16x128xf32>
    %250 = arith.mulf %249, %2 : vector<16x128xf32>
    %251 = arith.addf %4, %250 : vector<16x128xf32>
    %c5_i32_76 = arith.constant 5 : i32
    %c8_i32_77 = arith.constant 8 : i32
    %252 = arith.muli %c5_i32_76, %c8_i32_77 : i32
    %c1_i32_78 = arith.constant 1 : i32
    %253 = arith.addi %252, %c1_i32_78 : i32
    %254 = arith.index_cast %253 : i32 to index
    %255 = memref.load %arg0[%254] : memref<160xf32, #tpu.memory_space<smem>>
    %c2_i32_79 = arith.constant 2 : i32
    %256 = arith.addi %252, %c2_i32_79 : i32
    %257 = arith.index_cast %256 : i32 to index
    %258 = memref.load %arg0[%257] : memref<160xf32, #tpu.memory_space<smem>>
    %c3_i32_80 = arith.constant 3 : i32
    %259 = arith.addi %252, %c3_i32_80 : i32
    %260 = arith.index_cast %259 : i32 to index
    %261 = memref.load %arg0[%260] : memref<160xf32, #tpu.memory_space<smem>>
    %c4_i32_81 = arith.constant 4 : i32
    %262 = arith.addi %252, %c4_i32_81 : i32
    %263 = arith.index_cast %262 : i32 to index
    %264 = memref.load %arg0[%263] : memref<160xf32, #tpu.memory_space<smem>>
    %c5_i32_82 = arith.constant 5 : i32
    %265 = arith.addi %252, %c5_i32_82 : i32
    %266 = arith.index_cast %265 : i32 to index
    %267 = memref.load %arg0[%266] : memref<160xf32, #tpu.memory_space<smem>>
    %cst_83 = arith.constant dense<0.000000e+00> : vector<16x128xf32>
    %268 = tpu.matmul %251, %6, %cst_83 {dimension_numbers = #tpu.dot_dimension_numbers<[1], [0], [0], [1], [0, 0, 1, 1], [], []>} : vector<16x128xf32>, vector<128x128xf32>, vector<16x128xf32> -> vector<16x128xf32>
    %269 = arith.addf %268, %5 : vector<16x128xf32>
    %270 = arith.index_cast %c5_i32_76 : i32 to index
    %c0_84 = arith.constant 0 : index
    %271 = vector.load %arg6[%270, %c0_84] : memref<20x128xf32, #tpu.memory_space<vmem>>, vector<1x128xf32>
    %272 = vector.broadcast %271 : vector<1x128xf32> to vector<16x128xf32>
    %273 = arith.addf %269, %272 : vector<16x128xf32>
    %274 = math.tanh %273 : vector<16x128xf32>
    %cst_85 = arith.constant dense<0.000000e+00> : vector<16x128xf32>
    %275 = tpu.matmul %274, %7, %cst_85 {dimension_numbers = #tpu.dot_dimension_numbers<[1], [0], [0], [1], [0, 0, 1, 1], [], []>} : vector<16x128xf32>, vector<128x128xf32>, vector<16x128xf32> -> vector<16x128xf32>
    %276 = vector.broadcast %8 : vector<1x128xf32> to vector<16x128xf32>
    %277 = arith.addf %275, %276 : vector<16x128xf32>
    %278 = vector.broadcast %255 : f32 to vector<16x128xf32>
    %279 = arith.mulf %278, %251 : vector<16x128xf32>
    %280 = vector.broadcast %258 : f32 to vector<16x128xf32>
    %281 = arith.mulf %280, %277 : vector<16x128xf32>
    %282 = arith.subf %279, %281 : vector<16x128xf32>
    %cst_86 = arith.constant -1.000000e+00 : f32
    %cst_87 = arith.constant 1.000000e+00 : f32
    %283 = vector.broadcast %cst_86 : f32 to vector<16x128xf32>
    %284 = arith.maximumf %283, %282 : vector<16x128xf32>
    %285 = vector.broadcast %cst_87 : f32 to vector<16x128xf32>
    %286 = arith.minimumf %285, %284 : vector<16x128xf32>
    %287 = vector.broadcast %261 : f32 to vector<16x128xf32>
    %288 = arith.mulf %287, %286 : vector<16x128xf32>
    %289 = vector.broadcast %264 : f32 to vector<16x128xf32>
    %290 = arith.mulf %289, %251 : vector<16x128xf32>
    %291 = arith.addf %288, %290 : vector<16x128xf32>
    %292 = arith.index_cast %c5_i32_76 : i32 to index
    %c0_88 = arith.constant 0 : index
    %c0_89 = arith.constant 0 : index
    %293 = vector.load %arg4[%292, %c0_88, %c0_89] : memref<20x16x128xf32, #tpu.memory_space<vmem>>, vector<1x16x128xf32>
    %294 = vector.shape_cast %293 : vector<1x16x128xf32> to vector<16x128xf32>
    %295 = vector.broadcast %267 : f32 to vector<16x128xf32>
    %296 = arith.mulf %295, %294 : vector<16x128xf32>
    %297 = arith.addf %291, %296 : vector<16x128xf32>
    %298 = arith.mulf %297, %2 : vector<16x128xf32>
    %299 = arith.addf %4, %298 : vector<16x128xf32>
    %c6_i32 = arith.constant 6 : i32
    %c8_i32_90 = arith.constant 8 : i32
    %300 = arith.muli %c6_i32, %c8_i32_90 : i32
    %c1_i32_91 = arith.constant 1 : i32
    %301 = arith.addi %300, %c1_i32_91 : i32
    %302 = arith.index_cast %301 : i32 to index
    %303 = memref.load %arg0[%302] : memref<160xf32, #tpu.memory_space<smem>>
    %c2_i32_92 = arith.constant 2 : i32
    %304 = arith.addi %300, %c2_i32_92 : i32
    %305 = arith.index_cast %304 : i32 to index
    %306 = memref.load %arg0[%305] : memref<160xf32, #tpu.memory_space<smem>>
    %c3_i32_93 = arith.constant 3 : i32
    %307 = arith.addi %300, %c3_i32_93 : i32
    %308 = arith.index_cast %307 : i32 to index
    %309 = memref.load %arg0[%308] : memref<160xf32, #tpu.memory_space<smem>>
    %c4_i32_94 = arith.constant 4 : i32
    %310 = arith.addi %300, %c4_i32_94 : i32
    %311 = arith.index_cast %310 : i32 to index
    %312 = memref.load %arg0[%311] : memref<160xf32, #tpu.memory_space<smem>>
    %c5_i32_95 = arith.constant 5 : i32
    %313 = arith.addi %300, %c5_i32_95 : i32
    %314 = arith.index_cast %313 : i32 to index
    %315 = memref.load %arg0[%314] : memref<160xf32, #tpu.memory_space<smem>>
    %cst_96 = arith.constant dense<0.000000e+00> : vector<16x128xf32>
    %316 = tpu.matmul %299, %6, %cst_96 {dimension_numbers = #tpu.dot_dimension_numbers<[1], [0], [0], [1], [0, 0, 1, 1], [], []>} : vector<16x128xf32>, vector<128x128xf32>, vector<16x128xf32> -> vector<16x128xf32>
    %317 = arith.addf %316, %5 : vector<16x128xf32>
    %318 = arith.index_cast %c6_i32 : i32 to index
    %c0_97 = arith.constant 0 : index
    %319 = vector.load %arg6[%318, %c0_97] : memref<20x128xf32, #tpu.memory_space<vmem>>, vector<1x128xf32>
    %320 = vector.broadcast %319 : vector<1x128xf32> to vector<16x128xf32>
    %321 = arith.addf %317, %320 : vector<16x128xf32>
    %322 = math.tanh %321 : vector<16x128xf32>
    %cst_98 = arith.constant dense<0.000000e+00> : vector<16x128xf32>
    %323 = tpu.matmul %322, %7, %cst_98 {dimension_numbers = #tpu.dot_dimension_numbers<[1], [0], [0], [1], [0, 0, 1, 1], [], []>} : vector<16x128xf32>, vector<128x128xf32>, vector<16x128xf32> -> vector<16x128xf32>
    %324 = vector.broadcast %8 : vector<1x128xf32> to vector<16x128xf32>
    %325 = arith.addf %323, %324 : vector<16x128xf32>
    %326 = vector.broadcast %303 : f32 to vector<16x128xf32>
    %327 = arith.mulf %326, %299 : vector<16x128xf32>
    %328 = vector.broadcast %306 : f32 to vector<16x128xf32>
    %329 = arith.mulf %328, %325 : vector<16x128xf32>
    %330 = arith.subf %327, %329 : vector<16x128xf32>
    %cst_99 = arith.constant -1.000000e+00 : f32
    %cst_100 = arith.constant 1.000000e+00 : f32
    %331 = vector.broadcast %cst_99 : f32 to vector<16x128xf32>
    %332 = arith.maximumf %331, %330 : vector<16x128xf32>
    %333 = vector.broadcast %cst_100 : f32 to vector<16x128xf32>
    %334 = arith.minimumf %333, %332 : vector<16x128xf32>
    %335 = vector.broadcast %309 : f32 to vector<16x128xf32>
    %336 = arith.mulf %335, %334 : vector<16x128xf32>
    %337 = vector.broadcast %312 : f32 to vector<16x128xf32>
    %338 = arith.mulf %337, %299 : vector<16x128xf32>
    %339 = arith.addf %336, %338 : vector<16x128xf32>
    %340 = arith.index_cast %c6_i32 : i32 to index
    %c0_101 = arith.constant 0 : index
    %c0_102 = arith.constant 0 : index
    %341 = vector.load %arg4[%340, %c0_101, %c0_102] : memref<20x16x128xf32, #tpu.memory_space<vmem>>, vector<1x16x128xf32>
    %342 = vector.shape_cast %341 : vector<1x16x128xf32> to vector<16x128xf32>
    %343 = vector.broadcast %315 : f32 to vector<16x128xf32>
    %344 = arith.mulf %343, %342 : vector<16x128xf32>
    %345 = arith.addf %339, %344 : vector<16x128xf32>
    %346 = arith.mulf %345, %2 : vector<16x128xf32>
    %347 = arith.addf %4, %346 : vector<16x128xf32>
    %c7_i32 = arith.constant 7 : i32
    %c8_i32_103 = arith.constant 8 : i32
    %348 = arith.muli %c7_i32, %c8_i32_103 : i32
    %c1_i32_104 = arith.constant 1 : i32
    %349 = arith.addi %348, %c1_i32_104 : i32
    %350 = arith.index_cast %349 : i32 to index
    %351 = memref.load %arg0[%350] : memref<160xf32, #tpu.memory_space<smem>>
    %c2_i32_105 = arith.constant 2 : i32
    %352 = arith.addi %348, %c2_i32_105 : i32
    %353 = arith.index_cast %352 : i32 to index
    %354 = memref.load %arg0[%353] : memref<160xf32, #tpu.memory_space<smem>>
    %c3_i32_106 = arith.constant 3 : i32
    %355 = arith.addi %348, %c3_i32_106 : i32
    %356 = arith.index_cast %355 : i32 to index
    %357 = memref.load %arg0[%356] : memref<160xf32, #tpu.memory_space<smem>>
    %c4_i32_107 = arith.constant 4 : i32
    %358 = arith.addi %348, %c4_i32_107 : i32
    %359 = arith.index_cast %358 : i32 to index
    %360 = memref.load %arg0[%359] : memref<160xf32, #tpu.memory_space<smem>>
    %c5_i32_108 = arith.constant 5 : i32
    %361 = arith.addi %348, %c5_i32_108 : i32
    %362 = arith.index_cast %361 : i32 to index
    %363 = memref.load %arg0[%362] : memref<160xf32, #tpu.memory_space<smem>>
    %cst_109 = arith.constant dense<0.000000e+00> : vector<16x128xf32>
    %364 = tpu.matmul %347, %6, %cst_109 {dimension_numbers = #tpu.dot_dimension_numbers<[1], [0], [0], [1], [0, 0, 1, 1], [], []>} : vector<16x128xf32>, vector<128x128xf32>, vector<16x128xf32> -> vector<16x128xf32>
    %365 = arith.addf %364, %5 : vector<16x128xf32>
    %366 = arith.index_cast %c7_i32 : i32 to index
    %c0_110 = arith.constant 0 : index
    %367 = vector.load %arg6[%366, %c0_110] : memref<20x128xf32, #tpu.memory_space<vmem>>, vector<1x128xf32>
    %368 = vector.broadcast %367 : vector<1x128xf32> to vector<16x128xf32>
    %369 = arith.addf %365, %368 : vector<16x128xf32>
    %370 = math.tanh %369 : vector<16x128xf32>
    %cst_111 = arith.constant dense<0.000000e+00> : vector<16x128xf32>
    %371 = tpu.matmul %370, %7, %cst_111 {dimension_numbers = #tpu.dot_dimension_numbers<[1], [0], [0], [1], [0, 0, 1, 1], [], []>} : vector<16x128xf32>, vector<128x128xf32>, vector<16x128xf32> -> vector<16x128xf32>
    %372 = vector.broadcast %8 : vector<1x128xf32> to vector<16x128xf32>
    %373 = arith.addf %371, %372 : vector<16x128xf32>
    %374 = vector.broadcast %351 : f32 to vector<16x128xf32>
    %375 = arith.mulf %374, %347 : vector<16x128xf32>
    %376 = vector.broadcast %354 : f32 to vector<16x128xf32>
    %377 = arith.mulf %376, %373 : vector<16x128xf32>
    %378 = arith.subf %375, %377 : vector<16x128xf32>
    %cst_112 = arith.constant -1.000000e+00 : f32
    %cst_113 = arith.constant 1.000000e+00 : f32
    %379 = vector.broadcast %cst_112 : f32 to vector<16x128xf32>
    %380 = arith.maximumf %379, %378 : vector<16x128xf32>
    %381 = vector.broadcast %cst_113 : f32 to vector<16x128xf32>
    %382 = arith.minimumf %381, %380 : vector<16x128xf32>
    %383 = vector.broadcast %357 : f32 to vector<16x128xf32>
    %384 = arith.mulf %383, %382 : vector<16x128xf32>
    %385 = vector.broadcast %360 : f32 to vector<16x128xf32>
    %386 = arith.mulf %385, %347 : vector<16x128xf32>
    %387 = arith.addf %384, %386 : vector<16x128xf32>
    %388 = arith.index_cast %c7_i32 : i32 to index
    %c0_114 = arith.constant 0 : index
    %c0_115 = arith.constant 0 : index
    %389 = vector.load %arg4[%388, %c0_114, %c0_115] : memref<20x16x128xf32, #tpu.memory_space<vmem>>, vector<1x16x128xf32>
    %390 = vector.shape_cast %389 : vector<1x16x128xf32> to vector<16x128xf32>
    %391 = vector.broadcast %363 : f32 to vector<16x128xf32>
    %392 = arith.mulf %391, %390 : vector<16x128xf32>
    %393 = arith.addf %387, %392 : vector<16x128xf32>
    %394 = arith.mulf %393, %2 : vector<16x128xf32>
    %395 = arith.addf %4, %394 : vector<16x128xf32>
    %c8_i32_116 = arith.constant 8 : i32
    %c8_i32_117 = arith.constant 8 : i32
    %396 = arith.muli %c8_i32_116, %c8_i32_117 : i32
    %c1_i32_118 = arith.constant 1 : i32
    %397 = arith.addi %396, %c1_i32_118 : i32
    %398 = arith.index_cast %397 : i32 to index
    %399 = memref.load %arg0[%398] : memref<160xf32, #tpu.memory_space<smem>>
    %c2_i32_119 = arith.constant 2 : i32
    %400 = arith.addi %396, %c2_i32_119 : i32
    %401 = arith.index_cast %400 : i32 to index
    %402 = memref.load %arg0[%401] : memref<160xf32, #tpu.memory_space<smem>>
    %c3_i32_120 = arith.constant 3 : i32
    %403 = arith.addi %396, %c3_i32_120 : i32
    %404 = arith.index_cast %403 : i32 to index
    %405 = memref.load %arg0[%404] : memref<160xf32, #tpu.memory_space<smem>>
    %c4_i32_121 = arith.constant 4 : i32
    %406 = arith.addi %396, %c4_i32_121 : i32
    %407 = arith.index_cast %406 : i32 to index
    %408 = memref.load %arg0[%407] : memref<160xf32, #tpu.memory_space<smem>>
    %c5_i32_122 = arith.constant 5 : i32
    %409 = arith.addi %396, %c5_i32_122 : i32
    %410 = arith.index_cast %409 : i32 to index
    %411 = memref.load %arg0[%410] : memref<160xf32, #tpu.memory_space<smem>>
    %cst_123 = arith.constant dense<0.000000e+00> : vector<16x128xf32>
    %412 = tpu.matmul %395, %6, %cst_123 {dimension_numbers = #tpu.dot_dimension_numbers<[1], [0], [0], [1], [0, 0, 1, 1], [], []>} : vector<16x128xf32>, vector<128x128xf32>, vector<16x128xf32> -> vector<16x128xf32>
    %413 = arith.addf %412, %5 : vector<16x128xf32>
    %414 = arith.index_cast %c8_i32_116 : i32 to index
    %c0_124 = arith.constant 0 : index
    %415 = vector.load %arg6[%414, %c0_124] : memref<20x128xf32, #tpu.memory_space<vmem>>, vector<1x128xf32>
    %416 = vector.broadcast %415 : vector<1x128xf32> to vector<16x128xf32>
    %417 = arith.addf %413, %416 : vector<16x128xf32>
    %418 = math.tanh %417 : vector<16x128xf32>
    %cst_125 = arith.constant dense<0.000000e+00> : vector<16x128xf32>
    %419 = tpu.matmul %418, %7, %cst_125 {dimension_numbers = #tpu.dot_dimension_numbers<[1], [0], [0], [1], [0, 0, 1, 1], [], []>} : vector<16x128xf32>, vector<128x128xf32>, vector<16x128xf32> -> vector<16x128xf32>
    %420 = vector.broadcast %8 : vector<1x128xf32> to vector<16x128xf32>
    %421 = arith.addf %419, %420 : vector<16x128xf32>
    %422 = vector.broadcast %399 : f32 to vector<16x128xf32>
    %423 = arith.mulf %422, %395 : vector<16x128xf32>
    %424 = vector.broadcast %402 : f32 to vector<16x128xf32>
    %425 = arith.mulf %424, %421 : vector<16x128xf32>
    %426 = arith.subf %423, %425 : vector<16x128xf32>
    %cst_126 = arith.constant -1.000000e+00 : f32
    %cst_127 = arith.constant 1.000000e+00 : f32
    %427 = vector.broadcast %cst_126 : f32 to vector<16x128xf32>
    %428 = arith.maximumf %427, %426 : vector<16x128xf32>
    %429 = vector.broadcast %cst_127 : f32 to vector<16x128xf32>
    %430 = arith.minimumf %429, %428 : vector<16x128xf32>
    %431 = vector.broadcast %405 : f32 to vector<16x128xf32>
    %432 = arith.mulf %431, %430 : vector<16x128xf32>
    %433 = vector.broadcast %408 : f32 to vector<16x128xf32>
    %434 = arith.mulf %433, %395 : vector<16x128xf32>
    %435 = arith.addf %432, %434 : vector<16x128xf32>
    %436 = arith.index_cast %c8_i32_116 : i32 to index
    %c0_128 = arith.constant 0 : index
    %c0_129 = arith.constant 0 : index
    %437 = vector.load %arg4[%436, %c0_128, %c0_129] : memref<20x16x128xf32, #tpu.memory_space<vmem>>, vector<1x16x128xf32>
    %438 = vector.shape_cast %437 : vector<1x16x128xf32> to vector<16x128xf32>
    %439 = vector.broadcast %411 : f32 to vector<16x128xf32>
    %440 = arith.mulf %439, %438 : vector<16x128xf32>
    %441 = arith.addf %435, %440 : vector<16x128xf32>
    %442 = arith.mulf %441, %2 : vector<16x128xf32>
    %443 = arith.addf %4, %442 : vector<16x128xf32>
    %c9_i32 = arith.constant 9 : i32
    %c8_i32_130 = arith.constant 8 : i32
    %444 = arith.muli %c9_i32, %c8_i32_130 : i32
    %c1_i32_131 = arith.constant 1 : i32
    %445 = arith.addi %444, %c1_i32_131 : i32
    %446 = arith.index_cast %445 : i32 to index
    %447 = memref.load %arg0[%446] : memref<160xf32, #tpu.memory_space<smem>>
    %c2_i32_132 = arith.constant 2 : i32
    %448 = arith.addi %444, %c2_i32_132 : i32
    %449 = arith.index_cast %448 : i32 to index
    %450 = memref.load %arg0[%449] : memref<160xf32, #tpu.memory_space<smem>>
    %c3_i32_133 = arith.constant 3 : i32
    %451 = arith.addi %444, %c3_i32_133 : i32
    %452 = arith.index_cast %451 : i32 to index
    %453 = memref.load %arg0[%452] : memref<160xf32, #tpu.memory_space<smem>>
    %c4_i32_134 = arith.constant 4 : i32
    %454 = arith.addi %444, %c4_i32_134 : i32
    %455 = arith.index_cast %454 : i32 to index
    %456 = memref.load %arg0[%455] : memref<160xf32, #tpu.memory_space<smem>>
    %c5_i32_135 = arith.constant 5 : i32
    %457 = arith.addi %444, %c5_i32_135 : i32
    %458 = arith.index_cast %457 : i32 to index
    %459 = memref.load %arg0[%458] : memref<160xf32, #tpu.memory_space<smem>>
    %cst_136 = arith.constant dense<0.000000e+00> : vector<16x128xf32>
    %460 = tpu.matmul %443, %6, %cst_136 {dimension_numbers = #tpu.dot_dimension_numbers<[1], [0], [0], [1], [0, 0, 1, 1], [], []>} : vector<16x128xf32>, vector<128x128xf32>, vector<16x128xf32> -> vector<16x128xf32>
    %461 = arith.addf %460, %5 : vector<16x128xf32>
    %462 = arith.index_cast %c9_i32 : i32 to index
    %c0_137 = arith.constant 0 : index
    %463 = vector.load %arg6[%462, %c0_137] : memref<20x128xf32, #tpu.memory_space<vmem>>, vector<1x128xf32>
    %464 = vector.broadcast %463 : vector<1x128xf32> to vector<16x128xf32>
    %465 = arith.addf %461, %464 : vector<16x128xf32>
    %466 = math.tanh %465 : vector<16x128xf32>
    %cst_138 = arith.constant dense<0.000000e+00> : vector<16x128xf32>
    %467 = tpu.matmul %466, %7, %cst_138 {dimension_numbers = #tpu.dot_dimension_numbers<[1], [0], [0], [1], [0, 0, 1, 1], [], []>} : vector<16x128xf32>, vector<128x128xf32>, vector<16x128xf32> -> vector<16x128xf32>
    %468 = vector.broadcast %8 : vector<1x128xf32> to vector<16x128xf32>
    %469 = arith.addf %467, %468 : vector<16x128xf32>
    %470 = vector.broadcast %447 : f32 to vector<16x128xf32>
    %471 = arith.mulf %470, %443 : vector<16x128xf32>
    %472 = vector.broadcast %450 : f32 to vector<16x128xf32>
    %473 = arith.mulf %472, %469 : vector<16x128xf32>
    %474 = arith.subf %471, %473 : vector<16x128xf32>
    %cst_139 = arith.constant -1.000000e+00 : f32
    %cst_140 = arith.constant 1.000000e+00 : f32
    %475 = vector.broadcast %cst_139 : f32 to vector<16x128xf32>
    %476 = arith.maximumf %475, %474 : vector<16x128xf32>
    %477 = vector.broadcast %cst_140 : f32 to vector<16x128xf32>
    %478 = arith.minimumf %477, %476 : vector<16x128xf32>
    %479 = vector.broadcast %453 : f32 to vector<16x128xf32>
    %480 = arith.mulf %479, %478 : vector<16x128xf32>
    %481 = vector.broadcast %456 : f32 to vector<16x128xf32>
    %482 = arith.mulf %481, %443 : vector<16x128xf32>
    %483 = arith.addf %480, %482 : vector<16x128xf32>
    %484 = arith.index_cast %c9_i32 : i32 to index
    %c0_141 = arith.constant 0 : index
    %c0_142 = arith.constant 0 : index
    %485 = vector.load %arg4[%484, %c0_141, %c0_142] : memref<20x16x128xf32, #tpu.memory_space<vmem>>, vector<1x16x128xf32>
    %486 = vector.shape_cast %485 : vector<1x16x128xf32> to vector<16x128xf32>
    %487 = vector.broadcast %459 : f32 to vector<16x128xf32>
    %488 = arith.mulf %487, %486 : vector<16x128xf32>
    %489 = arith.addf %483, %488 : vector<16x128xf32>
    %490 = arith.mulf %489, %2 : vector<16x128xf32>
    %491 = arith.addf %4, %490 : vector<16x128xf32>
    %c10_i32 = arith.constant 10 : i32
    %c8_i32_143 = arith.constant 8 : i32
    %492 = arith.muli %c10_i32, %c8_i32_143 : i32
    %c1_i32_144 = arith.constant 1 : i32
    %493 = arith.addi %492, %c1_i32_144 : i32
    %494 = arith.index_cast %493 : i32 to index
    %495 = memref.load %arg0[%494] : memref<160xf32, #tpu.memory_space<smem>>
    %c2_i32_145 = arith.constant 2 : i32
    %496 = arith.addi %492, %c2_i32_145 : i32
    %497 = arith.index_cast %496 : i32 to index
    %498 = memref.load %arg0[%497] : memref<160xf32, #tpu.memory_space<smem>>
    %c3_i32_146 = arith.constant 3 : i32
    %499 = arith.addi %492, %c3_i32_146 : i32
    %500 = arith.index_cast %499 : i32 to index
    %501 = memref.load %arg0[%500] : memref<160xf32, #tpu.memory_space<smem>>
    %c4_i32_147 = arith.constant 4 : i32
    %502 = arith.addi %492, %c4_i32_147 : i32
    %503 = arith.index_cast %502 : i32 to index
    %504 = memref.load %arg0[%503] : memref<160xf32, #tpu.memory_space<smem>>
    %c5_i32_148 = arith.constant 5 : i32
    %505 = arith.addi %492, %c5_i32_148 : i32
    %506 = arith.index_cast %505 : i32 to index
    %507 = memref.load %arg0[%506] : memref<160xf32, #tpu.memory_space<smem>>
    %cst_149 = arith.constant dense<0.000000e+00> : vector<16x128xf32>
    %508 = tpu.matmul %491, %6, %cst_149 {dimension_numbers = #tpu.dot_dimension_numbers<[1], [0], [0], [1], [0, 0, 1, 1], [], []>} : vector<16x128xf32>, vector<128x128xf32>, vector<16x128xf32> -> vector<16x128xf32>
    %509 = arith.addf %508, %5 : vector<16x128xf32>
    %510 = arith.index_cast %c10_i32 : i32 to index
    %c0_150 = arith.constant 0 : index
    %511 = vector.load %arg6[%510, %c0_150] : memref<20x128xf32, #tpu.memory_space<vmem>>, vector<1x128xf32>
    %512 = vector.broadcast %511 : vector<1x128xf32> to vector<16x128xf32>
    %513 = arith.addf %509, %512 : vector<16x128xf32>
    %514 = math.tanh %513 : vector<16x128xf32>
    %cst_151 = arith.constant dense<0.000000e+00> : vector<16x128xf32>
    %515 = tpu.matmul %514, %7, %cst_151 {dimension_numbers = #tpu.dot_dimension_numbers<[1], [0], [0], [1], [0, 0, 1, 1], [], []>} : vector<16x128xf32>, vector<128x128xf32>, vector<16x128xf32> -> vector<16x128xf32>
    %516 = vector.broadcast %8 : vector<1x128xf32> to vector<16x128xf32>
    %517 = arith.addf %515, %516 : vector<16x128xf32>
    %518 = vector.broadcast %495 : f32 to vector<16x128xf32>
    %519 = arith.mulf %518, %491 : vector<16x128xf32>
    %520 = vector.broadcast %498 : f32 to vector<16x128xf32>
    %521 = arith.mulf %520, %517 : vector<16x128xf32>
    %522 = arith.subf %519, %521 : vector<16x128xf32>
    %cst_152 = arith.constant -1.000000e+00 : f32
    %cst_153 = arith.constant 1.000000e+00 : f32
    %523 = vector.broadcast %cst_152 : f32 to vector<16x128xf32>
    %524 = arith.maximumf %523, %522 : vector<16x128xf32>
    %525 = vector.broadcast %cst_153 : f32 to vector<16x128xf32>
    %526 = arith.minimumf %525, %524 : vector<16x128xf32>
    %527 = vector.broadcast %501 : f32 to vector<16x128xf32>
    %528 = arith.mulf %527, %526 : vector<16x128xf32>
    %529 = vector.broadcast %504 : f32 to vector<16x128xf32>
    %530 = arith.mulf %529, %491 : vector<16x128xf32>
    %531 = arith.addf %528, %530 : vector<16x128xf32>
    %532 = arith.index_cast %c10_i32 : i32 to index
    %c0_154 = arith.constant 0 : index
    %c0_155 = arith.constant 0 : index
    %533 = vector.load %arg4[%532, %c0_154, %c0_155] : memref<20x16x128xf32, #tpu.memory_space<vmem>>, vector<1x16x128xf32>
    %534 = vector.shape_cast %533 : vector<1x16x128xf32> to vector<16x128xf32>
    %535 = vector.broadcast %507 : f32 to vector<16x128xf32>
    %536 = arith.mulf %535, %534 : vector<16x128xf32>
    %537 = arith.addf %531, %536 : vector<16x128xf32>
    %538 = arith.mulf %537, %2 : vector<16x128xf32>
    %539 = arith.addf %4, %538 : vector<16x128xf32>
    %c11_i32 = arith.constant 11 : i32
    %c8_i32_156 = arith.constant 8 : i32
    %540 = arith.muli %c11_i32, %c8_i32_156 : i32
    %c1_i32_157 = arith.constant 1 : i32
    %541 = arith.addi %540, %c1_i32_157 : i32
    %542 = arith.index_cast %541 : i32 to index
    %543 = memref.load %arg0[%542] : memref<160xf32, #tpu.memory_space<smem>>
    %c2_i32_158 = arith.constant 2 : i32
    %544 = arith.addi %540, %c2_i32_158 : i32
    %545 = arith.index_cast %544 : i32 to index
    %546 = memref.load %arg0[%545] : memref<160xf32, #tpu.memory_space<smem>>
    %c3_i32_159 = arith.constant 3 : i32
    %547 = arith.addi %540, %c3_i32_159 : i32
    %548 = arith.index_cast %547 : i32 to index
    %549 = memref.load %arg0[%548] : memref<160xf32, #tpu.memory_space<smem>>
    %c4_i32_160 = arith.constant 4 : i32
    %550 = arith.addi %540, %c4_i32_160 : i32
    %551 = arith.index_cast %550 : i32 to index
    %552 = memref.load %arg0[%551] : memref<160xf32, #tpu.memory_space<smem>>
    %c5_i32_161 = arith.constant 5 : i32
    %553 = arith.addi %540, %c5_i32_161 : i32
    %554 = arith.index_cast %553 : i32 to index
    %555 = memref.load %arg0[%554] : memref<160xf32, #tpu.memory_space<smem>>
    %cst_162 = arith.constant dense<0.000000e+00> : vector<16x128xf32>
    %556 = tpu.matmul %539, %6, %cst_162 {dimension_numbers = #tpu.dot_dimension_numbers<[1], [0], [0], [1], [0, 0, 1, 1], [], []>} : vector<16x128xf32>, vector<128x128xf32>, vector<16x128xf32> -> vector<16x128xf32>
    %557 = arith.addf %556, %5 : vector<16x128xf32>
    %558 = arith.index_cast %c11_i32 : i32 to index
    %c0_163 = arith.constant 0 : index
    %559 = vector.load %arg6[%558, %c0_163] : memref<20x128xf32, #tpu.memory_space<vmem>>, vector<1x128xf32>
    %560 = vector.broadcast %559 : vector<1x128xf32> to vector<16x128xf32>
    %561 = arith.addf %557, %560 : vector<16x128xf32>
    %562 = math.tanh %561 : vector<16x128xf32>
    %cst_164 = arith.constant dense<0.000000e+00> : vector<16x128xf32>
    %563 = tpu.matmul %562, %7, %cst_164 {dimension_numbers = #tpu.dot_dimension_numbers<[1], [0], [0], [1], [0, 0, 1, 1], [], []>} : vector<16x128xf32>, vector<128x128xf32>, vector<16x128xf32> -> vector<16x128xf32>
    %564 = vector.broadcast %8 : vector<1x128xf32> to vector<16x128xf32>
    %565 = arith.addf %563, %564 : vector<16x128xf32>
    %566 = vector.broadcast %543 : f32 to vector<16x128xf32>
    %567 = arith.mulf %566, %539 : vector<16x128xf32>
    %568 = vector.broadcast %546 : f32 to vector<16x128xf32>
    %569 = arith.mulf %568, %565 : vector<16x128xf32>
    %570 = arith.subf %567, %569 : vector<16x128xf32>
    %cst_165 = arith.constant -1.000000e+00 : f32
    %cst_166 = arith.constant 1.000000e+00 : f32
    %571 = vector.broadcast %cst_165 : f32 to vector<16x128xf32>
    %572 = arith.maximumf %571, %570 : vector<16x128xf32>
    %573 = vector.broadcast %cst_166 : f32 to vector<16x128xf32>
    %574 = arith.minimumf %573, %572 : vector<16x128xf32>
    %575 = vector.broadcast %549 : f32 to vector<16x128xf32>
    %576 = arith.mulf %575, %574 : vector<16x128xf32>
    %577 = vector.broadcast %552 : f32 to vector<16x128xf32>
    %578 = arith.mulf %577, %539 : vector<16x128xf32>
    %579 = arith.addf %576, %578 : vector<16x128xf32>
    %580 = arith.index_cast %c11_i32 : i32 to index
    %c0_167 = arith.constant 0 : index
    %c0_168 = arith.constant 0 : index
    %581 = vector.load %arg4[%580, %c0_167, %c0_168] : memref<20x16x128xf32, #tpu.memory_space<vmem>>, vector<1x16x128xf32>
    %582 = vector.shape_cast %581 : vector<1x16x128xf32> to vector<16x128xf32>
    %583 = vector.broadcast %555 : f32 to vector<16x128xf32>
    %584 = arith.mulf %583, %582 : vector<16x128xf32>
    %585 = arith.addf %579, %584 : vector<16x128xf32>
    %586 = arith.mulf %585, %2 : vector<16x128xf32>
    %587 = arith.addf %4, %586 : vector<16x128xf32>
    %c12_i32 = arith.constant 12 : i32
    %c8_i32_169 = arith.constant 8 : i32
    %588 = arith.muli %c12_i32, %c8_i32_169 : i32
    %c1_i32_170 = arith.constant 1 : i32
    %589 = arith.addi %588, %c1_i32_170 : i32
    %590 = arith.index_cast %589 : i32 to index
    %591 = memref.load %arg0[%590] : memref<160xf32, #tpu.memory_space<smem>>
    %c2_i32_171 = arith.constant 2 : i32
    %592 = arith.addi %588, %c2_i32_171 : i32
    %593 = arith.index_cast %592 : i32 to index
    %594 = memref.load %arg0[%593] : memref<160xf32, #tpu.memory_space<smem>>
    %c3_i32_172 = arith.constant 3 : i32
    %595 = arith.addi %588, %c3_i32_172 : i32
    %596 = arith.index_cast %595 : i32 to index
    %597 = memref.load %arg0[%596] : memref<160xf32, #tpu.memory_space<smem>>
    %c4_i32_173 = arith.constant 4 : i32
    %598 = arith.addi %588, %c4_i32_173 : i32
    %599 = arith.index_cast %598 : i32 to index
    %600 = memref.load %arg0[%599] : memref<160xf32, #tpu.memory_space<smem>>
    %c5_i32_174 = arith.constant 5 : i32
    %601 = arith.addi %588, %c5_i32_174 : i32
    %602 = arith.index_cast %601 : i32 to index
    %603 = memref.load %arg0[%602] : memref<160xf32, #tpu.memory_space<smem>>
    %cst_175 = arith.constant dense<0.000000e+00> : vector<16x128xf32>
    %604 = tpu.matmul %587, %6, %cst_175 {dimension_numbers = #tpu.dot_dimension_numbers<[1], [0], [0], [1], [0, 0, 1, 1], [], []>} : vector<16x128xf32>, vector<128x128xf32>, vector<16x128xf32> -> vector<16x128xf32>
    %605 = arith.addf %604, %5 : vector<16x128xf32>
    %606 = arith.index_cast %c12_i32 : i32 to index
    %c0_176 = arith.constant 0 : index
    %607 = vector.load %arg6[%606, %c0_176] : memref<20x128xf32, #tpu.memory_space<vmem>>, vector<1x128xf32>
    %608 = vector.broadcast %607 : vector<1x128xf32> to vector<16x128xf32>
    %609 = arith.addf %605, %608 : vector<16x128xf32>
    %610 = math.tanh %609 : vector<16x128xf32>
    %cst_177 = arith.constant dense<0.000000e+00> : vector<16x128xf32>
    %611 = tpu.matmul %610, %7, %cst_177 {dimension_numbers = #tpu.dot_dimension_numbers<[1], [0], [0], [1], [0, 0, 1, 1], [], []>} : vector<16x128xf32>, vector<128x128xf32>, vector<16x128xf32> -> vector<16x128xf32>
    %612 = vector.broadcast %8 : vector<1x128xf32> to vector<16x128xf32>
    %613 = arith.addf %611, %612 : vector<16x128xf32>
    %614 = vector.broadcast %591 : f32 to vector<16x128xf32>
    %615 = arith.mulf %614, %587 : vector<16x128xf32>
    %616 = vector.broadcast %594 : f32 to vector<16x128xf32>
    %617 = arith.mulf %616, %613 : vector<16x128xf32>
    %618 = arith.subf %615, %617 : vector<16x128xf32>
    %cst_178 = arith.constant -1.000000e+00 : f32
    %cst_179 = arith.constant 1.000000e+00 : f32
    %619 = vector.broadcast %cst_178 : f32 to vector<16x128xf32>
    %620 = arith.maximumf %619, %618 : vector<16x128xf32>
    %621 = vector.broadcast %cst_179 : f32 to vector<16x128xf32>
    %622 = arith.minimumf %621, %620 : vector<16x128xf32>
    %623 = vector.broadcast %597 : f32 to vector<16x128xf32>
    %624 = arith.mulf %623, %622 : vector<16x128xf32>
    %625 = vector.broadcast %600 : f32 to vector<16x128xf32>
    %626 = arith.mulf %625, %587 : vector<16x128xf32>
    %627 = arith.addf %624, %626 : vector<16x128xf32>
    %628 = arith.index_cast %c12_i32 : i32 to index
    %c0_180 = arith.constant 0 : index
    %c0_181 = arith.constant 0 : index
    %629 = vector.load %arg4[%628, %c0_180, %c0_181] : memref<20x16x128xf32, #tpu.memory_space<vmem>>, vector<1x16x128xf32>
    %630 = vector.shape_cast %629 : vector<1x16x128xf32> to vector<16x128xf32>
    %631 = vector.broadcast %603 : f32 to vector<16x128xf32>
    %632 = arith.mulf %631, %630 : vector<16x128xf32>
    %633 = arith.addf %627, %632 : vector<16x128xf32>
    %634 = arith.mulf %633, %2 : vector<16x128xf32>
    %635 = arith.addf %4, %634 : vector<16x128xf32>
    %c13_i32 = arith.constant 13 : i32
    %c8_i32_182 = arith.constant 8 : i32
    %636 = arith.muli %c13_i32, %c8_i32_182 : i32
    %c1_i32_183 = arith.constant 1 : i32
    %637 = arith.addi %636, %c1_i32_183 : i32
    %638 = arith.index_cast %637 : i32 to index
    %639 = memref.load %arg0[%638] : memref<160xf32, #tpu.memory_space<smem>>
    %c2_i32_184 = arith.constant 2 : i32
    %640 = arith.addi %636, %c2_i32_184 : i32
    %641 = arith.index_cast %640 : i32 to index
    %642 = memref.load %arg0[%641] : memref<160xf32, #tpu.memory_space<smem>>
    %c3_i32_185 = arith.constant 3 : i32
    %643 = arith.addi %636, %c3_i32_185 : i32
    %644 = arith.index_cast %643 : i32 to index
    %645 = memref.load %arg0[%644] : memref<160xf32, #tpu.memory_space<smem>>
    %c4_i32_186 = arith.constant 4 : i32
    %646 = arith.addi %636, %c4_i32_186 : i32
    %647 = arith.index_cast %646 : i32 to index
    %648 = memref.load %arg0[%647] : memref<160xf32, #tpu.memory_space<smem>>
    %c5_i32_187 = arith.constant 5 : i32
    %649 = arith.addi %636, %c5_i32_187 : i32
    %650 = arith.index_cast %649 : i32 to index
    %651 = memref.load %arg0[%650] : memref<160xf32, #tpu.memory_space<smem>>
    %cst_188 = arith.constant dense<0.000000e+00> : vector<16x128xf32>
    %652 = tpu.matmul %635, %6, %cst_188 {dimension_numbers = #tpu.dot_dimension_numbers<[1], [0], [0], [1], [0, 0, 1, 1], [], []>} : vector<16x128xf32>, vector<128x128xf32>, vector<16x128xf32> -> vector<16x128xf32>
    %653 = arith.addf %652, %5 : vector<16x128xf32>
    %654 = arith.index_cast %c13_i32 : i32 to index
    %c0_189 = arith.constant 0 : index
    %655 = vector.load %arg6[%654, %c0_189] : memref<20x128xf32, #tpu.memory_space<vmem>>, vector<1x128xf32>
    %656 = vector.broadcast %655 : vector<1x128xf32> to vector<16x128xf32>
    %657 = arith.addf %653, %656 : vector<16x128xf32>
    %658 = math.tanh %657 : vector<16x128xf32>
    %cst_190 = arith.constant dense<0.000000e+00> : vector<16x128xf32>
    %659 = tpu.matmul %658, %7, %cst_190 {dimension_numbers = #tpu.dot_dimension_numbers<[1], [0], [0], [1], [0, 0, 1, 1], [], []>} : vector<16x128xf32>, vector<128x128xf32>, vector<16x128xf32> -> vector<16x128xf32>
    %660 = vector.broadcast %8 : vector<1x128xf32> to vector<16x128xf32>
    %661 = arith.addf %659, %660 : vector<16x128xf32>
    %662 = vector.broadcast %639 : f32 to vector<16x128xf32>
    %663 = arith.mulf %662, %635 : vector<16x128xf32>
    %664 = vector.broadcast %642 : f32 to vector<16x128xf32>
    %665 = arith.mulf %664, %661 : vector<16x128xf32>
    %666 = arith.subf %663, %665 : vector<16x128xf32>
    %cst_191 = arith.constant -1.000000e+00 : f32
    %cst_192 = arith.constant 1.000000e+00 : f32
    %667 = vector.broadcast %cst_191 : f32 to vector<16x128xf32>
    %668 = arith.maximumf %667, %666 : vector<16x128xf32>
    %669 = vector.broadcast %cst_192 : f32 to vector<16x128xf32>
    %670 = arith.minimumf %669, %668 : vector<16x128xf32>
    %671 = vector.broadcast %645 : f32 to vector<16x128xf32>
    %672 = arith.mulf %671, %670 : vector<16x128xf32>
    %673 = vector.broadcast %648 : f32 to vector<16x128xf32>
    %674 = arith.mulf %673, %635 : vector<16x128xf32>
    %675 = arith.addf %672, %674 : vector<16x128xf32>
    %676 = arith.index_cast %c13_i32 : i32 to index
    %c0_193 = arith.constant 0 : index
    %c0_194 = arith.constant 0 : index
    %677 = vector.load %arg4[%676, %c0_193, %c0_194] : memref<20x16x128xf32, #tpu.memory_space<vmem>>, vector<1x16x128xf32>
    %678 = vector.shape_cast %677 : vector<1x16x128xf32> to vector<16x128xf32>
    %679 = vector.broadcast %651 : f32 to vector<16x128xf32>
    %680 = arith.mulf %679, %678 : vector<16x128xf32>
    %681 = arith.addf %675, %680 : vector<16x128xf32>
    %682 = arith.mulf %681, %2 : vector<16x128xf32>
    %683 = arith.addf %4, %682 : vector<16x128xf32>
    %c14_i32 = arith.constant 14 : i32
    %c8_i32_195 = arith.constant 8 : i32
    %684 = arith.muli %c14_i32, %c8_i32_195 : i32
    %c1_i32_196 = arith.constant 1 : i32
    %685 = arith.addi %684, %c1_i32_196 : i32
    %686 = arith.index_cast %685 : i32 to index
    %687 = memref.load %arg0[%686] : memref<160xf32, #tpu.memory_space<smem>>
    %c2_i32_197 = arith.constant 2 : i32
    %688 = arith.addi %684, %c2_i32_197 : i32
    %689 = arith.index_cast %688 : i32 to index
    %690 = memref.load %arg0[%689] : memref<160xf32, #tpu.memory_space<smem>>
    %c3_i32_198 = arith.constant 3 : i32
    %691 = arith.addi %684, %c3_i32_198 : i32
    %692 = arith.index_cast %691 : i32 to index
    %693 = memref.load %arg0[%692] : memref<160xf32, #tpu.memory_space<smem>>
    %c4_i32_199 = arith.constant 4 : i32
    %694 = arith.addi %684, %c4_i32_199 : i32
    %695 = arith.index_cast %694 : i32 to index
    %696 = memref.load %arg0[%695] : memref<160xf32, #tpu.memory_space<smem>>
    %c5_i32_200 = arith.constant 5 : i32
    %697 = arith.addi %684, %c5_i32_200 : i32
    %698 = arith.index_cast %697 : i32 to index
    %699 = memref.load %arg0[%698] : memref<160xf32, #tpu.memory_space<smem>>
    %cst_201 = arith.constant dense<0.000000e+00> : vector<16x128xf32>
    %700 = tpu.matmul %683, %6, %cst_201 {dimension_numbers = #tpu.dot_dimension_numbers<[1], [0], [0], [1], [0, 0, 1, 1], [], []>} : vector<16x128xf32>, vector<128x128xf32>, vector<16x128xf32> -> vector<16x128xf32>
    %701 = arith.addf %700, %5 : vector<16x128xf32>
    %702 = arith.index_cast %c14_i32 : i32 to index
    %c0_202 = arith.constant 0 : index
    %703 = vector.load %arg6[%702, %c0_202] : memref<20x128xf32, #tpu.memory_space<vmem>>, vector<1x128xf32>
    %704 = vector.broadcast %703 : vector<1x128xf32> to vector<16x128xf32>
    %705 = arith.addf %701, %704 : vector<16x128xf32>
    %706 = math.tanh %705 : vector<16x128xf32>
    %cst_203 = arith.constant dense<0.000000e+00> : vector<16x128xf32>
    %707 = tpu.matmul %706, %7, %cst_203 {dimension_numbers = #tpu.dot_dimension_numbers<[1], [0], [0], [1], [0, 0, 1, 1], [], []>} : vector<16x128xf32>, vector<128x128xf32>, vector<16x128xf32> -> vector<16x128xf32>
    %708 = vector.broadcast %8 : vector<1x128xf32> to vector<16x128xf32>
    %709 = arith.addf %707, %708 : vector<16x128xf32>
    %710 = vector.broadcast %687 : f32 to vector<16x128xf32>
    %711 = arith.mulf %710, %683 : vector<16x128xf32>
    %712 = vector.broadcast %690 : f32 to vector<16x128xf32>
    %713 = arith.mulf %712, %709 : vector<16x128xf32>
    %714 = arith.subf %711, %713 : vector<16x128xf32>
    %cst_204 = arith.constant -1.000000e+00 : f32
    %cst_205 = arith.constant 1.000000e+00 : f32
    %715 = vector.broadcast %cst_204 : f32 to vector<16x128xf32>
    %716 = arith.maximumf %715, %714 : vector<16x128xf32>
    %717 = vector.broadcast %cst_205 : f32 to vector<16x128xf32>
    %718 = arith.minimumf %717, %716 : vector<16x128xf32>
    %719 = vector.broadcast %693 : f32 to vector<16x128xf32>
    %720 = arith.mulf %719, %718 : vector<16x128xf32>
    %721 = vector.broadcast %696 : f32 to vector<16x128xf32>
    %722 = arith.mulf %721, %683 : vector<16x128xf32>
    %723 = arith.addf %720, %722 : vector<16x128xf32>
    %724 = arith.index_cast %c14_i32 : i32 to index
    %c0_206 = arith.constant 0 : index
    %c0_207 = arith.constant 0 : index
    %725 = vector.load %arg4[%724, %c0_206, %c0_207] : memref<20x16x128xf32, #tpu.memory_space<vmem>>, vector<1x16x128xf32>
    %726 = vector.shape_cast %725 : vector<1x16x128xf32> to vector<16x128xf32>
    %727 = vector.broadcast %699 : f32 to vector<16x128xf32>
    %728 = arith.mulf %727, %726 : vector<16x128xf32>
    %729 = arith.addf %723, %728 : vector<16x128xf32>
    %730 = arith.mulf %729, %2 : vector<16x128xf32>
    %731 = arith.addf %4, %730 : vector<16x128xf32>
    %c15_i32 = arith.constant 15 : i32
    %c8_i32_208 = arith.constant 8 : i32
    %732 = arith.muli %c15_i32, %c8_i32_208 : i32
    %c1_i32_209 = arith.constant 1 : i32
    %733 = arith.addi %732, %c1_i32_209 : i32
    %734 = arith.index_cast %733 : i32 to index
    %735 = memref.load %arg0[%734] : memref<160xf32, #tpu.memory_space<smem>>
    %c2_i32_210 = arith.constant 2 : i32
    %736 = arith.addi %732, %c2_i32_210 : i32
    %737 = arith.index_cast %736 : i32 to index
    %738 = memref.load %arg0[%737] : memref<160xf32, #tpu.memory_space<smem>>
    %c3_i32_211 = arith.constant 3 : i32
    %739 = arith.addi %732, %c3_i32_211 : i32
    %740 = arith.index_cast %739 : i32 to index
    %741 = memref.load %arg0[%740] : memref<160xf32, #tpu.memory_space<smem>>
    %c4_i32_212 = arith.constant 4 : i32
    %742 = arith.addi %732, %c4_i32_212 : i32
    %743 = arith.index_cast %742 : i32 to index
    %744 = memref.load %arg0[%743] : memref<160xf32, #tpu.memory_space<smem>>
    %c5_i32_213 = arith.constant 5 : i32
    %745 = arith.addi %732, %c5_i32_213 : i32
    %746 = arith.index_cast %745 : i32 to index
    %747 = memref.load %arg0[%746] : memref<160xf32, #tpu.memory_space<smem>>
    %cst_214 = arith.constant dense<0.000000e+00> : vector<16x128xf32>
    %748 = tpu.matmul %731, %6, %cst_214 {dimension_numbers = #tpu.dot_dimension_numbers<[1], [0], [0], [1], [0, 0, 1, 1], [], []>} : vector<16x128xf32>, vector<128x128xf32>, vector<16x128xf32> -> vector<16x128xf32>
    %749 = arith.addf %748, %5 : vector<16x128xf32>
    %750 = arith.index_cast %c15_i32 : i32 to index
    %c0_215 = arith.constant 0 : index
    %751 = vector.load %arg6[%750, %c0_215] : memref<20x128xf32, #tpu.memory_space<vmem>>, vector<1x128xf32>
    %752 = vector.broadcast %751 : vector<1x128xf32> to vector<16x128xf32>
    %753 = arith.addf %749, %752 : vector<16x128xf32>
    %754 = math.tanh %753 : vector<16x128xf32>
    %cst_216 = arith.constant dense<0.000000e+00> : vector<16x128xf32>
    %755 = tpu.matmul %754, %7, %cst_216 {dimension_numbers = #tpu.dot_dimension_numbers<[1], [0], [0], [1], [0, 0, 1, 1], [], []>} : vector<16x128xf32>, vector<128x128xf32>, vector<16x128xf32> -> vector<16x128xf32>
    %756 = vector.broadcast %8 : vector<1x128xf32> to vector<16x128xf32>
    %757 = arith.addf %755, %756 : vector<16x128xf32>
    %758 = vector.broadcast %735 : f32 to vector<16x128xf32>
    %759 = arith.mulf %758, %731 : vector<16x128xf32>
    %760 = vector.broadcast %738 : f32 to vector<16x128xf32>
    %761 = arith.mulf %760, %757 : vector<16x128xf32>
    %762 = arith.subf %759, %761 : vector<16x128xf32>
    %cst_217 = arith.constant -1.000000e+00 : f32
    %cst_218 = arith.constant 1.000000e+00 : f32
    %763 = vector.broadcast %cst_217 : f32 to vector<16x128xf32>
    %764 = arith.maximumf %763, %762 : vector<16x128xf32>
    %765 = vector.broadcast %cst_218 : f32 to vector<16x128xf32>
    %766 = arith.minimumf %765, %764 : vector<16x128xf32>
    %767 = vector.broadcast %741 : f32 to vector<16x128xf32>
    %768 = arith.mulf %767, %766 : vector<16x128xf32>
    %769 = vector.broadcast %744 : f32 to vector<16x128xf32>
    %770 = arith.mulf %769, %731 : vector<16x128xf32>
    %771 = arith.addf %768, %770 : vector<16x128xf32>
    %772 = arith.index_cast %c15_i32 : i32 to index
    %c0_219 = arith.constant 0 : index
    %c0_220 = arith.constant 0 : index
    %773 = vector.load %arg4[%772, %c0_219, %c0_220] : memref<20x16x128xf32, #tpu.memory_space<vmem>>, vector<1x16x128xf32>
    %774 = vector.shape_cast %773 : vector<1x16x128xf32> to vector<16x128xf32>
    %775 = vector.broadcast %747 : f32 to vector<16x128xf32>
    %776 = arith.mulf %775, %774 : vector<16x128xf32>
    %777 = arith.addf %771, %776 : vector<16x128xf32>
    %778 = arith.mulf %777, %2 : vector<16x128xf32>
    %779 = arith.addf %4, %778 : vector<16x128xf32>
    %c16_i32 = arith.constant 16 : i32
    %c8_i32_221 = arith.constant 8 : i32
    %780 = arith.muli %c16_i32, %c8_i32_221 : i32
    %c1_i32_222 = arith.constant 1 : i32
    %781 = arith.addi %780, %c1_i32_222 : i32
    %782 = arith.index_cast %781 : i32 to index
    %783 = memref.load %arg0[%782] : memref<160xf32, #tpu.memory_space<smem>>
    %c2_i32_223 = arith.constant 2 : i32
    %784 = arith.addi %780, %c2_i32_223 : i32
    %785 = arith.index_cast %784 : i32 to index
    %786 = memref.load %arg0[%785] : memref<160xf32, #tpu.memory_space<smem>>
    %c3_i32_224 = arith.constant 3 : i32
    %787 = arith.addi %780, %c3_i32_224 : i32
    %788 = arith.index_cast %787 : i32 to index
    %789 = memref.load %arg0[%788] : memref<160xf32, #tpu.memory_space<smem>>
    %c4_i32_225 = arith.constant 4 : i32
    %790 = arith.addi %780, %c4_i32_225 : i32
    %791 = arith.index_cast %790 : i32 to index
    %792 = memref.load %arg0[%791] : memref<160xf32, #tpu.memory_space<smem>>
    %c5_i32_226 = arith.constant 5 : i32
    %793 = arith.addi %780, %c5_i32_226 : i32
    %794 = arith.index_cast %793 : i32 to index
    %795 = memref.load %arg0[%794] : memref<160xf32, #tpu.memory_space<smem>>
    %cst_227 = arith.constant dense<0.000000e+00> : vector<16x128xf32>
    %796 = tpu.matmul %779, %6, %cst_227 {dimension_numbers = #tpu.dot_dimension_numbers<[1], [0], [0], [1], [0, 0, 1, 1], [], []>} : vector<16x128xf32>, vector<128x128xf32>, vector<16x128xf32> -> vector<16x128xf32>
    %797 = arith.addf %796, %5 : vector<16x128xf32>
    %798 = arith.index_cast %c16_i32 : i32 to index
    %c0_228 = arith.constant 0 : index
    %799 = vector.load %arg6[%798, %c0_228] : memref<20x128xf32, #tpu.memory_space<vmem>>, vector<1x128xf32>
    %800 = vector.broadcast %799 : vector<1x128xf32> to vector<16x128xf32>
    %801 = arith.addf %797, %800 : vector<16x128xf32>
    %802 = math.tanh %801 : vector<16x128xf32>
    %cst_229 = arith.constant dense<0.000000e+00> : vector<16x128xf32>
    %803 = tpu.matmul %802, %7, %cst_229 {dimension_numbers = #tpu.dot_dimension_numbers<[1], [0], [0], [1], [0, 0, 1, 1], [], []>} : vector<16x128xf32>, vector<128x128xf32>, vector<16x128xf32> -> vector<16x128xf32>
    %804 = vector.broadcast %8 : vector<1x128xf32> to vector<16x128xf32>
    %805 = arith.addf %803, %804 : vector<16x128xf32>
    %806 = vector.broadcast %783 : f32 to vector<16x128xf32>
    %807 = arith.mulf %806, %779 : vector<16x128xf32>
    %808 = vector.broadcast %786 : f32 to vector<16x128xf32>
    %809 = arith.mulf %808, %805 : vector<16x128xf32>
    %810 = arith.subf %807, %809 : vector<16x128xf32>
    %cst_230 = arith.constant -1.000000e+00 : f32
    %cst_231 = arith.constant 1.000000e+00 : f32
    %811 = vector.broadcast %cst_230 : f32 to vector<16x128xf32>
    %812 = arith.maximumf %811, %810 : vector<16x128xf32>
    %813 = vector.broadcast %cst_231 : f32 to vector<16x128xf32>
    %814 = arith.minimumf %813, %812 : vector<16x128xf32>
    %815 = vector.broadcast %789 : f32 to vector<16x128xf32>
    %816 = arith.mulf %815, %814 : vector<16x128xf32>
    %817 = vector.broadcast %792 : f32 to vector<16x128xf32>
    %818 = arith.mulf %817, %779 : vector<16x128xf32>
    %819 = arith.addf %816, %818 : vector<16x128xf32>
    %820 = arith.index_cast %c16_i32 : i32 to index
    %c0_232 = arith.constant 0 : index
    %c0_233 = arith.constant 0 : index
    %821 = vector.load %arg4[%820, %c0_232, %c0_233] : memref<20x16x128xf32, #tpu.memory_space<vmem>>, vector<1x16x128xf32>
    %822 = vector.shape_cast %821 : vector<1x16x128xf32> to vector<16x128xf32>
    %823 = vector.broadcast %795 : f32 to vector<16x128xf32>
    %824 = arith.mulf %823, %822 : vector<16x128xf32>
    %825 = arith.addf %819, %824 : vector<16x128xf32>
    %826 = arith.mulf %825, %2 : vector<16x128xf32>
    %827 = arith.addf %4, %826 : vector<16x128xf32>
    %c17_i32 = arith.constant 17 : i32
    %c8_i32_234 = arith.constant 8 : i32
    %828 = arith.muli %c17_i32, %c8_i32_234 : i32
    %c1_i32_235 = arith.constant 1 : i32
    %829 = arith.addi %828, %c1_i32_235 : i32
    %830 = arith.index_cast %829 : i32 to index
    %831 = memref.load %arg0[%830] : memref<160xf32, #tpu.memory_space<smem>>
    %c2_i32_236 = arith.constant 2 : i32
    %832 = arith.addi %828, %c2_i32_236 : i32
    %833 = arith.index_cast %832 : i32 to index
    %834 = memref.load %arg0[%833] : memref<160xf32, #tpu.memory_space<smem>>
    %c3_i32_237 = arith.constant 3 : i32
    %835 = arith.addi %828, %c3_i32_237 : i32
    %836 = arith.index_cast %835 : i32 to index
    %837 = memref.load %arg0[%836] : memref<160xf32, #tpu.memory_space<smem>>
    %c4_i32_238 = arith.constant 4 : i32
    %838 = arith.addi %828, %c4_i32_238 : i32
    %839 = arith.index_cast %838 : i32 to index
    %840 = memref.load %arg0[%839] : memref<160xf32, #tpu.memory_space<smem>>
    %c5_i32_239 = arith.constant 5 : i32
    %841 = arith.addi %828, %c5_i32_239 : i32
    %842 = arith.index_cast %841 : i32 to index
    %843 = memref.load %arg0[%842] : memref<160xf32, #tpu.memory_space<smem>>
    %cst_240 = arith.constant dense<0.000000e+00> : vector<16x128xf32>
    %844 = tpu.matmul %827, %6, %cst_240 {dimension_numbers = #tpu.dot_dimension_numbers<[1], [0], [0], [1], [0, 0, 1, 1], [], []>} : vector<16x128xf32>, vector<128x128xf32>, vector<16x128xf32> -> vector<16x128xf32>
    %845 = arith.addf %844, %5 : vector<16x128xf32>
    %846 = arith.index_cast %c17_i32 : i32 to index
    %c0_241 = arith.constant 0 : index
    %847 = vector.load %arg6[%846, %c0_241] : memref<20x128xf32, #tpu.memory_space<vmem>>, vector<1x128xf32>
    %848 = vector.broadcast %847 : vector<1x128xf32> to vector<16x128xf32>
    %849 = arith.addf %845, %848 : vector<16x128xf32>
    %850 = math.tanh %849 : vector<16x128xf32>
    %cst_242 = arith.constant dense<0.000000e+00> : vector<16x128xf32>
    %851 = tpu.matmul %850, %7, %cst_242 {dimension_numbers = #tpu.dot_dimension_numbers<[1], [0], [0], [1], [0, 0, 1, 1], [], []>} : vector<16x128xf32>, vector<128x128xf32>, vector<16x128xf32> -> vector<16x128xf32>
    %852 = vector.broadcast %8 : vector<1x128xf32> to vector<16x128xf32>
    %853 = arith.addf %851, %852 : vector<16x128xf32>
    %854 = vector.broadcast %831 : f32 to vector<16x128xf32>
    %855 = arith.mulf %854, %827 : vector<16x128xf32>
    %856 = vector.broadcast %834 : f32 to vector<16x128xf32>
    %857 = arith.mulf %856, %853 : vector<16x128xf32>
    %858 = arith.subf %855, %857 : vector<16x128xf32>
    %cst_243 = arith.constant -1.000000e+00 : f32
    %cst_244 = arith.constant 1.000000e+00 : f32
    %859 = vector.broadcast %cst_243 : f32 to vector<16x128xf32>
    %860 = arith.maximumf %859, %858 : vector<16x128xf32>
    %861 = vector.broadcast %cst_244 : f32 to vector<16x128xf32>
    %862 = arith.minimumf %861, %860 : vector<16x128xf32>
    %863 = vector.broadcast %837 : f32 to vector<16x128xf32>
    %864 = arith.mulf %863, %862 : vector<16x128xf32>
    %865 = vector.broadcast %840 : f32 to vector<16x128xf32>
    %866 = arith.mulf %865, %827 : vector<16x128xf32>
    %867 = arith.addf %864, %866 : vector<16x128xf32>
    %868 = arith.index_cast %c17_i32 : i32 to index
    %c0_245 = arith.constant 0 : index
    %c0_246 = arith.constant 0 : index
    %869 = vector.load %arg4[%868, %c0_245, %c0_246] : memref<20x16x128xf32, #tpu.memory_space<vmem>>, vector<1x16x128xf32>
    %870 = vector.shape_cast %869 : vector<1x16x128xf32> to vector<16x128xf32>
    %871 = vector.broadcast %843 : f32 to vector<16x128xf32>
    %872 = arith.mulf %871, %870 : vector<16x128xf32>
    %873 = arith.addf %867, %872 : vector<16x128xf32>
    %874 = arith.mulf %873, %2 : vector<16x128xf32>
    %875 = arith.addf %4, %874 : vector<16x128xf32>
    %c18_i32 = arith.constant 18 : i32
    %c8_i32_247 = arith.constant 8 : i32
    %876 = arith.muli %c18_i32, %c8_i32_247 : i32
    %c1_i32_248 = arith.constant 1 : i32
    %877 = arith.addi %876, %c1_i32_248 : i32
    %878 = arith.index_cast %877 : i32 to index
    %879 = memref.load %arg0[%878] : memref<160xf32, #tpu.memory_space<smem>>
    %c2_i32_249 = arith.constant 2 : i32
    %880 = arith.addi %876, %c2_i32_249 : i32
    %881 = arith.index_cast %880 : i32 to index
    %882 = memref.load %arg0[%881] : memref<160xf32, #tpu.memory_space<smem>>
    %c3_i32_250 = arith.constant 3 : i32
    %883 = arith.addi %876, %c3_i32_250 : i32
    %884 = arith.index_cast %883 : i32 to index
    %885 = memref.load %arg0[%884] : memref<160xf32, #tpu.memory_space<smem>>
    %c4_i32_251 = arith.constant 4 : i32
    %886 = arith.addi %876, %c4_i32_251 : i32
    %887 = arith.index_cast %886 : i32 to index
    %888 = memref.load %arg0[%887] : memref<160xf32, #tpu.memory_space<smem>>
    %c5_i32_252 = arith.constant 5 : i32
    %889 = arith.addi %876, %c5_i32_252 : i32
    %890 = arith.index_cast %889 : i32 to index
    %891 = memref.load %arg0[%890] : memref<160xf32, #tpu.memory_space<smem>>
    %cst_253 = arith.constant dense<0.000000e+00> : vector<16x128xf32>
    %892 = tpu.matmul %875, %6, %cst_253 {dimension_numbers = #tpu.dot_dimension_numbers<[1], [0], [0], [1], [0, 0, 1, 1], [], []>} : vector<16x128xf32>, vector<128x128xf32>, vector<16x128xf32> -> vector<16x128xf32>
    %893 = arith.addf %892, %5 : vector<16x128xf32>
    %894 = arith.index_cast %c18_i32 : i32 to index
    %c0_254 = arith.constant 0 : index
    %895 = vector.load %arg6[%894, %c0_254] : memref<20x128xf32, #tpu.memory_space<vmem>>, vector<1x128xf32>
    %896 = vector.broadcast %895 : vector<1x128xf32> to vector<16x128xf32>
    %897 = arith.addf %893, %896 : vector<16x128xf32>
    %898 = math.tanh %897 : vector<16x128xf32>
    %cst_255 = arith.constant dense<0.000000e+00> : vector<16x128xf32>
    %899 = tpu.matmul %898, %7, %cst_255 {dimension_numbers = #tpu.dot_dimension_numbers<[1], [0], [0], [1], [0, 0, 1, 1], [], []>} : vector<16x128xf32>, vector<128x128xf32>, vector<16x128xf32> -> vector<16x128xf32>
    %900 = vector.broadcast %8 : vector<1x128xf32> to vector<16x128xf32>
    %901 = arith.addf %899, %900 : vector<16x128xf32>
    %902 = vector.broadcast %879 : f32 to vector<16x128xf32>
    %903 = arith.mulf %902, %875 : vector<16x128xf32>
    %904 = vector.broadcast %882 : f32 to vector<16x128xf32>
    %905 = arith.mulf %904, %901 : vector<16x128xf32>
    %906 = arith.subf %903, %905 : vector<16x128xf32>
    %cst_256 = arith.constant -1.000000e+00 : f32
    %cst_257 = arith.constant 1.000000e+00 : f32
    %907 = vector.broadcast %cst_256 : f32 to vector<16x128xf32>
    %908 = arith.maximumf %907, %906 : vector<16x128xf32>
    %909 = vector.broadcast %cst_257 : f32 to vector<16x128xf32>
    %910 = arith.minimumf %909, %908 : vector<16x128xf32>
    %911 = vector.broadcast %885 : f32 to vector<16x128xf32>
    %912 = arith.mulf %911, %910 : vector<16x128xf32>
    %913 = vector.broadcast %888 : f32 to vector<16x128xf32>
    %914 = arith.mulf %913, %875 : vector<16x128xf32>
    %915 = arith.addf %912, %914 : vector<16x128xf32>
    %916 = arith.index_cast %c18_i32 : i32 to index
    %c0_258 = arith.constant 0 : index
    %c0_259 = arith.constant 0 : index
    %917 = vector.load %arg4[%916, %c0_258, %c0_259] : memref<20x16x128xf32, #tpu.memory_space<vmem>>, vector<1x16x128xf32>
    %918 = vector.shape_cast %917 : vector<1x16x128xf32> to vector<16x128xf32>
    %919 = vector.broadcast %891 : f32 to vector<16x128xf32>
    %920 = arith.mulf %919, %918 : vector<16x128xf32>
    %921 = arith.addf %915, %920 : vector<16x128xf32>
    %922 = arith.mulf %921, %2 : vector<16x128xf32>
    %923 = arith.addf %4, %922 : vector<16x128xf32>
    %c19_i32 = arith.constant 19 : i32
    %c8_i32_260 = arith.constant 8 : i32
    %924 = arith.muli %c19_i32, %c8_i32_260 : i32
    %c1_i32_261 = arith.constant 1 : i32
    %925 = arith.addi %924, %c1_i32_261 : i32
    %926 = arith.index_cast %925 : i32 to index
    %927 = memref.load %arg0[%926] : memref<160xf32, #tpu.memory_space<smem>>
    %c2_i32_262 = arith.constant 2 : i32
    %928 = arith.addi %924, %c2_i32_262 : i32
    %929 = arith.index_cast %928 : i32 to index
    %930 = memref.load %arg0[%929] : memref<160xf32, #tpu.memory_space<smem>>
    %c3_i32_263 = arith.constant 3 : i32
    %931 = arith.addi %924, %c3_i32_263 : i32
    %932 = arith.index_cast %931 : i32 to index
    %933 = memref.load %arg0[%932] : memref<160xf32, #tpu.memory_space<smem>>
    %c4_i32_264 = arith.constant 4 : i32
    %934 = arith.addi %924, %c4_i32_264 : i32
    %935 = arith.index_cast %934 : i32 to index
    %936 = memref.load %arg0[%935] : memref<160xf32, #tpu.memory_space<smem>>
    %c5_i32_265 = arith.constant 5 : i32
    %937 = arith.addi %924, %c5_i32_265 : i32
    %938 = arith.index_cast %937 : i32 to index
    %939 = memref.load %arg0[%938] : memref<160xf32, #tpu.memory_space<smem>>
    %cst_266 = arith.constant dense<0.000000e+00> : vector<16x128xf32>
    %940 = tpu.matmul %923, %6, %cst_266 {dimension_numbers = #tpu.dot_dimension_numbers<[1], [0], [0], [1], [0, 0, 1, 1], [], []>} : vector<16x128xf32>, vector<128x128xf32>, vector<16x128xf32> -> vector<16x128xf32>
    %941 = arith.addf %940, %5 : vector<16x128xf32>
    %942 = arith.index_cast %c19_i32 : i32 to index
    %c0_267 = arith.constant 0 : index
    %943 = vector.load %arg6[%942, %c0_267] : memref<20x128xf32, #tpu.memory_space<vmem>>, vector<1x128xf32>
    %944 = vector.broadcast %943 : vector<1x128xf32> to vector<16x128xf32>
    %945 = arith.addf %941, %944 : vector<16x128xf32>
    %946 = math.tanh %945 : vector<16x128xf32>
    %cst_268 = arith.constant dense<0.000000e+00> : vector<16x128xf32>
    %947 = tpu.matmul %946, %7, %cst_268 {dimension_numbers = #tpu.dot_dimension_numbers<[1], [0], [0], [1], [0, 0, 1, 1], [], []>} : vector<16x128xf32>, vector<128x128xf32>, vector<16x128xf32> -> vector<16x128xf32>
    %948 = vector.broadcast %8 : vector<1x128xf32> to vector<16x128xf32>
    %949 = arith.addf %947, %948 : vector<16x128xf32>
    %950 = vector.broadcast %927 : f32 to vector<16x128xf32>
    %951 = arith.mulf %950, %923 : vector<16x128xf32>
    %952 = vector.broadcast %930 : f32 to vector<16x128xf32>
    %953 = arith.mulf %952, %949 : vector<16x128xf32>
    %954 = arith.subf %951, %953 : vector<16x128xf32>
    %cst_269 = arith.constant -1.000000e+00 : f32
    %cst_270 = arith.constant 1.000000e+00 : f32
    %955 = vector.broadcast %cst_269 : f32 to vector<16x128xf32>
    %956 = arith.maximumf %955, %954 : vector<16x128xf32>
    %957 = vector.broadcast %cst_270 : f32 to vector<16x128xf32>
    %958 = arith.minimumf %957, %956 : vector<16x128xf32>
    %959 = vector.broadcast %933 : f32 to vector<16x128xf32>
    %960 = arith.mulf %959, %958 : vector<16x128xf32>
    %961 = vector.broadcast %936 : f32 to vector<16x128xf32>
    %962 = arith.mulf %961, %923 : vector<16x128xf32>
    %963 = arith.addf %960, %962 : vector<16x128xf32>
    %964 = arith.index_cast %c19_i32 : i32 to index
    %c0_271 = arith.constant 0 : index
    %c0_272 = arith.constant 0 : index
    %965 = vector.load %arg4[%964, %c0_271, %c0_272] : memref<20x16x128xf32, #tpu.memory_space<vmem>>, vector<1x16x128xf32>
    %966 = vector.shape_cast %965 : vector<1x16x128xf32> to vector<16x128xf32>
    %967 = vector.broadcast %939 : f32 to vector<16x128xf32>
    %968 = arith.mulf %967, %966 : vector<16x128xf32>
    %969 = arith.addf %963, %968 : vector<16x128xf32>
    %970 = arith.mulf %969, %2 : vector<16x128xf32>
    %971 = arith.addf %4, %970 : vector<16x128xf32>
    %c20_i32 = arith.constant 20 : i32
    %c0_273 = arith.constant 0 : index
    %c0_274 = arith.constant 0 : index
    %972 = vector.load %arg10[%c0_273, %c0_274] : memref<16x128xf32, #tpu.memory_space<vmem>>, vector<16x128xf32>
    tpu.vector_store %arg10[%c0_273, %c0_274], %971 {strides = array<i32>} : memref<16x128xf32, #tpu.memory_space<vmem>>, vector<16x128xf32>,
    return
  }
}

</mosaic_0001>

<llo_original>
// kernel: tpu_custom_call.1
$region0: #{tpu_custom_call.1}
  #allocation0 [shape = 'u32[]', space=smem, size = 0x4, offset = 0x4, fixed_abs, tag = 'smem constant byte address 0x4 - core index']
  #allocation1 [shape = 'u32[144,128]{1,0:T(1,128)}', space=vmem, size = 0x12000, scoped, tag = 'internal scratch']
  %s0 = inlined_call_operand.hbm [shape: f32[160], index: 0, kind: input, shape index: {}]
  %s1 = inlined_call_operand.hbm [shape: f32[16,128], index: 1, kind: input, shape index: {}]
  %s2 = inlined_call_operand.hbm [shape: f32[16,128], index: 2, kind: input, shape index: {}]
  %s3 = inlined_call_operand.hbm [shape: f32[16,128], index: 3, kind: input, shape index: {}]
  %s4 = inlined_call_operand.hbm [shape: f32[20,16,128], index: 4, kind: input, shape index: {}]
  %s5 = inlined_call_operand.hbm [shape: f32[128,128], index: 5, kind: input, shape index: {}]
  %s6 = inlined_call_operand.hbm [shape: f32[20,128], index: 6, kind: input, shape index: {}]
  %s7 = inlined_call_operand.vmem [shape: f32[16,128], index: 7, kind: input, shape index: {}]
  %s8 = inlined_call_operand.hbm [shape: f32[128,128], index: 8, kind: input, shape index: {}]
  %s9 = inlined_call_operand.vmem [shape: f32[1,128], index: 9, kind: input, shape index: {}]
  %s10 = inlined_call_operand.hbm [shape: f32[16,128], index: 10, kind: output, shape index: {}]
  %s11 = sld [smem:[#allocation0]]
  $region82: #{tpu_custom_call.1} parent=0
    _
  %s13 = ssub.s32 1, %s11
  %s14 = scalar_select 0, %s13, %s11
  $region1: #{tpu_custom_call.1} parent=0
    #allocation2 [shape = 'u8[1024]{0}', space=smem, size = 0x400, scoped, tag = 'input window, operand 0, single buffered']
    #allocation3 [shape = 's32[1]{0}', space=sflag, size = 0x4, scoped, tag = 'scoped memory for tpu_custom_call.1']
    #allocation4 [shape = 's32[1]{0}', space=sflag, size = 0x4, scoped, tag = 'scoped memory for tpu_custom_call.1']
    #allocation5 [shape = 's32[1]{0}', space=sflag, size = 0x4, scoped, tag = 'scoped memory for tpu_custom_call.1']
    #allocation6 [shape = 'u8[8192]{0}', space=vmem, size = 0x2000, scoped, tag = 'input window, operand 1, single buffered']
    #allocation7 [shape = 'u8[8192]{0}', space=vmem, size = 0x2000, scoped, tag = 'input window, operand 2, single buffered']
    #allocation8 [shape = 's32[1]{0}', space=sflag, size = 0x4, scoped, tag = 'scoped memory for tpu_custom_call.1']
    #allocation9 [shape = 'u8[8192]{0}', space=vmem, size = 0x2000, scoped, tag = 'input window, operand 3, single buffered']
    #allocation10 [shape = 'u8[163840]{0}', space=vmem, size = 0x28000, scoped, tag = 'input window, operand 4, single buffered']
    #allocation11 [shape = 's32[1]{0}', space=sflag, size = 0x4, scoped, tag = 'scoped memory for tpu_custom_call.1']
    #allocation12 [shape = 'u8[65536]{0}', space=vmem, size = 0x10000, scoped, tag = 'input window, operand 5, single buffered']
    #allocation13 [shape = 'u8[12288]{0}', space=vmem, size = 0x3000, scoped, tag = 'input window, operand 6, single buffered']
    #allocation14 [shape = 's32[1]{0}', space=sflag, size = 0x4, scoped, tag = 'scoped memory for tpu_custom_call.1']
    #allocation15 [shape = 'u8[65536]{0}', space=vmem, size = 0x10000, scoped, tag = 'input window, operand 8, single buffered']
    #allocation16 [shape = 'u8[8192]{0}', space=vmem, size = 0x2000, scoped, tag = 'output window, operand 0, single buffered']
    %15 = vsyncpa [#allocation5], 0
    %16 = vsyncpa [#allocation3], 0
    %17 = vsyncpa [#allocation8], 0
    %18 = vsyncpa [#allocation11], 0
    %19 = vsyncpa [#allocation14], 0
    %20 = vsyncpa [#allocation4], 0
    // Predicated region
    $region2: #{tpu_custom_call.1} parent=1 // pred_check
      _
    $region3: #{tpu_custom_call.1} parent=1 // pred_check_branch
      %22 = sbr.rel (0) target = $region5
    $region4: #{tpu_custom_call.1} parent=1 // pred_region
      %s24 = ssub.s32 32, 32
      %25 = vsyncadd [#allocation5], %s24
      %28 = dma.hbm_to_smem %s0, 32, [#allocation2], [#allocation5]
    $region5: #{tpu_custom_call.1} parent=1 // pred_fallthru
      _
    // Predicated region
    $region6: #{tpu_custom_call.1} parent=1 // pred_check
      _
    $region7: #{tpu_custom_call.1} parent=1 // pred_check_branch
      %30 = sbr.rel (0) target = $region9
    $region8: #{tpu_custom_call.1} parent=1 // pred_region
      %s32 = ssub.s32 256, 256
      %33 = vsyncadd [#allocation3], %s32
      %s34 = sshll.u32 [#allocation6], 4
      %s35 = int_to_ptr.vmem [resolvable:$true] %s34
      %40 = dma.hbm_to_vmem [thread:$0]  %s1, 256, %s35, [#allocation3], 128, 128, 8
    $region9: #{tpu_custom_call.1} parent=1 // pred_fallthru
      _
    // Predicated region
    $region10: #{tpu_custom_call.1} parent=1 // pred_check
      _
    $region11: #{tpu_custom_call.1} parent=1 // pred_check_branch
      %42 = sbr.rel (0) target = $region13
    $region12: #{tpu_custom_call.1} parent=1 // pred_region
      %s44 = ssub.s32 256, 256
      %45 = vsyncadd [#allocation8], %s44
      %s46 = sshll.u32 [#allocation7], 4
      %s47 = int_to_ptr.vmem [resolvable:$true] %s46
      %52 = dma.hbm_to_vmem [thread:$0]  %s2, 256, %s47, [#allocation8], 128, 128, 8
    $region13: #{tpu_custom_call.1} parent=1 // pred_fallthru
      _
    // Predicated region
    $region14: #{tpu_custom_call.1} parent=1 // pred_check
      _
    $region15: #{tpu_custom_call.1} parent=1 // pred_check_branch
      %54 = sbr.rel (0) target = $region17
    $region16: #{tpu_custom_call.1} parent=1 // pred_region
      %s56 = ssub.s32 256, 256
      %57 = vsyncadd [#allocation8], %s56
      %s58 = sshll.u32 [#allocation9], 4
      %s59 = int_to_ptr.vmem [resolvable:$true] %s58
      %64 = dma.hbm_to_vmem [thread:$0]  %s3, 256, %s59, [#allocation8], 128, 128, 8
    $region17: #{tpu_custom_call.1} parent=1 // pred_fallthru
      _
    // Predicated region
    $region18: #{tpu_custom_call.1} parent=1 // pred_check
      _
    $region19: #{tpu_custom_call.1} parent=1 // pred_check_branch
      %66 = sbr.rel (0) target = $region21
    $region20: #{tpu_custom_call.1} parent=1 // pred_region
      %s68 = ssub.s32 5120, 5120
      %69 = vsyncadd [#allocation11], %s68
      %s70 = sshll.u32 [#allocation10], 4
      %s71 = int_to_ptr.vmem [resolvable:$true] %s70
      %76 = dma.hbm_to_vmem [thread:$0]  %s4, 5120, %s71, [#allocation11], 128, 128, 8
    $region21: #{tpu_custom_call.1} parent=1 // pred_fallthru
      _
    // Predicated region
    $region22: #{tpu_custom_call.1} parent=1 // pred_check
      _
    $region23: #{tpu_custom_call.1} parent=1 // pred_check_branch
      %78 = sbr.rel (0) target = $region25
    $region24: #{tpu_custom_call.1} parent=1 // pred_region
      %s80 = ssub.s32 2048, 2048
      %81 = vsyncadd [#allocation11], %s80
      %s82 = sshll.u32 [#allocation12], 4
      %s83 = int_to_ptr.vmem [resolvable:$true] %s82
      %88 = dma.hbm_to_vmem [thread:$0]  %s5, 2048, %s83, [#allocation11], 128, 128, 8
    $region25: #{tpu_custom_call.1} parent=1 // pred_fallthru
      _
    // Predicated region
    $region26: #{tpu_custom_call.1} parent=1 // pred_check
      _
    $region27: #{tpu_custom_call.1} parent=1 // pred_check_branch
      %90 = sbr.rel (0) target = $region29
    $region28: #{tpu_custom_call.1} parent=1 // pred_region
      %s92 = ssub.s32 384, 384
      %93 = vsyncadd [#allocation14], %s92
      %s94 = sshll.u32 [#allocation13], 4
      %s95 = int_to_ptr.vmem [resolvable:$true] %s94
      %100 = dma.hbm_to_vmem [thread:$0]  %s6, 384, %s95, [#allocation14], 128, 128, 8
    $region29: #{tpu_custom_call.1} parent=1 // pred_fallthru
      _
    // Predicated region
    $region30: #{tpu_custom_call.1} parent=1 // pred_check
      _
    $region31: #{tpu_custom_call.1} parent=1 // pred_check_branch
      %102 = sbr.rel (0) target = $region33
    $region32: #{tpu_custom_call.1} parent=1 // pred_region
      _
    $region33: #{tpu_custom_call.1} parent=1 // pred_fallthru
      _
    // Predicated region
    $region34: #{tpu_custom_call.1} parent=1 // pred_check
      _
    $region35: #{tpu_custom_call.1} parent=1 // pred_check_branch
      %104 = sbr.rel (0) target = $region37
    $region36: #{tpu_custom_call.1} parent=1 // pred_region
      %s106 = ssub.s32 2048, 2048
      %107 = vsyncadd [#allocation14], %s106
      %s108 = sshll.u32 [#allocation15], 4
      %s109 = int_to_ptr.vmem [resolvable:$true] %s108
      %114 = dma.hbm_to_vmem [thread:$0]  %s8, 2048, %s109, [#allocation14], 128, 128, 8
    $region37: #{tpu_custom_call.1} parent=1 // pred_fallthru
      _
    // Predicated region
    $region38: #{tpu_custom_call.1} parent=1 // pred_check
      _
    $region39: #{tpu_custom_call.1} parent=1 // pred_check_branch
      %116 = sbr.rel (0) target = $region41
    $region40: #{tpu_custom_call.1} parent=1 // pred_region
      _
    $region41: #{tpu_custom_call.1} parent=1 // pred_fallthru
      _
    // Predicated region
    $region42: #{tpu_custom_call.1} parent=1 // pred_check
      _
    $region43: #{tpu_custom_call.1} parent=1 // pred_check_branch
      %118 = sbr.rel (0) target = $region45
    $region44: #{tpu_custom_call.1} parent=1 // pred_region
      %119 = dma.done [#allocation5], 32
    $region45: #{tpu_custom_call.1} parent=1 // pred_fallthru
      _
    // Predicated region
    $region46: #{tpu_custom_call.1} parent=1 // pred_check
      _
    $region47: #{tpu_custom_call.1} parent=1 // pred_check_branch
      %121 = sbr.rel (0) target = $region49
    $region48: #{tpu_custom_call.1} parent=1 // pred_region
      %122 = dma.done [#allocation3], 256
    $region49: #{tpu_custom_call.1} parent=1 // pred_fallthru
      _
    // Predicated region
    $region50: #{tpu_custom_call.1} parent=1 // pred_check
      _
    $region51: #{tpu_custom_call.1} parent=1 // pred_check_branch
      %124 = sbr.rel (0) target = $region53
    $region52: #{tpu_custom_call.1} parent=1 // pred_region
      %125 = dma.done [#allocation8], 256
    $region53: #{tpu_custom_call.1} parent=1 // pred_fallthru
      _
    // Predicated region
    $region54: #{tpu_custom_call.1} parent=1 // pred_check
      _
    $region55: #{tpu_custom_call.1} parent=1 // pred_check_branch
      %127 = sbr.rel (0) target = $region57
    $region56: #{tpu_custom_call.1} parent=1 // pred_region
      %128 = dma.done [#allocation8], 256
    $region57: #{tpu_custom_call.1} parent=1 // pred_fallthru
      _
    // Predicated region
    $region58: #{tpu_custom_call.1} parent=1 // pred_check
      _
    $region59: #{tpu_custom_call.1} parent=1 // pred_check_branch
      %130 = sbr.rel (0) target = $region61
    $region60: #{tpu_custom_call.1} parent=1 // pred_region
      %131 = dma.done [#allocation11], 5120
    $region61: #{tpu_custom_call.1} parent=1 // pred_fallthru
      _
    // Predicated region
    $region62: #{tpu_custom_call.1} parent=1 // pred_check
      _
    $region63: #{tpu_custom_call.1} parent=1 // pred_check_branch
      %133 = sbr.rel (0) target = $region65
    $region64: #{tpu_custom_call.1} parent=1 // pred_region
      %134 = dma.done [#allocation11], 2048
    $region65: #{tpu_custom_call.1} parent=1 // pred_fallthru
      _
    // Predicated region
    $region66: #{tpu_custom_call.1} parent=1 // pred_check
      _
    $region67: #{tpu_custom_call.1} parent=1 // pred_check_branch
      %136 = sbr.rel (0) target = $region69
    $region68: #{tpu_custom_call.1} parent=1 // pred_region
      %137 = dma.done [#allocation14], 384
    $region69: #{tpu_custom_call.1} parent=1 // pred_fallthru
      _
    // Predicated region
    $region70: #{tpu_custom_call.1} parent=1 // pred_check
      _
    $region71: #{tpu_custom_call.1} parent=1 // pred_check_branch
      %139 = sbr.rel (0) target = $region73
    $region72: #{tpu_custom_call.1} parent=1 // pred_region
      %140 = dma.done [#allocation14], 2048
    $region73: #{tpu_custom_call.1} parent=1 // pred_fallthru
      _
    %141 = sfence
    %v142 = vld [vmem:[#allocation7] sm:$0xff]
    %v143 = vld [vmem:[#allocation7 + $0x8] sm:$0xff]
    %v144 = vsub.f32 1.0, %v142
    %v145 = vsub.f32 1.0, %v143
    %v146 = vld [vmem:[#allocation6] sm:$0xff]
    %v147 = vld [vmem:[#allocation6 + $0x8] sm:$0xff]
    %v148 = vmul.f32 %v146, %v142
    %v149 = vmul.f32 %v147, %v143
    %v150 = vld [vmem:[%s7] sm:$0xff]
    %v151 = vld [vmem:[%s7 + $0x8] sm:$0xff]
    %v152 = vld [vmem:[#allocation12] sm:$0xff]
    %v153 = vld [vmem:[#allocation12 + $0x8] sm:$0xff]
    %v154 = vld [vmem:[#allocation12 + $0x10] sm:$0xff]
    %v155 = vld [vmem:[#allocation12 + $0x18] sm:$0xff]
    %v156 = vld [vmem:[#allocation12 + $0x20] sm:$0xff]
    %v157 = vld [vmem:[#allocation12 + $0x28] sm:$0xff]
    %v158 = vld [vmem:[#allocation12 + $0x30] sm:$0xff]
    %v159 = vld [vmem:[#allocation12 + $0x38] sm:$0xff]
    %v160 = vld [vmem:[#allocation12 + $0x40] sm:$0xff]
    %v161 = vld [vmem:[#allocation12 + $0x48] sm:$0xff]
    %v162 = vld [vmem:[#allocation12 + $0x50] sm:$0xff]
    %v163 = vld [vmem:[#allocation12 + $0x58] sm:$0xff]
    %v164 = vld [vmem:[#allocation12 + $0x60] sm:$0xff]
    %v165 = vld [vmem:[#allocation12 + $0x68] sm:$0xff]
    %v166 = vld [vmem:[#allocation12 + $0x70] sm:$0xff]
    %v167 = vld [vmem:[#allocation12 + $0x78] sm:$0xff]
    %v168 = vld [vmem:[#allocation15] sm:$0xff]
    %v169 = vld [vmem:[#allocation15 + $0x8] sm:$0xff]
    %v170 = vld [vmem:[#allocation15 + $0x10] sm:$0xff]
    %v171 = vld [vmem:[#allocation15 + $0x18] sm:$0xff]
    %v172 = vld [vmem:[#allocation15 + $0x20] sm:$0xff]
    %v173 = vld [vmem:[#allocation15 + $0x28] sm:$0xff]
    %v174 = vld [vmem:[#allocation15 + $0x30] sm:$0xff]
    %v175 = vld [vmem:[#allocation15 + $0x38] sm:$0xff]
    %v176 = vld [vmem:[#allocation15 + $0x40] sm:$0xff]
    %v177 = vld [vmem:[#allocation15 + $0x48] sm:$0xff]
    %v178 = vld [vmem:[#allocation15 + $0x50] sm:$0xff]
    %v179 = vld [vmem:[#allocation15 + $0x58] sm:$0xff]
    %v180 = vld [vmem:[#allocation15 + $0x60] sm:$0xff]
    %v181 = vld [vmem:[#allocation15 + $0x68] sm:$0xff]
    %v182 = vld [vmem:[#allocation15 + $0x70] sm:$0xff]
    %v183 = vld [vmem:[#allocation15 + $0x78] sm:$0xff]
    %v184 = vld [vmem:[%s9] sm:$0x1]
    %v185 = vld [vmem:[#allocation9] sm:$0xff]
    %v186 = vld [vmem:[#allocation9 + $0x8] sm:$0xff]
    %v187 = vmul.f32 %v185, %v144
    %v188 = vmul.f32 %v186, %v145
    %v189 = vadd.f32 %v148, %v187
    %v190 = vadd.f32 %v149, %v188
    %s191 = sld [smem:[#allocation2 + $0x1]]
    %s192 = sld [smem:[#allocation2 + $0x2]]
    %s193 = sld [smem:[#allocation2 + $0x3]]
    %s194 = sld [smem:[#allocation2 + $0x4]]
    %s195 = sld [smem:[#allocation2 + $0x5]]
    %196 = vmatprep.subr.mxu0 0.0
    %197 = vmatpush1.msra.mxu0 %v152
    %198 = vmatprep.subr.mxu0 0.0
    %199 = vmatpush1.msra.mxu0 %v153
    %200 = vmatprep.subr.mxu0 0.0
    %201 = vmatpush1.msra.mxu0 %v154
    %202 = vmatprep.subr.mxu0 0.0
    %203 = vmatpush1.msra.mxu0 %v155
    %204 = vmatprep.subr.mxu0 0.0
    %205 = vmatpush1.msra.mxu0 %v156
    %206 = vmatprep.subr.mxu0 0.0
    %207 = vmatpush1.msra.mxu0 %v157
    %208 = vmatprep.subr.mxu0 0.0
    %209 = vmatpush1.msra.mxu0 %v158
    %210 = vmatprep.subr.mxu0 0.0
    %211 = vmatpush1.msra.mxu0 %v159
    %212 = vmatprep.subr.mxu0 0.0
    %213 = vmatpush1.msra.mxu0 %v160
    %214 = vmatprep.subr.mxu0 0.0
    %215 = vmatpush1.msra.mxu0 %v161
    %216 = vmatprep.subr.mxu0 0.0
    %217 = vmatpush1.msra.mxu0 %v162
    %218 = vmatprep.subr.mxu0 0.0
    %219 = vmatpush1.msra.mxu0 %v163
    %220 = vmatprep.subr.mxu0 0.0
    %221 = vmatpush1.msra.mxu0 %v164
    %222 = vmatprep.subr.mxu0 0.0
    %223 = vmatpush1.msra.mxu0 %v165
    %224 = vmatprep.subr.mxu0 0.0
    %225 = vmatpush1.msra.mxu0 %v166
    %226 = vmatprep.subr.mxu0 0.0
    %227 = vmatpush1.msra.mxu0 %v167
    %228 = vmatprep.subr.mxu0 0.0
    %229 = vmatpush1.msra.mxu0 0.0
    %230 = vmatprep.subr.mxu0 0.0
    %231 = vmatpush1.msra.mxu0 0.0
    %232 = vmatprep.subr.mxu0 0.0
    %233 = vmatpush1.msra.mxu0 0.0
    %234 = vmatprep.subr.mxu0 0.0
    %235 = vmatpush1.msra.mxu0 0.0
    %236 = vmatprep.subr.mxu0 0.0
    %237 = vmatpush1.msra.mxu0 0.0
    %238 = vmatprep.subr.mxu0 0.0
    %239 = vmatpush1.msra.mxu0 0.0
    %240 = vmatprep.subr.mxu0 0.0
    %241 = vmatpush1.msra.mxu0 0.0
    %242 = vmatprep.subr.mxu0 0.0
    %243 = vmatpush1.msra.mxu0 0.0
    %244 = vmatprep.subr.mxu0 0.0
    %245 = vmatpush1.msra.mxu0 0.0
    %246 = vmatprep.subr.mxu0 0.0
    %247 = vmatpush1.msra.mxu0 0.0
    %248 = vmatprep.subr.mxu0 0.0
    %249 = vmatpush1.msra.mxu0 0.0
    %250 = vmatprep.subr.mxu0 0.0
    %251 = vmatpush1.msra.mxu0 0.0
    %252 = vmatprep.subr.mxu0 0.0
    %253 = vmatpush1.msra.mxu0 0.0
    %254 = vmatprep.subr.mxu0 0.0
    %255 = vmatpush1.msra.mxu0 0.0
    %256 = vmatprep.subr.mxu0 0.0
    %257 = vmatpush1.msra.mxu0 0.0
    %258 = vmatprep.subr.mxu0 0.0
    %259 = vmatpush1.msra.mxu0 0.0
    %260 = vmatprep.mubr.f32.mxu0 0.0
    %261 = vmatmul.mubr.f32.gmra.mrb[0].mxu0 %v189
    %v262 = vpop.f32.mrb[0].mxu0
    %v263 = vadd.f32 %v150, %v262
    %v264 = vpop.f32.mrb[0].mxu0
    %265 = vmatprep.mubr.f32.mxu0 0.0
    %266 = vmatmul.mubr.f32.gmra.mrb[0].mxu0 %v190
    %v267 = vpop.f32.mrb[0].mxu0
    %v268 = vadd.f32 %v151, %v267
    %v269 = vpop.f32.mrb[0].mxu0
    %270 = vdwg.mxu0
    %v271 = vld [vmem:[#allocation13] sm:$0x1]
    %v272 = vlaneseq
    %v273 = vshrl.u32 %v272, 7
    %v274 = vsub.s32 0, %v273
    %v275 = vrot.slane %v271, %v274
    %v276 = vadd.f32 %v263, %v275
    %v277 = vadd.f32 %v268, %v275
    %v278 = vtanh.pop %v276
    %v279 = vtanh.pop %v277
    %v281 = vlaneseq
    %v282 = vshrl.u32 %v281, 7
    %v283 = vsub.s32 0, %v282
    %v284 = vrot.slane %v184, %v283
    %286 = vmatprep.subr.mxu0 0.0
    %287 = vmatpush1.msra.mxu0 %v168
    %288 = vmatprep.subr.mxu0 0.0
    %289 = vmatpush1.msra.mxu0 %v169
    %290 = vmatprep.subr.mxu0 0.0
    %291 = vmatpush1.msra.mxu0 %v170
    %292 = vmatprep.subr.mxu0 0.0
    %293 = vmatpush1.msra.mxu0 %v171
    %294 = vmatprep.subr.mxu0 0.0
    %295 = vmatpush1.msra.mxu0 %v172
    %296 = vmatprep.subr.mxu0 0.0
    %297 = vmatpush1.msra.mxu0 %v173
    %298 = vmatprep.subr.mxu0 0.0
    %299 = vmatpush1.msra.mxu0 %v174
    %300 = vmatprep.subr.mxu0 0.0
    %301 = vmatpush1.msra.mxu0 %v175
    %302 = vmatprep.subr.mxu0 0.0
    %303 = vmatpush1.msra.mxu0 %v176
    %304 = vmatprep.subr.mxu0 0.0
    %305 = vmatpush1.msra.mxu0 %v177
    %306 = vmatprep.subr.mxu0 0.0
    %307 = vmatpush1.msra.mxu0 %v178
    %308 = vmatprep.subr.mxu0 0.0
    %309 = vmatpush1.msra.mxu0 %v179
    %310 = vmatprep.subr.mxu0 0.0
    %311 = vmatpush1.msra.mxu0 %v180
    %312 = vmatprep.subr.mxu0 0.0
    %313 = vmatpush1.msra.mxu0 %v181
    %314 = vmatprep.subr.mxu0 0.0
    %315 = vmatpush1.msra.mxu0 %v182
    %316 = vmatprep.subr.mxu0 0.0
    %317 = vmatpush1.msra.mxu0 %v183
    %318 = vmatprep.subr.mxu0 0.0
    %319 = vmatpush1.msra.mxu0 0.0
    %320 = vmatprep.subr.mxu0 0.0
    %321 = vmatpush1.msra.mxu0 0.0
    %322 = vmatprep.subr.mxu0 0.0
    %323 = vmatpush1.msra.mxu0 0.0
    %324 = vmatprep.subr.mxu0 0.0
    %325 = vmatpush1.msra.mxu0 0.0
    %326 = vmatprep.subr.mxu0 0.0
    %327 = vmatpush1.msra.mxu0 0.0
    %328 = vmatprep.subr.mxu0 0.0
    %329 = vmatpush1.msra.mxu0 0.0
    %330 = vmatprep.subr.mxu0 0.0
    %331 = vmatpush1.msra.mxu0 0.0
    %332 = vmatprep.subr.mxu0 0.0
    %333 = vmatpush1.msra.mxu0 0.0
    %334 = vmatprep.subr.mxu0 0.0
    %335 = vmatpush1.msra.mxu0 0.0
    %336 = vmatprep.subr.mxu0 0.0
    %337 = vmatpush1.msra.mxu0 0.0
    %338 = vmatprep.subr.mxu0 0.0
    %339 = vmatpush1.msra.mxu0 0.0
    %340 = vmatprep.subr.mxu0 0.0
    %341 = vmatpush1.msra.mxu0 0.0
    %342 = vmatprep.subr.mxu0 0.0
    %343 = vmatpush1.msra.mxu0 0.0
    %344 = vmatprep.subr.mxu0 0.0
    %345 = vmatpush1.msra.mxu0 0.0
    %346 = vmatprep.subr.mxu0 0.0
    %347 = vmatpush1.msra.mxu0 0.0
    %348 = vmatprep.subr.mxu0 0.0
    %349 = vmatpush1.msra.mxu0 0.0
    %350 = vmatprep.mubr.f32.mxu0 0.0
    %351 = vmatmul.mubr.f32.gmra.mrb[0].mxu0 %v278
    %v352 = vpop.f32.mrb[0].mxu0
    %v353 = vadd.f32 %v284, %v352
    %v354 = vpop.f32.mrb[0].mxu0
    %355 = vmatprep.mubr.f32.mxu0 0.0
    %356 = vmatmul.mubr.f32.gmra.mrb[0].mxu0 %v279
    %v357 = vpop.f32.mrb[0].mxu0
    %v358 = vadd.f32 %v284, %v357
    %v359 = vpop.f32.mrb[0].mxu0
    %360 = vdwg.mxu0
    %v361 = vstv %s191
    %v362 = vmul.f32 %v361, %v189
    %v363 = vmul.f32 %v361, %v190
    %v364 = vstv %s192
    %v365 = vmul.f32 %v364, %v353
    %v366 = vmul.f32 %v364, %v358
    %v367 = vsub.f32 %v362, %v365
    %v368 = vsub.f32 %v363, %v366
    %v369 = vmax.f32 %v367, -1.0
    %v370 = vmax.f32 %v368, -1.0
    %v371 = vmin.f32 %v369, 1.0
    %v372 = vmin.f32 %v370, 1.0
    %v373 = vstv %s193
    %v374 = vmul.f32 %v373, %v371
    %v375 = vmul.f32 %v373, %v372
    %v376 = vstv %s194
    %v377 = vmul.f32 %v376, %v189
    %v378 = vmul.f32 %v376, %v190
    %v379 = vadd.f32 %v374, %v377
    %v380 = vadd.f32 %v375, %v378
    %v381 = vld [vmem:[#allocation10] sm:$0xff]
    %v382 = vld [vmem:[#allocation10 + $0x8] sm:$0xff]
    %v383 = vstv %s195
    %v384 = vmul.f32 %v383, %v381
    %v385 = vmul.f32 %v383, %v382
    %v386 = vadd.f32 %v379, %v384
    %v387 = vadd.f32 %v380, %v385
    %v388 = vmul.f32 %v386, %v144
    %v389 = vmul.f32 %v387, %v145
    %v390 = vadd.f32 %v148, %v388
    %v391 = vadd.f32 %v149, %v389
    %s392 = sld [smem:[#allocation2 + $0x9]]
    %s393 = sld [smem:[#allocation2 + $0xa]]
    %s394 = sld [smem:[#allocation2 + $0xb]]
    %s395 = sld [smem:[#allocation2 + $0xc]]
    %s396 = sld [smem:[#allocation2 + $0xd]]
    %397 = vmatprep.subr.mxu0 0.0
    %398 = vmatpush1.msra.mxu0 %v152
    %399 = vmatprep.subr.mxu0 0.0
    %400 = vmatpush1.msra.mxu0 %v153
    %401 = vmatprep.subr.mxu0 0.0
    %402 = vmatpush1.msra.mxu0 %v154
    %403 = vmatprep.subr.mxu0 0.0
    %404 = vmatpush1.msra.mxu0 %v155
    %405 = vmatprep.subr.mxu0 0.0
    %406 = vmatpush1.msra.mxu0 %v156
    %407 = vmatprep.subr.mxu0 0.0
    %408 = vmatpush1.msra.mxu0 %v157
    %409 = vmatprep.subr.mxu0 0.0
    %410 = vmatpush1.msra.mxu0 %v158
    %411 = vmatprep.subr.mxu0 0.0
    %412 = vmatpush1.msra.mxu0 %v159
    %413 = vmatprep.subr.mxu0 0.0
    %414 = vmatpush1.msra.mxu0 %v160
    %415 = vmatprep.subr.mxu0 0.0
    %416 = vmatpush1.msra.mxu0 %v161
    %417 = vmatprep.subr.mxu0 0.0
    %418 = vmatpush1.msra.mxu0 %v162
    %419 = vmatprep.subr.mxu0 0.0
    %420 = vmatpush1.msra.mxu0 %v163
    %421 = vmatprep.subr.mxu0 0.0
    %422 = vmatpush1.msra.mxu0 %v164
    %423 = vmatprep.subr.mxu0 0.0
    %424 = vmatpush1.msra.mxu0 %v165
    %425 = vmatprep.subr.mxu0 0.0
    %426 = vmatpush1.msra.mxu0 %v166
    %427 = vmatprep.subr.mxu0 0.0
    %428 = vmatpush1.msra.mxu0 %v167
    %429 = vmatprep.subr.mxu0 0.0
    %430 = vmatpush1.msra.mxu0 0.0
    %431 = vmatprep.subr.mxu0 0.0
    %432 = vmatpush1.msra.mxu0 0.0
    %433 = vmatprep.subr.mxu0 0.0
    %434 = vmatpush1.msra.mxu0 0.0
    %435 = vmatprep.subr.mxu0 0.0
    %436 = vmatpush1.msra.mxu0 0.0
    %437 = vmatprep.subr.mxu0 0.0
    %438 = vmatpush1.msra.mxu0 0.0
    %439 = vmatprep.subr.mxu0 0.0
    %440 = vmatpush1.msra.mxu0 0.0
    %441 = vmatprep.subr.mxu0 0.0
    %442 = vmatpush1.msra.mxu0 0.0
    %443 = vmatprep.subr.mxu0 0.0
    %444 = vmatpush1.msra.mxu0 0.0
    %445 = vmatprep.subr.mxu0 0.0
    %446 = vmatpush1.msra.mxu0 0.0
    %447 = vmatprep.subr.mxu0 0.0
    %448 = vmatpush1.msra.mxu0 0.0
    %449 = vmatprep.subr.mxu0 0.0
    %450 = vmatpush1.msra.mxu0 0.0
    %451 = vmatprep.subr.mxu0 0.0
    %452 = vmatpush1.msra.mxu0 0.0
    %453 = vmatprep.subr.mxu0 0.0
    %454 = vmatpush1.msra.mxu0 0.0
    %455 = vmatprep.subr.mxu0 0.0
    %456 = vmatpush1.msra.mxu0 0.0
    %457 = vmatprep.subr.mxu0 0.0
    %458 = vmatpush1.msra.mxu0 0.0
    %459 = vmatprep.subr.mxu0 0.0
    %460 = vmatpush1.msra.mxu0 0.0
    %461 = vmatprep.mubr.f32.mxu0 0.0
    %462 = vmatmul.mubr.f32.gmra.mrb[0].mxu0 %v390
    %v463 = vpop.f32.mrb[0].mxu0
    %v464 = vadd.f32 %v150, %v463
    %v465 = vpop.f32.mrb[0].mxu0
    %466 = vmatprep.mubr.f32.mxu0 0.0
    %467 = vmatmul.mubr.f32.gmra.mrb[0].mxu0 %v391
    %v468 = vpop.f32.mrb[0].mxu0
    %v469 = vadd.f32 %v151, %v468
    %v470 = vpop.f32.mrb[0].mxu0
    %471 = vdwg.mxu0
    %v472 = vld [vmem:[#allocation13 + $0x1] sm:$0x1]
    %v473 = vlaneseq
    %v474 = vshrl.u32 %v473, 7
    %v475 = vsub.s32 0, %v474
    %v476 = vrot.slane %v472, %v475
    %v477 = vadd.f32 %v464, %v476
    %v478 = vadd.f32 %v469, %v476
    %v479 = vtanh.pop %v477
    %v480 = vtanh.pop %v478
    %481 = vmatprep.subr.mxu0 0.0
    %482 = vmatpush1.msra.mxu0 %v168
    %483 = vmatprep.subr.mxu0 0.0
    %484 = vmatpush1.msra.mxu0 %v169
    %485 = vmatprep.subr.mxu0 0.0
    %486 = vmatpush1.msra.mxu0 %v170
    %487 = vmatprep.subr.mxu0 0.0
    %488 = vmatpush1.msra.mxu0 %v171
    %489 = vmatprep.subr.mxu0 0.0
    %490 = vmatpush1.msra.mxu0 %v172
    %491 = vmatprep.subr.mxu0 0.0
    %492 = vmatpush1.msra.mxu0 %v173
    %493 = vmatprep.subr.mxu0 0.0
    %494 = vmatpush1.msra.mxu0 %v174
    %495 = vmatprep.subr.mxu0 0.0
    %496 = vmatpush1.msra.mxu0 %v175
    %497 = vmatprep.subr.mxu0 0.0
    %498 = vmatpush1.msra.mxu0 %v176
    %499 = vmatprep.subr.mxu0 0.0
    %500 = vmatpush1.msra.mxu0 %v177
    %501 = vmatprep.subr.mxu0 0.0
    %502 = vmatpush1.msra.mxu0 %v178
    %503 = vmatprep.subr.mxu0 0.0
    %504 = vmatpush1.msra.mxu0 %v179
    %505 = vmatprep.subr.mxu0 0.0
    %506 = vmatpush1.msra.mxu0 %v180
    %507 = vmatprep.subr.mxu0 0.0
    %508 = vmatpush1.msra.mxu0 %v181
    %509 = vmatprep.subr.mxu0 0.0
    %510 = vmatpush1.msra.mxu0 %v182
    %511 = vmatprep.subr.mxu0 0.0
    %512 = vmatpush1.msra.mxu0 %v183
    %513 = vmatprep.subr.mxu0 0.0
    %514 = vmatpush1.msra.mxu0 0.0
    %515 = vmatprep.subr.mxu0 0.0
    %516 = vmatpush1.msra.mxu0 0.0
    %517 = vmatprep.subr.mxu0 0.0
    %518 = vmatpush1.msra.mxu0 0.0
    %519 = vmatprep.subr.mxu0 0.0
    %520 = vmatpush1.msra.mxu0 0.0
    %521 = vmatprep.subr.mxu0 0.0
    %522 = vmatpush1.msra.mxu0 0.0
    %523 = vmatprep.subr.mxu0 0.0
    %524 = vmatpush1.msra.mxu0 0.0
    %525 = vmatprep.subr.mxu0 0.0
    %526 = vmatpush1.msra.mxu0 0.0
    %527 = vmatprep.subr.mxu0 0.0
    %528 = vmatpush1.msra.mxu0 0.0
    %529 = vmatprep.subr.mxu0 0.0
    %530 = vmatpush1.msra.mxu0 0.0
    %531 = vmatprep.subr.mxu0 0.0
    %532 = vmatpush1.msra.mxu0 0.0
    %533 = vmatprep.subr.mxu0 0.0
    %534 = vmatpush1.msra.mxu0 0.0
    %535 = vmatprep.subr.mxu0 0.0
    %536 = vmatpush1.msra.mxu0 0.0
    %537 = vmatprep.subr.mxu0 0.0
    %538 = vmatpush1.msra.mxu0 0.0
    %539 = vmatprep.subr.mxu0 0.0
    %540 = vmatpush1.msra.mxu0 0.0
    %541 = vmatprep.subr.mxu0 0.0
    %542 = vmatpush1.msra.mxu0 0.0
    %543 = vmatprep.subr.mxu0 0.0
    %544 = vmatpush1.msra.mxu0 0.0
    %545 = vmatprep.mubr.f32.mxu0 0.0
    %546 = vmatmul.mubr.f32.gmra.mrb[0].mxu0 %v479
    %v547 = vpop.f32.mrb[0].mxu0
    %v548 = vadd.f32 %v284, %v547
    %v549 = vpop.f32.mrb[0].mxu0
    %550 = vmatprep.mubr.f32.mxu0 0.0
    %551 = vmatmul.mubr.f32.gmra.mrb[0].mxu0 %v480
    %v552 = vpop.f32.mrb[0].mxu0
    %v553 = vadd.f32 %v284, %v552
    %v554 = vpop.f32.mrb[0].mxu0
    %555 = vdwg.mxu0
    %v556 = vstv %s392
    %v557 = vmul.f32 %v556, %v390
    %v558 = vmul.f32 %v556, %v391
    %v559 = vstv %s393
    %v560 = vmul.f32 %v559, %v548
    %v561 = vmul.f32 %v559, %v553
    %v562 = vsub.f32 %v557, %v560
    %v563 = vsub.f32 %v558, %v561
    %v564 = vmax.f32 %v562, -1.0
    %v565 = vmax.f32 %v563, -1.0
    %v566 = vmin.f32 %v564, 1.0
    %v567 = vmin.f32 %v565, 1.0
    %v568 = vstv %s394
    %v569 = vmul.f32 %v568, %v566
    %v570 = vmul.f32 %v568, %v567
    %v571 = vstv %s395
    %v572 = vmul.f32 %v571, %v390
    %v573 = vmul.f32 %v571, %v391
    %v574 = vadd.f32 %v569, %v572
    %v575 = vadd.f32 %v570, %v573
    %s576 = scalar_lea.vmem [#allocation10], 16
    %v577 = vld [vmem:[%s576] sm:$0xff]
    %v578 = vld [vmem:[%s576 + $0x8] sm:$0xff]
    %v579 = vstv %s396
    %v580 = vmul.f32 %v579, %v577
    %v581 = vmul.f32 %v579, %v578
    %v582 = vadd.f32 %v574, %v580
    %v583 = vadd.f32 %v575, %v581
    %v584 = vmul.f32 %v582, %v144
    %v585 = vmul.f32 %v583, %v145
    %v586 = vadd.f32 %v148, %v584
    %v587 = vadd.f32 %v149, %v585
    %s588 = sld [smem:[#allocation2 + $0x11]]
    %s589 = sld [smem:[#allocation2 + $0x12]]
    %s590 = sld [smem:[#allocation2 + $0x13]]
    %s591 = sld [smem:[#allocation2 + $0x14]]
    %s592 = sld [smem:[#allocation2 + $0x15]]
    %593 = vmatprep.subr.mxu0 0.0
    %594 = vmatpush1.msra.mxu0 %v152
    %595 = vmatprep.subr.mxu0 0.0
    %596 = vmatpush1.msra.mxu0 %v153
    %597 = vmatprep.subr.mxu0 0.0
    %598 = vmatpush1.msra.mxu0 %v154
    %599 = vmatprep.subr.mxu0 0.0
    %600 = vmatpush1.msra.mxu0 %v155
    %601 = vmatprep.subr.mxu0 0.0
    %602 = vmatpush1.msra.mxu0 %v156
    %603 = vmatprep.subr.mxu0 0.0
    %604 = vmatpush1.msra.mxu0 %v157
    %605 = vmatprep.subr.mxu0 0.0
    %606 = vmatpush1.msra.mxu0 %v158
    %607 = vmatprep.subr.mxu0 0.0
    %608 = vmatpush1.msra.mxu0 %v159
    %609 = vmatprep.subr.mxu0 0.0
    %610 = vmatpush1.msra.mxu0 %v160
    %611 = vmatprep.subr.mxu0 0.0
    %612 = vmatpush1.msra.mxu0 %v161
    %613 = vmatprep.subr.mxu0 0.0
    %614 = vmatpush1.msra.mxu0 %v162
    %615 = vmatprep.subr.mxu0 0.0
    %616 = vmatpush1.msra.mxu0 %v163
    %617 = vmatprep.subr.mxu0 0.0
    %618 = vmatpush1.msra.mxu0 %v164
    %619 = vmatprep.subr.mxu0 0.0
    %620 = vmatpush1.msra.mxu0 %v165
    %621 = vmatprep.subr.mxu0 0.0
    %622 = vmatpush1.msra.mxu0 %v166
    %623 = vmatprep.subr.mxu0 0.0
    %624 = vmatpush1.msra.mxu0 %v167
    %625 = vmatprep.subr.mxu0 0.0
    %626 = vmatpush1.msra.mxu0 0.0
    %627 = vmatprep.subr.mxu0 0.0
    %628 = vmatpush1.msra.mxu0 0.0
    %629 = vmatprep.subr.mxu0 0.0
    %630 = vmatpush1.msra.mxu0 0.0
    %631 = vmatprep.subr.mxu0 0.0
    %632 = vmatpush1.msra.mxu0 0.0
    %633 = vmatprep.subr.mxu0 0.0
    %634 = vmatpush1.msra.mxu0 0.0
    %635 = vmatprep.subr.mxu0 0.0
    %636 = vmatpush1.msra.mxu0 0.0
    %637 = vmatprep.subr.mxu0 0.0
    %638 = vmatpush1.msra.mxu0 0.0
    %639 = vmatprep.subr.mxu0 0.0
    %640 = vmatpush1.msra.mxu0 0.0
    %641 = vmatprep.subr.mxu0 0.0
    %642 = vmatpush1.msra.mxu0 0.0
    %643 = vmatprep.subr.mxu0 0.0
    %644 = vmatpush1.msra.mxu0 0.0
    %645 = vmatprep.subr.mxu0 0.0
    %646 = vmatpush1.msra.mxu0 0.0
    %647 = vmatprep.subr.mxu0 0.0
    %648 = vmatpush1.msra.mxu0 0.0
    %649 = vmatprep.subr.mxu0 0.0
    %650 = vmatpush1.msra.mxu0 0.0
    %651 = vmatprep.subr.mxu0 0.0
    %652 = vmatpush1.msra.mxu0 0.0
    %653 = vmatprep.subr.mxu0 0.0
    %654 = vmatpush1.msra.mxu0 0.0
    %655 = vmatprep.subr.mxu0 0.0
    %656 = vmatpush1.msra.mxu0 0.0
    %657 = vmatprep.mubr.f32.mxu0 0.0
    %658 = vmatmul.mubr.f32.gmra.mrb[0].mxu0 %v586
    %v659 = vpop.f32.mrb[0].mxu0
    %v660 = vadd.f32 %v150, %v659
    %v661 = vpop.f32.mrb[0].mxu0
    %662 = vmatprep.mubr.f32.mxu0 0.0
    %663 = vmatmul.mubr.f32.gmra.mrb[0].mxu0 %v587
    %v664 = vpop.f32.mrb[0].mxu0
    %v665 = vadd.f32 %v151, %v664
    %v666 = vpop.f32.mrb[0].mxu0
    %667 = vdwg.mxu0
    %v668 = vld [vmem:[#allocation13 + $0x2] sm:$0x1]
    %v669 = vlaneseq
    %v670 = vshrl.u32 %v669, 7
    %v671 = vsub.s32 0, %v670
    %v672 = vrot.slane %v668, %v671
    %v673 = vadd.f32 %v660, %v672
    %v674 = vadd.f32 %v665, %v672
    %v675 = vtanh.pop %v673
    %v676 = vtanh.pop %v674
    %677 = vmatprep.subr.mxu0 0.0
    %678 = vmatpush1.msra.mxu0 %v168
    %679 = vmatprep.subr.mxu0 0.0
    %680 = vmatpush1.msra.mxu0 %v169
    %681 = vmatprep.subr.mxu0 0.0
    %682 = vmatpush1.msra.mxu0 %v170
    %683 = vmatprep.subr.mxu0 0.0
    %684 = vmatpush1.msra.mxu0 %v171
    %685 = vmatprep.subr.mxu0 0.0
    %686 = vmatpush1.msra.mxu0 %v172
    %687 = vmatprep.subr.mxu0 0.0
    %688 = vmatpush1.msra.mxu0 %v173
    %689 = vmatprep.subr.mxu0 0.0
    %690 = vmatpush1.msra.mxu0 %v174
    %691 = vmatprep.subr.mxu0 0.0
    %692 = vmatpush1.msra.mxu0 %v175
    %693 = vmatprep.subr.mxu0 0.0
    %694 = vmatpush1.msra.mxu0 %v176
    %695 = vmatprep.subr.mxu0 0.0
    %696 = vmatpush1.msra.mxu0 %v177
    %697 = vmatprep.subr.mxu0 0.0
    %698 = vmatpush1.msra.mxu0 %v178
    %699 = vmatprep.subr.mxu0 0.0
    %700 = vmatpush1.msra.mxu0 %v179
    %701 = vmatprep.subr.mxu0 0.0
    %702 = vmatpush1.msra.mxu0 %v180
    %703 = vmatprep.subr.mxu0 0.0
    %704 = vmatpush1.msra.mxu0 %v181
    %705 = vmatprep.subr.mxu0 0.0
    %706 = vmatpush1.msra.mxu0 %v182
    %707 = vmatprep.subr.mxu0 0.0
    %708 = vmatpush1.msra.mxu0 %v183
    %709 = vmatprep.subr.mxu0 0.0
    %710 = vmatpush1.msra.mxu0 0.0
    %711 = vmatprep.subr.mxu0 0.0
    %712 = vmatpush1.msra.mxu0 0.0
    %713 = vmatprep.subr.mxu0 0.0
    %714 = vmatpush1.msra.mxu0 0.0
    %715 = vmatprep.subr.mxu0 0.0
    %716 = vmatpush1.msra.mxu0 0.0
    %717 = vmatprep.subr.mxu0 0.0
    %718 = vmatpush1.msra.mxu0 0.0
    %719 = vmatprep.subr.mxu0 0.0
    %720 = vmatpush1.msra.mxu0 0.0
    %721 = vmatprep.subr.mxu0 0.0
    %722 = vmatpush1.msra.mxu0 0.0
    %723 = vmatprep.subr.mxu0 0.0
    %724 = vmatpush1.msra.mxu0 0.0
    %725 = vmatprep.subr.mxu0 0.0
    %726 = vmatpush1.msra.mxu0 0.0
    %727 = vmatprep.subr.mxu0 0.0
    %728 = vmatpush1.msra.mxu0 0.0
    %729 = vmatprep.subr.mxu0 0.0
    %730 = vmatpush1.msra.mxu0 0.0
    %731 = vmatprep.subr.mxu0 0.0
    %732 = vmatpush1.msra.mxu0 0.0
    %733 = vmatprep.subr.mxu0 0.0
    %734 = vmatpush1.msra.mxu0 0.0
    %735 = vmatprep.subr.mxu0 0.0
    %736 = vmatpush1.msra.mxu0 0.0
    %737 = vmatprep.subr.mxu0 0.0
    %738 = vmatpush1.msra.mxu0 0.0
    %739 = vmatprep.subr.mxu0 0.0
    %740 = vmatpush1.msra.mxu0 0.0
    %741 = vmatprep.mubr.f32.mxu0 0.0
    %742 = vmatmul.mubr.f32.gmra.mrb[0].mxu0 %v675
    %v743 = vpop.f32.mrb[0].mxu0
    %v744 = vadd.f32 %v284, %v743
    %v745 = vpop.f32.mrb[0].mxu0
    %746 = vmatprep.mubr.f32.mxu0 0.0
    %747 = vmatmul.mubr.f32.gmra.mrb[0].mxu0 %v676
    %v748 = vpop.f32.mrb[0].mxu0
    %v749 = vadd.f32 %v284, %v748
    %v750 = vpop.f32.mrb[0].mxu0
    %751 = vdwg.mxu0
    %v752 = vstv %s588
    %v753 = vmul.f32 %v752, %v586
    %v754 = vmul.f32 %v752, %v587
    %v755 = vstv %s589
    %v756 = vmul.f32 %v755, %v744
    %v757 = vmul.f32 %v755, %v749
    %v758 = vsub.f32 %v753, %v756
    %v759 = vsub.f32 %v754, %v757
    %v760 = vmax.f32 %v758, -1.0
    %v761 = vmax.f32 %v759, -1.0
    %v762 = vmin.f32 %v760, 1.0
    %v763 = vmin.f32 %v761, 1.0
    %v764 = vstv %s590
    %v765 = vmul.f32 %v764, %v762
    %v766 = vmul.f32 %v764, %v763
    %v767 = vstv %s591
    %v768 = vmul.f32 %v767, %v586
    %v769 = vmul.f32 %v767, %v587
    %v770 = vadd.f32 %v765, %v768
    %v771 = vadd.f32 %v766, %v769
    %s772 = scalar_lea.vmem [#allocation10], 32
    %v773 = vld [vmem:[%s772] sm:$0xff]
    %v774 = vld [vmem:[%s772 + $0x8] sm:$0xff]
    %v775 = vstv %s592
    %v776 = vmul.f32 %v775, %v773
    %v777 = vmul.f32 %v775, %v774
    %v778 = vadd.f32 %v770, %v776
    %v779 = vadd.f32 %v771, %v777
    %v780 = vmul.f32 %v778, %v144
    %v781 = vmul.f32 %v779, %v145
    %v782 = vadd.f32 %v148, %v780
    %v783 = vadd.f32 %v149, %v781
    %s784 = sld [smem:[#allocation2 + $0x19]]
    %s785 = sld [smem:[#allocation2 + $0x1a]]
    %s786 = sld [smem:[#allocation2 + $0x1b]]
    %s787 = sld [smem:[#allocation2 + $0x1c]]
    %s788 = sld [smem:[#allocation2 + $0x1d]]
    %789 = vmatprep.subr.mxu0 0.0
    %790 = vmatpush1.msra.mxu0 %v152
    %791 = vmatprep.subr.mxu0 0.0
    %792 = vmatpush1.msra.mxu0 %v153
    %793 = vmatprep.subr.mxu0 0.0
    %794 = vmatpush1.msra.mxu0 %v154
    %795 = vmatprep.subr.mxu0 0.0
    %796 = vmatpush1.msra.mxu0 %v155
    %797 = vmatprep.subr.mxu0 0.0
    %798 = vmatpush1.msra.mxu0 %v156
    %799 = vmatprep.subr.mxu0 0.0
    %800 = vmatpush1.msra.mxu0 %v157
    %801 = vmatprep.subr.mxu0 0.0
    %802 = vmatpush1.msra.mxu0 %v158
    %803 = vmatprep.subr.mxu0 0.0
    %804 = vmatpush1.msra.mxu0 %v159
    %805 = vmatprep.subr.mxu0 0.0
    %806 = vmatpush1.msra.mxu0 %v160
    %807 = vmatprep.subr.mxu0 0.0
    %808 = vmatpush1.msra.mxu0 %v161
    %809 = vmatprep.subr.mxu0 0.0
    %810 = vmatpush1.msra.mxu0 %v162
    %811 = vmatprep.subr.mxu0 0.0
    %812 = vmatpush1.msra.mxu0 %v163
    %813 = vmatprep.subr.mxu0 0.0
    %814 = vmatpush1.msra.mxu0 %v164
    %815 = vmatprep.subr.mxu0 0.0
    %816 = vmatpush1.msra.mxu0 %v165
    %817 = vmatprep.subr.mxu0 0.0
    %818 = vmatpush1.msra.mxu0 %v166
    %819 = vmatprep.subr.mxu0 0.0
    %820 = vmatpush1.msra.mxu0 %v167
    %821 = vmatprep.subr.mxu0 0.0
    %822 = vmatpush1.msra.mxu0 0.0
    %823 = vmatprep.subr.mxu0 0.0
    %824 = vmatpush1.msra.mxu0 0.0
    %825 = vmatprep.subr.mxu0 0.0
    %826 = vmatpush1.msra.mxu0 0.0
    %827 = vmatprep.subr.mxu0 0.0
    %828 = vmatpush1.msra.mxu0 0.0
    %829 = vmatprep.subr.mxu0 0.0
    %830 = vmatpush1.msra.mxu0 0.0
    %831 = vmatprep.subr.mxu0 0.0
    %832 = vmatpush1.msra.mxu0 0.0
    %833 = vmatprep.subr.mxu0 0.0
    %834 = vmatpush1.msra.mxu0 0.0
    %835 = vmatprep.subr.mxu0 0.0
    %836 = vmatpush1.msra.mxu0 0.0
    %837 = vmatprep.subr.mxu0 0.0
    %838 = vmatpush1.msra.mxu0 0.0
    %839 = vmatprep.subr.mxu0 0.0
    %840 = vmatpush1.msra.mxu0 0.0
    %841 = vmatprep.subr.mxu0 0.0
    %842 = vmatpush1.msra.mxu0 0.0
    %843 = vmatprep.subr.mxu0 0.0
    %844 = vmatpush1.msra.mxu0 0.0
    %845 = vmatprep.subr.mxu0 0.0
    %846 = vmatpush1.msra.mxu0 0.0
    %847 = vmatprep.subr.mxu0 0.0
    %848 = vmatpush1.msra.mxu0 0.0
    %849 = vmatprep.subr.mxu0 0.0
    %850 = vmatpush1.msra.mxu0 0.0
    %851 = vmatprep.subr.mxu0 0.0
    %852 = vmatpush1.msra.mxu0 0.0
    %853 = vmatprep.mubr.f32.mxu0 0.0
    %854 = vmatmul.mubr.f32.gmra.mrb[0].mxu0 %v782
    %v855 = vpop.f32.mrb[0].mxu0
    %v856 = vadd.f32 %v150, %v855
    %v857 = vpop.f32.mrb[0].mxu0
    %858 = vmatprep.mubr.f32.mxu0 0.0
    %859 = vmatmul.mubr.f32.gmra.mrb[0].mxu0 %v783
    %v860 = vpop.f32.mrb[0].mxu0
    %v861 = vadd.f32 %v151, %v860
    %v862 = vpop.f32.mrb[0].mxu0
    %863 = vdwg.mxu0
    %v864 = vld [vmem:[#allocation13 + $0x3] sm:$0x1]
    %v865 = vlaneseq
    %v866 = vshrl.u32 %v865, 7
    %v867 = vsub.s32 0, %v866
    %v868 = vrot.slane %v864, %v867
    %v869 = vadd.f32 %v856, %v868
    %v870 = vadd.f32 %v861, %v868
    %v871 = vtanh.pop %v869
    %v872 = vtanh.pop %v870
    %873 = vmatprep.subr.mxu0 0.0
    %874 = vmatpush1.msra.mxu0 %v168
    %875 = vmatprep.subr.mxu0 0.0
    %876 = vmatpush1.msra.mxu0 %v169
    %877 = vmatprep.subr.mxu0 0.0
    %878 = vmatpush1.msra.mxu0 %v170
    %879 = vmatprep.subr.mxu0 0.0
    %880 = vmatpush1.msra.mxu0 %v171
    %881 = vmatprep.subr.mxu0 0.0
    %882 = vmatpush1.msra.mxu0 %v172
    %883 = vmatprep.subr.mxu0 0.0
    %884 = vmatpush1.msra.mxu0 %v173
    %885 = vmatprep.subr.mxu0 0.0
    %886 = vmatpush1.msra.mxu0 %v174
    %887 = vmatprep.subr.mxu0 0.0
    %888 = vmatpush1.msra.mxu0 %v175
    %889 = vmatprep.subr.mxu0 0.0
    %890 = vmatpush1.msra.mxu0 %v176
    %891 = vmatprep.subr.mxu0 0.0
    %892 = vmatpush1.msra.mxu0 %v177
    %893 = vmatprep.subr.mxu0 0.0
    %894 = vmatpush1.msra.mxu0 %v178
    %895 = vmatprep.subr.mxu0 0.0
    %896 = vmatpush1.msra.mxu0 %v179
    %897 = vmatprep.subr.mxu0 0.0
    %898 = vmatpush1.msra.mxu0 %v180
    %899 = vmatprep.subr.mxu0 0.0
    %900 = vmatpush1.msra.mxu0 %v181
    %901 = vmatprep.subr.mxu0 0.0
    %902 = vmatpush1.msra.mxu0 %v182
    %903 = vmatprep.subr.mxu0 0.0
    %904 = vmatpush1.msra.mxu0 %v183
    %905 = vmatprep.subr.mxu0 0.0
    %906 = vmatpush1.msra.mxu0 0.0
    %907 = vmatprep.subr.mxu0 0.0
    %908 = vmatpush1.msra.mxu0 0.0
    %909 = vmatprep.subr.mxu0 0.0
    %910 = vmatpush1.msra.mxu0 0.0
    %911 = vmatprep.subr.mxu0 0.0
    %912 = vmatpush1.msra.mxu0 0.0
    %913 = vmatprep.subr.mxu0 0.0
    %914 = vmatpush1.msra.mxu0 0.0
    %915 = vmatprep.subr.mxu0 0.0
    %916 = vmatpush1.msra.mxu0 0.0
    %917 = vmatprep.subr.mxu0 0.0
    %918 = vmatpush1.msra.mxu0 0.0
    %919 = vmatprep.subr.mxu0 0.0
    %920 = vmatpush1.msra.mxu0 0.0
    %921 = vmatprep.subr.mxu0 0.0
    %922 = vmatpush1.msra.mxu0 0.0
    %923 = vmatprep.subr.mxu0 0.0
    %924 = vmatpush1.msra.mxu0 0.0
    %925 = vmatprep.subr.mxu0 0.0
    %926 = vmatpush1.msra.mxu0 0.0
    %927 = vmatprep.subr.mxu0 0.0
    %928 = vmatpush1.msra.mxu0 0.0
    %929 = vmatprep.subr.mxu0 0.0
    %930 = vmatpush1.msra.mxu0 0.0
    %931 = vmatprep.subr.mxu0 0.0
    %932 = vmatpush1.msra.mxu0 0.0
    %933 = vmatprep.subr.mxu0 0.0
    %934 = vmatpush1.msra.mxu0 0.0
    %935 = vmatprep.subr.mxu0 0.0
    %936 = vmatpush1.msra.mxu0 0.0
    %937 = vmatprep.mubr.f32.mxu0 0.0
    %938 = vmatmul.mubr.f32.gmra.mrb[0].mxu0 %v871
    %v939 = vpop.f32.mrb[0].mxu0
    %v940 = vadd.f32 %v284, %v939
    %v941 = vpop.f32.mrb[0].mxu0
    %942 = vmatprep.mubr.f32.mxu0 0.0
    %943 = vmatmul.mubr.f32.gmra.mrb[0].mxu0 %v872
    %v944 = vpop.f32.mrb[0].mxu0
    %v945 = vadd.f32 %v284, %v944
    %v946 = vpop.f32.mrb[0].mxu0
    %947 = vdwg.mxu0
    %v948 = vstv %s784
    %v949 = vmul.f32 %v948, %v782
    %v950 = vmul.f32 %v948, %v783
    %v951 = vstv %s785
    %v952 = vmul.f32 %v951, %v940
    %v953 = vmul.f32 %v951, %v945
    %v954 = vsub.f32 %v949, %v952
    %v955 = vsub.f32 %v950, %v953
    %v956 = vmax.f32 %v954, -1.0
    %v957 = vmax.f32 %v955, -1.0
    %v958 = vmin.f32 %v956, 1.0
    %v959 = vmin.f32 %v957, 1.0
    %v960 = vstv %s786
    %v961 = vmul.f32 %v960, %v958
    %v962 = vmul.f32 %v960, %v959
    %v963 = vstv %s787
    %v964 = vmul.f32 %v963, %v782
    %v965 = vmul.f32 %v963, %v783
    %v966 = vadd.f32 %v961, %v964
    %v967 = vadd.f32 %v962, %v965
    %s968 = scalar_lea.vmem [#allocation10], 48
    %v969 = vld [vmem:[%s968] sm:$0xff]
    %v970 = vld [vmem:[%s968 + $0x8] sm:$0xff]
    %v971 = vstv %s788
    %v972 = vmul.f32 %v971, %v969
    %v973 = vmul.f32 %v971, %v970
    %v974 = vadd.f32 %v966, %v972
    %v975 = vadd.f32 %v967, %v973
    %v976 = vmul.f32 %v974, %v144
    %v977 = vmul.f32 %v975, %v145
    %v978 = vadd.f32 %v148, %v976
    %v979 = vadd.f32 %v149, %v977
    %s980 = sld [smem:[#allocation2 + $0x21]]
    %s981 = sld [smem:[#allocation2 + $0x22]]
    %s982 = sld [smem:[#allocation2 + $0x23]]
    %s983 = sld [smem:[#allocation2 + $0x24]]
    %s984 = sld [smem:[#allocation2 + $0x25]]
    %985 = vmatprep.subr.mxu0 0.0
    %986 = vmatpush1.msra.mxu0 %v152
    %987 = vmatprep.subr.mxu0 0.0
    %988 = vmatpush1.msra.mxu0 %v153
    %989 = vmatprep.subr.mxu0 0.0
    %990 = vmatpush1.msra.mxu0 %v154
    %991 = vmatprep.subr.mxu0 0.0
    %992 = vmatpush1.msra.mxu0 %v155
    %993 = vmatprep.subr.mxu0 0.0
    %994 = vmatpush1.msra.mxu0 %v156
    %995 = vmatprep.subr.mxu0 0.0
    %996 = vmatpush1.msra.mxu0 %v157
    %997 = vmatprep.subr.mxu0 0.0
    %998 = vmatpush1.msra.mxu0 %v158
    %999 = vmatprep.subr.mxu0 0.0
    %1000 = vmatpush1.msra.mxu0 %v159
    %1001 = vmatprep.subr.mxu0 0.0
    %1002 = vmatpush1.msra.mxu0 %v160
    %1003 = vmatprep.subr.mxu0 0.0
    %1004 = vmatpush1.msra.mxu0 %v161
    %1005 = vmatprep.subr.mxu0 0.0
    %1006 = vmatpush1.msra.mxu0 %v162
    %1007 = vmatprep.subr.mxu0 0.0
    %1008 = vmatpush1.msra.mxu0 %v163
    %1009 = vmatprep.subr.mxu0 0.0
    %1010 = vmatpush1.msra.mxu0 %v164
    %1011 = vmatprep.subr.mxu0 0.0
    %1012 = vmatpush1.msra.mxu0 %v165
    %1013 = vmatprep.subr.mxu0 0.0
    %1014 = vmatpush1.msra.mxu0 %v166
    %1015 = vmatprep.subr.mxu0 0.0
    %1016 = vmatpush1.msra.mxu0 %v167
    %1017 = vmatprep.subr.mxu0 0.0
    %1018 = vmatpush1.msra.mxu0 0.0
    %1019 = vmatprep.subr.mxu0 0.0
    %1020 = vmatpush1.msra.mxu0 0.0
    %1021 = vmatprep.subr.mxu0 0.0
    %1022 = vmatpush1.msra.mxu0 0.0
    %1023 = vmatprep.subr.mxu0 0.0
    %1024 = vmatpush1.msra.mxu0 0.0
    %1025 = vmatprep.subr.mxu0 0.0
    %1026 = vmatpush1.msra.mxu0 0.0
    %1027 = vmatprep.subr.mxu0 0.0
    %1028 = vmatpush1.msra.mxu0 0.0
    %1029 = vmatprep.subr.mxu0 0.0
    %1030 = vmatpush1.msra.mxu0 0.0
    %1031 = vmatprep.subr.mxu0 0.0
    %1032 = vmatpush1.msra.mxu0 0.0
    %1033 = vmatprep.subr.mxu0 0.0
    %1034 = vmatpush1.msra.mxu0 0.0
    %1035 = vmatprep.subr.mxu0 0.0
    %1036 = vmatpush1.msra.mxu0 0.0
    %1037 = vmatprep.subr.mxu0 0.0
    %1038 = vmatpush1.msra.mxu0 0.0
    %1039 = vmatprep.subr.mxu0 0.0
    %1040 = vmatpush1.msra.mxu0 0.0
    %1041 = vmatprep.subr.mxu0 0.0
    %1042 = vmatpush1.msra.mxu0 0.0
    %1043 = vmatprep.subr.mxu0 0.0
    %1044 = vmatpush1.msra.mxu0 0.0
    %1045 = vmatprep.subr.mxu0 0.0
    %1046 = vmatpush1.msra.mxu0 0.0
    %1047 = vmatprep.subr.mxu0 0.0
    %1048 = vmatpush1.msra.mxu0 0.0
    %1049 = vmatprep.mubr.f32.mxu0 0.0
    %1050 = vmatmul.mubr.f32.gmra.mrb[0].mxu0 %v978
    %v1051 = vpop.f32.mrb[0].mxu0
    %v1052 = vadd.f32 %v150, %v1051
    %v1053 = vpop.f32.mrb[0].mxu0
    %1054 = vmatprep.mubr.f32.mxu0 0.0
    %1055 = vmatmul.mubr.f32.gmra.mrb[0].mxu0 %v979
    %v1056 = vpop.f32.mrb[0].mxu0
    %v1057 = vadd.f32 %v151, %v1056
    %v1058 = vpop.f32.mrb[0].mxu0
    %1059 = vdwg.mxu0
    %v1060 = vld [vmem:[#allocation13 + $0x4] sm:$0x1]
    %v1061 = vlaneseq
    %v1062 = vshrl.u32 %v1061, 7
    %v1063 = vsub.s32 0, %v1062
    %v1064 = vrot.slane %v1060, %v1063
    %v1065 = vadd.f32 %v1052, %v1064
    %v1066 = vadd.f32 %v1057, %v1064
    %v1067 = vtanh.pop %v1065
    %v1068 = vtanh.pop %v1066
    %1069 = vmatprep.subr.mxu0 0.0
    %1070 = vmatpush1.msra.mxu0 %v168
    %1071 = vmatprep.subr.mxu0 0.0
    %1072 = vmatpush1.msra.mxu0 %v169
    %1073 = vmatprep.subr.mxu0 0.0
    %1074 = vmatpush1.msra.mxu0 %v170
    %1075 = vmatprep.subr.mxu0 0.0
    %1076 = vmatpush1.msra.mxu0 %v171
    %1077 = vmatprep.subr.mxu0 0.0
    %1078 = vmatpush1.msra.mxu0 %v172
    %1079 = vmatprep.subr.mxu0 0.0
    %1080 = vmatpush1.msra.mxu0 %v173
    %1081 = vmatprep.subr.mxu0 0.0
    %1082 = vmatpush1.msra.mxu0 %v174
    %1083 = vmatprep.subr.mxu0 0.0
    %1084 = vmatpush1.msra.mxu0 %v175
    %1085 = vmatprep.subr.mxu0 0.0
    %1086 = vmatpush1.msra.mxu0 %v176
    %1087 = vmatprep.subr.mxu0 0.0
    %1088 = vmatpush1.msra.mxu0 %v177
    %1089 = vmatprep.subr.mxu0 0.0
    %1090 = vmatpush1.msra.mxu0 %v178
    %1091 = vmatprep.subr.mxu0 0.0
    %1092 = vmatpush1.msra.mxu0 %v179
    %1093 = vmatprep.subr.mxu0 0.0
    %1094 = vmatpush1.msra.mxu0 %v180
    %1095 = vmatprep.subr.mxu0 0.0
    %1096 = vmatpush1.msra.mxu0 %v181
    %1097 = vmatprep.subr.mxu0 0.0
    %1098 = vmatpush1.msra.mxu0 %v182
    %1099 = vmatprep.subr.mxu0 0.0
    %1100 = vmatpush1.msra.mxu0 %v183
    %1101 = vmatprep.subr.mxu0 0.0
    %1102 = vmatpush1.msra.mxu0 0.0
    %1103 = vmatprep.subr.mxu0 0.0
    %1104 = vmatpush1.msra.mxu0 0.0
    %1105 = vmatprep.subr.mxu0 0.0
    %1106 = vmatpush1.msra.mxu0 0.0
    %1107 = vmatprep.subr.mxu0 0.0
    %1108 = vmatpush1.msra.mxu0 0.0
    %1109 = vmatprep.subr.mxu0 0.0
    %1110 = vmatpush1.msra.mxu0 0.0
    %1111 = vmatprep.subr.mxu0 0.0
    %1112 = vmatpush1.msra.mxu0 0.0
    %1113 = vmatprep.subr.mxu0 0.0
    %1114 = vmatpush1.msra.mxu0 0.0
    %1115 = vmatprep.subr.mxu0 0.0
    %1116 = vmatpush1.msra.mxu0 0.0
    %1117 = vmatprep.subr.mxu0 0.0
    %1118 = vmatpush1.msra.mxu0 0.0
    %1119 = vmatprep.subr.mxu0 0.0
    %1120 = vmatpush1.msra.mxu0 0.0
    %1121 = vmatprep.subr.mxu0 0.0
    %1122 = vmatpush1.msra.mxu0 0.0
    %1123 = vmatprep.subr.mxu0 0.0
    %1124 = vmatpush1.msra.mxu0 0.0
    %1125 = vmatprep.subr.mxu0 0.0
    %1126 = vmatpush1.msra.mxu0 0.0
    %1127 = vmatprep.subr.mxu0 0.0
    %1128 = vmatpush1.msra.mxu0 0.0
    %1129 = vmatprep.subr.mxu0 0.0
    %1130 = vmatpush1.msra.mxu0 0.0
    %1131 = vmatprep.subr.mxu0 0.0
    %1132 = vmatpush1.msra.mxu0 0.0
    %1133 = vmatprep.mubr.f32.mxu0 0.0
    %1134 = vmatmul.mubr.f32.gmra.mrb[0].mxu0 %v1067
    %v1135 = vpop.f32.mrb[0].mxu0
    %v1136 = vadd.f32 %v284, %v1135
    %v1137 = vpop.f32.mrb[0].mxu0
    %1138 = vmatprep.mubr.f32.mxu0 0.0
    %1139 = vmatmul.mubr.f32.gmra.mrb[0].mxu0 %v1068
    %v1140 = vpop.f32.mrb[0].mxu0
    %v1141 = vadd.f32 %v284, %v1140
    %v1142 = vpop.f32.mrb[0].mxu0
    %1143 = vdwg.mxu0
    %v1144 = vstv %s980
    %v1145 = vmul.f32 %v1144, %v978
    %v1146 = vmul.f32 %v1144, %v979
    %v1147 = vstv %s981
    %v1148 = vmul.f32 %v1147, %v1136
    %v1149 = vmul.f32 %v1147, %v1141
    %v1150 = vsub.f32 %v1145, %v1148
    %v1151 = vsub.f32 %v1146, %v1149
    %v1152 = vmax.f32 %v1150, -1.0
    %v1153 = vmax.f32 %v1151, -1.0
    %v1154 = vmin.f32 %v1152, 1.0
    %v1155 = vmin.f32 %v1153, 1.0
    %v1156 = vstv %s982
    %v1157 = vmul.f32 %v1156, %v1154
    %v1158 = vmul.f32 %v1156, %v1155
    %v1159 = vstv %s983
    %v1160 = vmul.f32 %v1159, %v978
    %v1161 = vmul.f32 %v1159, %v979
    %v1162 = vadd.f32 %v1157, %v1160
    %v1163 = vadd.f32 %v1158, %v1161
    %s1164 = scalar_lea.vmem [#allocation10], 64
    %v1165 = vld [vmem:[%s1164] sm:$0xff]
    %v1166 = vld [vmem:[%s1164 + $0x8] sm:$0xff]
    %v1167 = vstv %s984
    %v1168 = vmul.f32 %v1167, %v1165
    %v1169 = vmul.f32 %v1167, %v1166
    %v1170 = vadd.f32 %v1162, %v1168
    %v1171 = vadd.f32 %v1163, %v1169
    %v1172 = vmul.f32 %v1170, %v144
    %v1173 = vmul.f32 %v1171, %v145
    %v1174 = vadd.f32 %v148, %v1172
    %v1175 = vadd.f32 %v149, %v1173
    %s1176 = sld [smem:[#allocation2 + $0x29]]
    %s1177 = sld [smem:[#allocation2 + $0x2a]]
    %s1178 = sld [smem:[#allocation2 + $0x2b]]
    %s1179 = sld [smem:[#allocation2 + $0x2c]]
    %s1180 = sld [smem:[#allocation2 + $0x2d]]
    %1181 = vmatprep.subr.mxu0 0.0
    %1182 = vmatpush1.msra.mxu0 %v152
    %1183 = vmatprep.subr.mxu0 0.0
    %1184 = vmatpush1.msra.mxu0 %v153
    %1185 = vmatprep.subr.mxu0 0.0
    %1186 = vmatpush1.msra.mxu0 %v154
    %1187 = vmatprep.subr.mxu0 0.0
    %1188 = vmatpush1.msra.mxu0 %v155
    %1189 = vmatprep.subr.mxu0 0.0
    %1190 = vmatpush1.msra.mxu0 %v156
    %1191 = vmatprep.subr.mxu0 0.0
    %1192 = vmatpush1.msra.mxu0 %v157
    %1193 = vmatprep.subr.mxu0 0.0
    %1194 = vmatpush1.msra.mxu0 %v158
    %1195 = vmatprep.subr.mxu0 0.0
    %1196 = vmatpush1.msra.mxu0 %v159
    %1197 = vmatprep.subr.mxu0 0.0
    %1198 = vmatpush1.msra.mxu0 %v160
    %1199 = vmatprep.subr.mxu0 0.0
    %1200 = vmatpush1.msra.mxu0 %v161
    %1201 = vmatprep.subr.mxu0 0.0
    %1202 = vmatpush1.msra.mxu0 %v162
    %1203 = vmatprep.subr.mxu0 0.0
    %1204 = vmatpush1.msra.mxu0 %v163
    %1205 = vmatprep.subr.mxu0 0.0
    %1206 = vmatpush1.msra.mxu0 %v164
    %1207 = vmatprep.subr.mxu0 0.0
    %1208 = vmatpush1.msra.mxu0 %v165
    %1209 = vmatprep.subr.mxu0 0.0
    %1210 = vmatpush1.msra.mxu0 %v166
    %1211 = vmatprep.subr.mxu0 0.0
    %1212 = vmatpush1.msra.mxu0 %v167
    %1213 = vmatprep.subr.mxu0 0.0
    %1214 = vmatpush1.msra.mxu0 0.0
    %1215 = vmatprep.subr.mxu0 0.0
    %1216 = vmatpush1.msra.mxu0 0.0
    %1217 = vmatprep.subr.mxu0 0.0
    %1218 = vmatpush1.msra.mxu0 0.0
    %1219 = vmatprep.subr.mxu0 0.0
    %1220 = vmatpush1.msra.mxu0 0.0
    %1221 = vmatprep.subr.mxu0 0.0
    %1222 = vmatpush1.msra.mxu0 0.0
    %1223 = vmatprep.subr.mxu0 0.0
    %1224 = vmatpush1.msra.mxu0 0.0
    %1225 = vmatprep.subr.mxu0 0.0
    %1226 = vmatpush1.msra.mxu0 0.0
    %1227 = vmatprep.subr.mxu0 0.0
    %1228 = vmatpush1.msra.mxu0 0.0
    %1229 = vmatprep.subr.mxu0 0.0
    %1230 = vmatpush1.msra.mxu0 0.0
    %1231 = vmatprep.subr.mxu0 0.0
    %1232 = vmatpush1.msra.mxu0 0.0
    %1233 = vmatprep.subr.mxu0 0.0
    %1234 = vmatpush1.msra.mxu0 0.0
    %1235 = vmatprep.subr.mxu0 0.0
    %1236 = vmatpush1.msra.mxu0 0.0
    %1237 = vmatprep.subr.mxu0 0.0
    %1238 = vmatpush1.msra.mxu0 0.0
    %1239 = vmatprep.subr.mxu0 0.0
    %1240 = vmatpush1.msra.mxu0 0.0
    %1241 = vmatprep.subr.mxu0 0.0
    %1242 = vmatpush1.msra.mxu0 0.0
    %1243 = vmatprep.subr.mxu0 0.0
    %1244 = vmatpush1.msra.mxu0 0.0
    %1245 = vmatprep.mubr.f32.mxu0 0.0
    %1246 = vmatmul.mubr.f32.gmra.mrb[0].mxu0 %v1174
    %v1247 = vpop.f32.mrb[0].mxu0
    %v1248 = vadd.f32 %v150, %v1247
    %v1249 = vpop.f32.mrb[0].mxu0
    %1250 = vmatprep.mubr.f32.mxu0 0.0
    %1251 = vmatmul.mubr.f32.gmra.mrb[0].mxu0 %v1175
    %v1252 = vpop.f32.mrb[0].mxu0
    %v1253 = vadd.f32 %v151, %v1252
    %v1254 = vpop.f32.mrb[0].mxu0
    %1255 = vdwg.mxu0
    %v1256 = vld [vmem:[#allocation13 + $0x5] sm:$0x1]
    %v1257 = vlaneseq
    %v1258 = vshrl.u32 %v1257, 7
    %v1259 = vsub.s32 0, %v1258
    %v1260 = vrot.slane %v1256, %v1259
    %v1261 = vadd.f32 %v1248, %v1260
    %v1262 = vadd.f32 %v1253, %v1260
    %v1263 = vtanh.pop %v1261
    %v1264 = vtanh.pop %v1262
    %1265 = vmatprep.subr.mxu0 0.0
    %1266 = vmatpush1.msra.mxu0 %v168
    %1267 = vmatprep.subr.mxu0 0.0
    %1268 = vmatpush1.msra.mxu0 %v169
    %1269 = vmatprep.subr.mxu0 0.0
    %1270 = vmatpush1.msra.mxu0 %v170
    %1271 = vmatprep.subr.mxu0 0.0
    %1272 = vmatpush1.msra.mxu0 %v171
    %1273 = vmatprep.subr.mxu0 0.0
    %1274 = vmatpush1.msra.mxu0 %v172
    %1275 = vmatprep.subr.mxu0 0.0
    %1276 = vmatpush1.msra.mxu0 %v173
    %1277 = vmatprep.subr.mxu0 0.0
    %1278 = vmatpush1.msra.mxu0 %v174
    %1279 = vmatprep.subr.mxu0 0.0
    %1280 = vmatpush1.msra.mxu0 %v175
    %1281 = vmatprep.subr.mxu0 0.0
    %1282 = vmatpush1.msra.mxu0 %v176
    %1283 = vmatprep.subr.mxu0 0.0
    %1284 = vmatpush1.msra.mxu0 %v177
    %1285 = vmatprep.subr.mxu0 0.0
    %1286 = vmatpush1.msra.mxu0 %v178
    %1287 = vmatprep.subr.mxu0 0.0
    %1288 = vmatpush1.msra.mxu0 %v179
    %1289 = vmatprep.subr.mxu0 0.0
    %1290 = vmatpush1.msra.mxu0 %v180
    %1291 = vmatprep.subr.mxu0 0.0
    %1292 = vmatpush1.msra.mxu0 %v181
    %1293 = vmatprep.subr.mxu0 0.0
    %1294 = vmatpush1.msra.mxu0 %v182
    %1295 = vmatprep.subr.mxu0 0.0
    %1296 = vmatpush1.msra.mxu0 %v183
    %1297 = vmatprep.subr.mxu0 0.0
    %1298 = vmatpush1.msra.mxu0 0.0
    %1299 = vmatprep.subr.mxu0 0.0
    %1300 = vmatpush1.msra.mxu0 0.0
    %1301 = vmatprep.subr.mxu0 0.0
    %1302 = vmatpush1.msra.mxu0 0.0
    %1303 = vmatprep.subr.mxu0 0.0
    %1304 = vmatpush1.msra.mxu0 0.0
    %1305 = vmatprep.subr.mxu0 0.0
    %1306 = vmatpush1.msra.mxu0 0.0
    %1307 = vmatprep.subr.mxu0 0.0
    %1308 = vmatpush1.msra.mxu0 0.0
    %1309 = vmatprep.subr.mxu0 0.0
    %1310 = vmatpush1.msra.mxu0 0.0
    %1311 = vmatprep.subr.mxu0 0.0
    %1312 = vmatpush1.msra.mxu0 0.0
    %1313 = vmatprep.subr.mxu0 0.0
    %1314 = vmatpush1.msra.mxu0 0.0
    %1315 = vmatprep.subr.mxu0 0.0
    %1316 = vmatpush1.msra.mxu0 0.0
    %1317 = vmatprep.subr.mxu0 0.0
    %1318 = vmatpush1.msra.mxu0 0.0
    %1319 = vmatprep.subr.mxu0 0.0
    %1320 = vmatpush1.msra.mxu0 0.0
    %1321 = vmatprep.subr.mxu0 0.0
    %1322 = vmatpush1.msra.mxu0 0.0
    %1323 = vmatprep.subr.mxu0 0.0
    %1324 = vmatpush1.msra.mxu0 0.0
    %1325 = vmatprep.subr.mxu0 0.0
    %1326 = vmatpush1.msra.mxu0 0.0
    %1327 = vmatprep.subr.mxu0 0.0
    %1328 = vmatpush1.msra.mxu0 0.0
    %1329 = vmatprep.mubr.f32.mxu0 0.0
    %1330 = vmatmul.mubr.f32.gmra.mrb[0].mxu0 %v1263
    %v1331 = vpop.f32.mrb[0].mxu0
    %v1332 = vadd.f32 %v284, %v1331
    %v1333 = vpop.f32.mrb[0].mxu0
    %1334 = vmatprep.mubr.f32.mxu0 0.0
    %1335 = vmatmul.mubr.f32.gmra.mrb[0].mxu0 %v1264
    %v1336 = vpop.f32.mrb[0].mxu0
    %v1337 = vadd.f32 %v284, %v1336
    %v1338 = vpop.f32.mrb[0].mxu0
    %1339 = vdwg.mxu0
    %v1340 = vstv %s1176
    %v1341 = vmul.f32 %v1340, %v1174
    %v1342 = vmul.f32 %v1340, %v1175
    %v1343 = vstv %s1177
    %v1344 = vmul.f32 %v1343, %v1332
    %v1345 = vmul.f32 %v1343, %v1337
    %v1346 = vsub.f32 %v1341, %v1344
    %v1347 = vsub.f32 %v1342, %v1345
    %v1348 = vmax.f32 %v1346, -1.0
    %v1349 = vmax.f32 %v1347, -1.0
    %v1350 = vmin.f32 %v1348, 1.0
    %v1351 = vmin.f32 %v1349, 1.0
    %v1352 = vstv %s1178
    %v1353 = vmul.f32 %v1352, %v1350
    %v1354 = vmul.f32 %v1352, %v1351
    %v1355 = vstv %s1179
    %v1356 = vmul.f32 %v1355, %v1174
    %v1357 = vmul.f32 %v1355, %v1175
    %v1358 = vadd.f32 %v1353, %v1356
    %v1359 = vadd.f32 %v1354, %v1357
    %s1360 = scalar_lea.vmem [#allocation10], 80
    %v1361 = vld [vmem:[%s1360] sm:$0xff]
    %v1362 = vld [vmem:[%s1360 + $0x8] sm:$0xff]
    %v1363 = vstv %s1180
    %v1364 = vmul.f32 %v1363, %v1361
    %v1365 = vmul.f32 %v1363, %v1362
    %v1366 = vadd.f32 %v1358, %v1364
    %v1367 = vadd.f32 %v1359, %v1365
    %v1368 = vmul.f32 %v1366, %v144
    %v1369 = vmul.f32 %v1367, %v145
    %v1370 = vadd.f32 %v148, %v1368
    %v1371 = vadd.f32 %v149, %v1369
    %s1372 = sld [smem:[#allocation2 + $0x31]]
    %s1373 = sld [smem:[#allocation2 + $0x32]]
    %s1374 = sld [smem:[#allocation2 + $0x33]]
    %s1375 = sld [smem:[#allocation2 + $0x34]]
    %s1376 = sld [smem:[#allocation2 + $0x35]]
    %1377 = vmatprep.subr.mxu0 0.0
    %1378 = vmatpush1.msra.mxu0 %v152
    %1379 = vmatprep.subr.mxu0 0.0
    %1380 = vmatpush1.msra.mxu0 %v153
    %1381 = vmatprep.subr.mxu0 0.0
    %1382 = vmatpush1.msra.mxu0 %v154
    %1383 = vmatprep.subr.mxu0 0.0
    %1384 = vmatpush1.msra.mxu0 %v155
    %1385 = vmatprep.subr.mxu0 0.0
    %1386 = vmatpush1.msra.mxu0 %v156
    %1387 = vmatprep.subr.mxu0 0.0
    %1388 = vmatpush1.msra.mxu0 %v157
    %1389 = vmatprep.subr.mxu0 0.0
    %1390 = vmatpush1.msra.mxu0 %v158
    %1391 = vmatprep.subr.mxu0 0.0
    %1392 = vmatpush1.msra.mxu0 %v159
    %1393 = vmatprep.subr.mxu0 0.0
    %1394 = vmatpush1.msra.mxu0 %v160
    %1395 = vmatprep.subr.mxu0 0.0
    %1396 = vmatpush1.msra.mxu0 %v161
    %1397 = vmatprep.subr.mxu0 0.0
    %1398 = vmatpush1.msra.mxu0 %v162
    %1399 = vmatprep.subr.mxu0 0.0
    %1400 = vmatpush1.msra.mxu0 %v163
    %1401 = vmatprep.subr.mxu0 0.0
    %1402 = vmatpush1.msra.mxu0 %v164
    %1403 = vmatprep.subr.mxu0 0.0
    %1404 = vmatpush1.msra.mxu0 %v165
    %1405 = vmatprep.subr.mxu0 0.0
    %1406 = vmatpush1.msra.mxu0 %v166
    %1407 = vmatprep.subr.mxu0 0.0
    %1408 = vmatpush1.msra.mxu0 %v167
    %1409 = vmatprep.subr.mxu0 0.0
    %1410 = vmatpush1.msra.mxu0 0.0
    %1411 = vmatprep.subr.mxu0 0.0
    %1412 = vmatpush1.msra.mxu0 0.0
    %1413 = vmatprep.subr.mxu0 0.0
    %1414 = vmatpush1.msra.mxu0 0.0
    %1415 = vmatprep.subr.mxu0 0.0
    %1416 = vmatpush1.msra.mxu0 0.0
    %1417 = vmatprep.subr.mxu0 0.0
    %1418 = vmatpush1.msra.mxu0 0.0
    %1419 = vmatprep.subr.mxu0 0.0
    %1420 = vmatpush1.msra.mxu0 0.0
    %1421 = vmatprep.subr.mxu0 0.0
    %1422 = vmatpush1.msra.mxu0 0.0
    %1423 = vmatprep.subr.mxu0 0.0
    %1424 = vmatpush1.msra.mxu0 0.0
    %1425 = vmatprep.subr.mxu0 0.0
    %1426 = vmatpush1.msra.mxu0 0.0
    %1427 = vmatprep.subr.mxu0 0.0
    %1428 = vmatpush1.msra.mxu0 0.0
    %1429 = vmatprep.subr.mxu0 0.0
    %1430 = vmatpush1.msra.mxu0 0.0
    %1431 = vmatprep.subr.mxu0 0.0
    %1432 = vmatpush1.msra.mxu0 0.0
    %1433 = vmatprep.subr.mxu0 0.0
    %1434 = vmatpush1.msra.mxu0 0.0
    %1435 = vmatprep.subr.mxu0 0.0
    %1436 = vmatpush1.msra.mxu0 0.0
    %1437 = vmatprep.subr.mxu0 0.0
    %1438 = vmatpush1.msra.mxu0 0.0
    %1439 = vmatprep.subr.mxu0 0.0
    %1440 = vmatpush1.msra.mxu0 0.0
    %1441 = vmatprep.mubr.f32.mxu0 0.0
    %1442 = vmatmul.mubr.f32.gmra.mrb[0].mxu0 %v1370
    %v1443 = vpop.f32.mrb[0].mxu0
    %v1444 = vadd.f32 %v150, %v1443
    %v1445 = vpop.f32.mrb[0].mxu0
    %1446 = vmatprep.mubr.f32.mxu0 0.0
    %1447 = vmatmul.mubr.f32.gmra.mrb[0].mxu0 %v1371
    %v1448 = vpop.f32.mrb[0].mxu0
    %v1449 = vadd.f32 %v151, %v1448
    %v1450 = vpop.f32.mrb[0].mxu0
    %1451 = vdwg.mxu0
    %v1452 = vld [vmem:[#allocation13 + $0x6] sm:$0x1]
    %v1453 = vlaneseq
    %v1454 = vshrl.u32 %v1453, 7
    %v1455 = vsub.s32 0, %v1454
    %v1456 = vrot.slane %v1452, %v1455
    %v1457 = vadd.f32 %v1444, %v1456
    %v1458 = vadd.f32 %v1449, %v1456
    %v1459 = vtanh.pop %v1457
    %v1460 = vtanh.pop %v1458
    %1461 = vmatprep.subr.mxu0 0.0
    %1462 = vmatpush1.msra.mxu0 %v168
    %1463 = vmatprep.subr.mxu0 0.0
    %1464 = vmatpush1.msra.mxu0 %v169
    %1465 = vmatprep.subr.mxu0 0.0
    %1466 = vmatpush1.msra.mxu0 %v170
    %1467 = vmatprep.subr.mxu0 0.0
    %1468 = vmatpush1.msra.mxu0 %v171
    %1469 = vmatprep.subr.mxu0 0.0
    %1470 = vmatpush1.msra.mxu0 %v172
    %1471 = vmatprep.subr.mxu0 0.0
    %1472 = vmatpush1.msra.mxu0 %v173
    %1473 = vmatprep.subr.mxu0 0.0
    %1474 = vmatpush1.msra.mxu0 %v174
    %1475 = vmatprep.subr.mxu0 0.0
    %1476 = vmatpush1.msra.mxu0 %v175
    %1477 = vmatprep.subr.mxu0 0.0
    %1478 = vmatpush1.msra.mxu0 %v176
    %1479 = vmatprep.subr.mxu0 0.0
    %1480 = vmatpush1.msra.mxu0 %v177
    %1481 = vmatprep.subr.mxu0 0.0
    %1482 = vmatpush1.msra.mxu0 %v178
    %1483 = vmatprep.subr.mxu0 0.0
    %1484 = vmatpush1.msra.mxu0 %v179
    %1485 = vmatprep.subr.mxu0 0.0
    %1486 = vmatpush1.msra.mxu0 %v180
    %1487 = vmatprep.subr.mxu0 0.0
    %1488 = vmatpush1.msra.mxu0 %v181
    %1489 = vmatprep.subr.mxu0 0.0
    %1490 = vmatpush1.msra.mxu0 %v182
    %1491 = vmatprep.subr.mxu0 0.0
    %1492 = vmatpush1.msra.mxu0 %v183
    %1493 = vmatprep.subr.mxu0 0.0
    %1494 = vmatpush1.msra.mxu0 0.0
    %1495 = vmatprep.subr.mxu0 0.0
    %1496 = vmatpush1.msra.mxu0 0.0
    %1497 = vmatprep.subr.mxu0 0.0
    %1498 = vmatpush1.msra.mxu0 0.0
    %1499 = vmatprep.subr.mxu0 0.0
    %1500 = vmatpush1.msra.mxu0 0.0
    %1501 = vmatprep.subr.mxu0 0.0
    %1502 = vmatpush1.msra.mxu0 0.0
    %1503 = vmatprep.subr.mxu0 0.0
    %1504 = vmatpush1.msra.mxu0 0.0
    %1505 = vmatprep.subr.mxu0 0.0
    %1506 = vmatpush1.msra.mxu0 0.0
    %1507 = vmatprep.subr.mxu0 0.0
    %1508 = vmatpush1.msra.mxu0 0.0
    %1509 = vmatprep.subr.mxu0 0.0
    %1510 = vmatpush1.msra.mxu0 0.0
    %1511 = vmatprep.subr.mxu0 0.0
    %1512 = vmatpush1.msra.mxu0 0.0
    %1513 = vmatprep.subr.mxu0 0.0
    %1514 = vmatpush1.msra.mxu0 0.0
    %1515 = vmatprep.subr.mxu0 0.0
    %1516 = vmatpush1.msra.mxu0 0.0
    %1517 = vmatprep.subr.mxu0 0.0
    %1518 = vmatpush1.msra.mxu0 0.0
    %1519 = vmatprep.subr.mxu0 0.0
    %1520 = vmatpush1.msra.mxu0 0.0
    %1521 = vmatprep.subr.mxu0 0.0
    %1522 = vmatpush1.msra.mxu0 0.0
    %1523 = vmatprep.subr.mxu0 0.0
    %1524 = vmatpush1.msra.mxu0 0.0
    %1525 = vmatprep.mubr.f32.mxu0 0.0
    %1526 = vmatmul.mubr.f32.gmra.mrb[0].mxu0 %v1459
    %v1527 = vpop.f32.mrb[0].mxu0
    %v1528 = vadd.f32 %v284, %v1527
    %v1529 = vpop.f32.mrb[0].mxu0
    %1530 = vmatprep.mubr.f32.mxu0 0.0
    %1531 = vmatmul.mubr.f32.gmra.mrb[0].mxu0 %v1460
    %v1532 = vpop.f32.mrb[0].mxu0
    %v1533 = vadd.f32 %v284, %v1532
    %v1534 = vpop.f32.mrb[0].mxu0
    %1535 = vdwg.mxu0
    %v1536 = vstv %s1372
    %v1537 = vmul.f32 %v1536, %v1370
    %v1538 = vmul.f32 %v1536, %v1371
    %v1539 = vstv %s1373
    %v1540 = vmul.f32 %v1539, %v1528
    %v1541 = vmul.f32 %v1539, %v1533
    %v1542 = vsub.f32 %v1537, %v1540
    %v1543 = vsub.f32 %v1538, %v1541
    %v1544 = vmax.f32 %v1542, -1.0
    %v1545 = vmax.f32 %v1543, -1.0
    %v1546 = vmin.f32 %v1544, 1.0
    %v1547 = vmin.f32 %v1545, 1.0
    %v1548 = vstv %s1374
    %v1549 = vmul.f32 %v1548, %v1546
    %v1550 = vmul.f32 %v1548, %v1547
    %v1551 = vstv %s1375
    %v1552 = vmul.f32 %v1551, %v1370
    %v1553 = vmul.f32 %v1551, %v1371
    %v1554 = vadd.f32 %v1549, %v1552
    %v1555 = vadd.f32 %v1550, %v1553
    %s1556 = scalar_lea.vmem [#allocation10], 96
    %v1557 = vld [vmem:[%s1556] sm:$0xff]
    %v1558 = vld [vmem:[%s1556 + $0x8] sm:$0xff]
    %v1559 = vstv %s1376
    %v1560 = vmul.f32 %v1559, %v1557
    %v1561 = vmul.f32 %v1559, %v1558
    %v1562 = vadd.f32 %v1554, %v1560
    %v1563 = vadd.f32 %v1555, %v1561
    %v1564 = vmul.f32 %v1562, %v144
    %v1565 = vmul.f32 %v1563, %v145
    %v1566 = vadd.f32 %v148, %v1564
    %v1567 = vadd.f32 %v149, %v1565
    %s1568 = sld [smem:[#allocation2 + $0x39]]
    %s1569 = sld [smem:[#allocation2 + $0x3a]]
    %s1570 = sld [smem:[#allocation2 + $0x3b]]
    %s1571 = sld [smem:[#allocation2 + $0x3c]]
    %s1572 = sld [smem:[#allocation2 + $0x3d]]
    %1573 = vmatprep.subr.mxu0 0.0
    %1574 = vmatpush1.msra.mxu0 %v152
    %1575 = vmatprep.subr.mxu0 0.0
    %1576 = vmatpush1.msra.mxu0 %v153
    %1577 = vmatprep.subr.mxu0 0.0
    %1578 = vmatpush1.msra.mxu0 %v154
    %1579 = vmatprep.subr.mxu0 0.0
    %1580 = vmatpush1.msra.mxu0 %v155
    %1581 = vmatprep.subr.mxu0 0.0
    %1582 = vmatpush1.msra.mxu0 %v156
    %1583 = vmatprep.subr.mxu0 0.0
    %1584 = vmatpush1.msra.mxu0 %v157
    %1585 = vmatprep.subr.mxu0 0.0
    %1586 = vmatpush1.msra.mxu0 %v158
    %1587 = vmatprep.subr.mxu0 0.0
    %1588 = vmatpush1.msra.mxu0 %v159
    %1589 = vmatprep.subr.mxu0 0.0
    %1590 = vmatpush1.msra.mxu0 %v160
    %1591 = vmatprep.subr.mxu0 0.0
    %1592 = vmatpush1.msra.mxu0 %v161
    %1593 = vmatprep.subr.mxu0 0.0
    %1594 = vmatpush1.msra.mxu0 %v162
    %1595 = vmatprep.subr.mxu0 0.0
    %1596 = vmatpush1.msra.mxu0 %v163
    %1597 = vmatprep.subr.mxu0 0.0
    %1598 = vmatpush1.msra.mxu0 %v164
    %1599 = vmatprep.subr.mxu0 0.0
    %1600 = vmatpush1.msra.mxu0 %v165
    %1601 = vmatprep.subr.mxu0 0.0
    %1602 = vmatpush1.msra.mxu0 %v166
    %1603 = vmatprep.subr.mxu0 0.0
    %1604 = vmatpush1.msra.mxu0 %v167
    %1605 = vmatprep.subr.mxu0 0.0
    %1606 = vmatpush1.msra.mxu0 0.0
    %1607 = vmatprep.subr.mxu0 0.0
    %1608 = vmatpush1.msra.mxu0 0.0
    %1609 = vmatprep.subr.mxu0 0.0
    %1610 = vmatpush1.msra.mxu0 0.0
    %1611 = vmatprep.subr.mxu0 0.0
    %1612 = vmatpush1.msra.mxu0 0.0
    %1613 = vmatprep.subr.mxu0 0.0
    %1614 = vmatpush1.msra.mxu0 0.0
    %1615 = vmatprep.subr.mxu0 0.0
    %1616 = vmatpush1.msra.mxu0 0.0
    %1617 = vmatprep.subr.mxu0 0.0
    %1618 = vmatpush1.msra.mxu0 0.0
    %1619 = vmatprep.subr.mxu0 0.0
    %1620 = vmatpush1.msra.mxu0 0.0
    %1621 = vmatprep.subr.mxu0 0.0
    %1622 = vmatpush1.msra.mxu0 0.0
    %1623 = vmatprep.subr.mxu0 0.0
    %1624 = vmatpush1.msra.mxu0 0.0
    %1625 = vmatprep.subr.mxu0 0.0
    %1626 = vmatpush1.msra.mxu0 0.0
    %1627 = vmatprep.subr.mxu0 0.0
    %1628 = vmatpush1.msra.mxu0 0.0
    %1629 = vmatprep.subr.mxu0 0.0
    %1630 = vmatpush1.msra.mxu0 0.0
    %1631 = vmatprep.subr.mxu0 0.0
    %1632 = vmatpush1.msra.mxu0 0.0
    %1633 = vmatprep.subr.mxu0 0.0
    %1634 = vmatpush1.msra.mxu0 0.0
    %1635 = vmatprep.subr.mxu0 0.0
    %1636 = vmatpush1.msra.mxu0 0.0
    %1637 = vmatprep.mubr.f32.mxu0 0.0
    %1638 = vmatmul.mubr.f32.gmra.mrb[0].mxu0 %v1566
    %v1639 = vpop.f32.mrb[0].mxu0
    %v1640 = vadd.f32 %v150, %v1639
    %v1641 = vpop.f32.mrb[0].mxu0
    %1642 = vmatprep.mubr.f32.mxu0 0.0
    %1643 = vmatmul.mubr.f32.gmra.mrb[0].mxu0 %v1567
    %v1644 = vpop.f32.mrb[0].mxu0
    %v1645 = vadd.f32 %v151, %v1644
    %v1646 = vpop.f32.mrb[0].mxu0
    %1647 = vdwg.mxu0
    %v1648 = vld [vmem:[#allocation13 + $0x7] sm:$0x1]
    %v1649 = vlaneseq
    %v1650 = vshrl.u32 %v1649, 7
    %v1651 = vsub.s32 0, %v1650
    %v1652 = vrot.slane %v1648, %v1651
    %v1653 = vadd.f32 %v1640, %v1652
    %v1654 = vadd.f32 %v1645, %v1652
    %v1655 = vtanh.pop %v1653
    %v1656 = vtanh.pop %v1654
    %1657 = vmatprep.subr.mxu0 0.0
    %1658 = vmatpush1.msra.mxu0 %v168
    %1659 = vmatprep.subr.mxu0 0.0
    %1660 = vmatpush1.msra.mxu0 %v169
    %1661 = vmatprep.subr.mxu0 0.0
    %1662 = vmatpush1.msra.mxu0 %v170
    %1663 = vmatprep.subr.mxu0 0.0
    %1664 = vmatpush1.msra.mxu0 %v171
    %1665 = vmatprep.subr.mxu0 0.0
    %1666 = vmatpush1.msra.mxu0 %v172
    %1667 = vmatprep.subr.mxu0 0.0
    %1668 = vmatpush1.msra.mxu0 %v173
    %1669 = vmatprep.subr.mxu0 0.0
    %1670 = vmatpush1.msra.mxu0 %v174
    %1671 = vmatprep.subr.mxu0 0.0
    %1672 = vmatpush1.msra.mxu0 %v175
    %1673 = vmatprep.subr.mxu0 0.0
    %1674 = vmatpush1.msra.mxu0 %v176
    %1675 = vmatprep.subr.mxu0 0.0
    %1676 = vmatpush1.msra.mxu0 %v177
    %1677 = vmatprep.subr.mxu0 0.0
    %1678 = vmatpush1.msra.mxu0 %v178
    %1679 = vmatprep.subr.mxu0 0.0
    %1680 = vmatpush1.msra.mxu0 %v179
    %1681 = vmatprep.subr.mxu0 0.0
    %1682 = vmatpush1.msra.mxu0 %v180
    %1683 = vmatprep.subr.mxu0 0.0
    %1684 = vmatpush1.msra.mxu0 %v181
    %1685 = vmatprep.subr.mxu0 0.0
    %1686 = vmatpush1.msra.mxu0 %v182
    %1687 = vmatprep.subr.mxu0 0.0
    %1688 = vmatpush1.msra.mxu0 %v183
    %1689 = vmatprep.subr.mxu0 0.0
    %1690 = vmatpush1.msra.mxu0 0.0
    %1691 = vmatprep.subr.mxu0 0.0
    %1692 = vmatpush1.msra.mxu0 0.0
    %1693 = vmatprep.subr.mxu0 0.0
    %1694 = vmatpush1.msra.mxu0 0.0
    %1695 = vmatprep.subr.mxu0 0.0
    %1696 = vmatpush1.msra.mxu0 0.0
    %1697 = vmatprep.subr.mxu0 0.0
    %1698 = vmatpush1.msra.mxu0 0.0
    %1699 = vmatprep.subr.mxu0 0.0
    %1700 = vmatpush1.msra.mxu0 0.0
    %1701 = vmatprep.subr.mxu0 0.0
    %1702 = vmatpush1.msra.mxu0 0.0
    %1703 = vmatprep.subr.mxu0 0.0
    %1704 = vmatpush1.msra.mxu0 0.0
    %1705 = vmatprep.subr.mxu0 0.0
    %1706 = vmatpush1.msra.mxu0 0.0
    %1707 = vmatprep.subr.mxu0 0.0
    %1708 = vmatpush1.msra.mxu0 0.0
    %1709 = vmatprep.subr.mxu0 0.0
    %1710 = vmatpush1.msra.mxu0 0.0
    %1711 = vmatprep.subr.mxu0 0.0
    %1712 = vmatpush1.msra.mxu0 0.0
    %1713 = vmatprep.subr.mxu0 0.0
    %1714 = vmatpush1.msra.mxu0 0.0
    %1715 = vmatprep.subr.mxu0 0.0
    %1716 = vmatpush1.msra.mxu0 0.0
    %1717 = vmatprep.subr.mxu0 0.0
    %1718 = vmatpush1.msra.mxu0 0.0
    %1719 = vmatprep.subr.mxu0 0.0
    %1720 = vmatpush1.msra.mxu0 0.0
    %1721 = vmatprep.mubr.f32.mxu0 0.0
    %1722 = vmatmul.mubr.f32.gmra.mrb[0].mxu0 %v1655
    %v1723 = vpop.f32.mrb[0].mxu0
    %v1724 = vadd.f32 %v284, %v1723
    %v1725 = vpop.f32.mrb[0].mxu0
    %1726 = vmatprep.mubr.f32.mxu0 0.0
    %1727 = vmatmul.mubr.f32.gmra.mrb[0].mxu0 %v1656
    %v1728 = vpop.f32.mrb[0].mxu0
    %v1729 = vadd.f32 %v284, %v1728
    %v1730 = vpop.f32.mrb[0].mxu0
    %1731 = vdwg.mxu0
    %v1732 = vstv %s1568
    %v1733 = vmul.f32 %v1732, %v1566
    %v1734 = vmul.f32 %v1732, %v1567
    %v1735 = vstv %s1569
    %v1736 = vmul.f32 %v1735, %v1724
    %v1737 = vmul.f32 %v1735, %v1729
    %v1738 = vsub.f32 %v1733, %v1736
    %v1739 = vsub.f32 %v1734, %v1737
    %v1740 = vmax.f32 %v1738, -1.0
    %v1741 = vmax.f32 %v1739, -1.0
    %v1742 = vmin.f32 %v1740, 1.0
    %v1743 = vmin.f32 %v1741, 1.0
    %v1744 = vstv %s1570
    %v1745 = vmul.f32 %v1744, %v1742
    %v1746 = vmul.f32 %v1744, %v1743
    %v1747 = vstv %s1571
    %v1748 = vmul.f32 %v1747, %v1566
    %v1749 = vmul.f32 %v1747, %v1567
    %v1750 = vadd.f32 %v1745, %v1748
    %v1751 = vadd.f32 %v1746, %v1749
    %s1752 = scalar_lea.vmem [#allocation10], 112
    %v1753 = vld [vmem:[%s1752] sm:$0xff]
    %v1754 = vld [vmem:[%s1752 + $0x8] sm:$0xff]
    %v1755 = vstv %s1572
    %v1756 = vmul.f32 %v1755, %v1753
    %v1757 = vmul.f32 %v1755, %v1754
    %v1758 = vadd.f32 %v1750, %v1756
    %v1759 = vadd.f32 %v1751, %v1757
    %v1760 = vmul.f32 %v1758, %v144
    %v1761 = vmul.f32 %v1759, %v145
    %v1762 = vadd.f32 %v148, %v1760
    %v1763 = vadd.f32 %v149, %v1761
    %s1764 = sld [smem:[#allocation2 + $0x41]]
    %s1765 = sld [smem:[#allocation2 + $0x42]]
    %s1766 = sld [smem:[#allocation2 + $0x43]]
    %s1767 = sld [smem:[#allocation2 + $0x44]]
    %s1768 = sld [smem:[#allocation2 + $0x45]]
    %1769 = vmatprep.subr.mxu0 0.0
    %1770 = vmatpush1.msra.mxu0 %v152
    %1771 = vmatprep.subr.mxu0 0.0
    %1772 = vmatpush1.msra.mxu0 %v153
    %1773 = vmatprep.subr.mxu0 0.0
    %1774 = vmatpush1.msra.mxu0 %v154
    %1775 = vmatprep.subr.mxu0 0.0
    %1776 = vmatpush1.msra.mxu0 %v155
    %1777 = vmatprep.subr.mxu0 0.0
    %1778 = vmatpush1.msra.mxu0 %v156
    %1779 = vmatprep.subr.mxu0 0.0
    %1780 = vmatpush1.msra.mxu0 %v157
    %1781 = vmatprep.subr.mxu0 0.0
    %1782 = vmatpush1.msra.mxu0 %v158
    %1783 = vmatprep.subr.mxu0 0.0
    %1784 = vmatpush1.msra.mxu0 %v159
    %1785 = vmatprep.subr.mxu0 0.0
    %1786 = vmatpush1.msra.mxu0 %v160
    %1787 = vmatprep.subr.mxu0 0.0
    %1788 = vmatpush1.msra.mxu0 %v161
    %1789 = vmatprep.subr.mxu0 0.0
    %1790 = vmatpush1.msra.mxu0 %v162
    %1791 = vmatprep.subr.mxu0 0.0
    %1792 = vmatpush1.msra.mxu0 %v163
    %1793 = vmatprep.subr.mxu0 0.0
    %1794 = vmatpush1.msra.mxu0 %v164
    %1795 = vmatprep.subr.mxu0 0.0
    %1796 = vmatpush1.msra.mxu0 %v165
    %1797 = vmatprep.subr.mxu0 0.0
    %1798 = vmatpush1.msra.mxu0 %v166
    %1799 = vmatprep.subr.mxu0 0.0
    %1800 = vmatpush1.msra.mxu0 %v167
    %1801 = vmatprep.subr.mxu0 0.0
    %1802 = vmatpush1.msra.mxu0 0.0
    %1803 = vmatprep.subr.mxu0 0.0
    %1804 = vmatpush1.msra.mxu0 0.0
    %1805 = vmatprep.subr.mxu0 0.0
    %1806 = vmatpush1.msra.mxu0 0.0
    %1807 = vmatprep.subr.mxu0 0.0
    %1808 = vmatpush1.msra.mxu0 0.0
    %1809 = vmatprep.subr.mxu0 0.0
    %1810 = vmatpush1.msra.mxu0 0.0
    %1811 = vmatprep.subr.mxu0 0.0
    %1812 = vmatpush1.msra.mxu0 0.0
    %1813 = vmatprep.subr.mxu0 0.0
    %1814 = vmatpush1.msra.mxu0 0.0
    %1815 = vmatprep.subr.mxu0 0.0
    %1816 = vmatpush1.msra.mxu0 0.0
    %1817 = vmatprep.subr.mxu0 0.0
    %1818 = vmatpush1.msra.mxu0 0.0
    %1819 = vmatprep.subr.mxu0 0.0
    %1820 = vmatpush1.msra.mxu0 0.0
    %1821 = vmatprep.subr.mxu0 0.0
    %1822 = vmatpush1.msra.mxu0 0.0
    %1823 = vmatprep.subr.mxu0 0.0
    %1824 = vmatpush1.msra.mxu0 0.0
    %1825 = vmatprep.subr.mxu0 0.0
    %1826 = vmatpush1.msra.mxu0 0.0
    %1827 = vmatprep.subr.mxu0 0.0
    %1828 = vmatpush1.msra.mxu0 0.0
    %1829 = vmatprep.subr.mxu0 0.0
    %1830 = vmatpush1.msra.mxu0 0.0
    %1831 = vmatprep.subr.mxu0 0.0
    %1832 = vmatpush1.msra.mxu0 0.0
    %1833 = vmatprep.mubr.f32.mxu0 0.0
    %1834 = vmatmul.mubr.f32.gmra.mrb[0].mxu0 %v1762
    %v1835 = vpop.f32.mrb[0].mxu0
    %v1836 = vadd.f32 %v150, %v1835
    %v1837 = vpop.f32.mrb[0].mxu0
    %1838 = vmatprep.mubr.f32.mxu0 0.0
    %1839 = vmatmul.mubr.f32.gmra.mrb[0].mxu0 %v1763
    %v1840 = vpop.f32.mrb[0].mxu0
    %v1841 = vadd.f32 %v151, %v1840
    %v1842 = vpop.f32.mrb[0].mxu0
    %1843 = vdwg.mxu0
    %v1844 = vld [vmem:[#allocation13 + $0x8] sm:$0x1]
    %v1845 = vlaneseq
    %v1846 = vshrl.u32 %v1845, 7
    %v1847 = vsub.s32 0, %v1846
    %v1848 = vrot.slane %v1844, %v1847
    %v1849 = vadd.f32 %v1836, %v1848
    %v1850 = vadd.f32 %v1841, %v1848
    %v1851 = vtanh.pop %v1849
    %v1852 = vtanh.pop %v1850
    %1853 = vmatprep.subr.mxu0 0.0
    %1854 = vmatpush1.msra.mxu0 %v168
    %1855 = vmatprep.subr.mxu0 0.0
    %1856 = vmatpush1.msra.mxu0 %v169
    %1857 = vmatprep.subr.mxu0 0.0
    %1858 = vmatpush1.msra.mxu0 %v170
    %1859 = vmatprep.subr.mxu0 0.0
    %1860 = vmatpush1.msra.mxu0 %v171
    %1861 = vmatprep.subr.mxu0 0.0
    %1862 = vmatpush1.msra.mxu0 %v172
    %1863 = vmatprep.subr.mxu0 0.0
    %1864 = vmatpush1.msra.mxu0 %v173
    %1865 = vmatprep.subr.mxu0 0.0
    %1866 = vmatpush1.msra.mxu0 %v174
    %1867 = vmatprep.subr.mxu0 0.0
    %1868 = vmatpush1.msra.mxu0 %v175
    %1869 = vmatprep.subr.mxu0 0.0
    %1870 = vmatpush1.msra.mxu0 %v176
    %1871 = vmatprep.subr.mxu0 0.0
    %1872 = vmatpush1.msra.mxu0 %v177
    %1873 = vmatprep.subr.mxu0 0.0
    %1874 = vmatpush1.msra.mxu0 %v178
    %1875 = vmatprep.subr.mxu0 0.0
    %1876 = vmatpush1.msra.mxu0 %v179
    %1877 = vmatprep.subr.mxu0 0.0
    %1878 = vmatpush1.msra.mxu0 %v180
    %1879 = vmatprep.subr.mxu0 0.0
    %1880 = vmatpush1.msra.mxu0 %v181
    %1881 = vmatprep.subr.mxu0 0.0
    %1882 = vmatpush1.msra.mxu0 %v182
    %1883 = vmatprep.subr.mxu0 0.0
    %1884 = vmatpush1.msra.mxu0 %v183
    %1885 = vmatprep.subr.mxu0 0.0
    %1886 = vmatpush1.msra.mxu0 0.0
    %1887 = vmatprep.subr.mxu0 0.0
    %1888 = vmatpush1.msra.mxu0 0.0
    %1889 = vmatprep.subr.mxu0 0.0
    %1890 = vmatpush1.msra.mxu0 0.0
    %1891 = vmatprep.subr.mxu0 0.0
    %1892 = vmatpush1.msra.mxu0 0.0
    %1893 = vmatprep.subr.mxu0 0.0
    %1894 = vmatpush1.msra.mxu0 0.0
    %1895 = vmatprep.subr.mxu0 0.0
    %1896 = vmatpush1.msra.mxu0 0.0
    %1897 = vmatprep.subr.mxu0 0.0
    %1898 = vmatpush1.msra.mxu0 0.0
    %1899 = vmatprep.subr.mxu0 0.0
    %1900 = vmatpush1.msra.mxu0 0.0
    %1901 = vmatprep.subr.mxu0 0.0
    %1902 = vmatpush1.msra.mxu0 0.0
    %1903 = vmatprep.subr.mxu0 0.0
    %1904 = vmatpush1.msra.mxu0 0.0
    %1905 = vmatprep.subr.mxu0 0.0
    %1906 = vmatpush1.msra.mxu0 0.0
    %1907 = vmatprep.subr.mxu0 0.0
    %1908 = vmatpush1.msra.mxu0 0.0
    %1909 = vmatprep.subr.mxu0 0.0
    %1910 = vmatpush1.msra.mxu0 0.0
    %1911 = vmatprep.subr.mxu0 0.0
    %1912 = vmatpush1.msra.mxu0 0.0
    %1913 = vmatprep.subr.mxu0 0.0
    %1914 = vmatpush1.msra.mxu0 0.0
    %1915 = vmatprep.subr.mxu0 0.0
    %1916 = vmatpush1.msra.mxu0 0.0
    %1917 = vmatprep.mubr.f32.mxu0 0.0
    %1918 = vmatmul.mubr.f32.gmra.mrb[0].mxu0 %v1851
    %v1919 = vpop.f32.mrb[0].mxu0
    %v1920 = vadd.f32 %v284, %v1919
    %v1921 = vpop.f32.mrb[0].mxu0
    %1922 = vmatprep.mubr.f32.mxu0 0.0
    %1923 = vmatmul.mubr.f32.gmra.mrb[0].mxu0 %v1852
    %v1924 = vpop.f32.mrb[0].mxu0
    %v1925 = vadd.f32 %v284, %v1924
    %v1926 = vpop.f32.mrb[0].mxu0
    %1927 = vdwg.mxu0
    %v1928 = vstv %s1764
    %v1929 = vmul.f32 %v1928, %v1762
    %v1930 = vmul.f32 %v1928, %v1763
    %v1931 = vstv %s1765
    %v1932 = vmul.f32 %v1931, %v1920
    %v1933 = vmul.f32 %v1931, %v1925
    %v1934 = vsub.f32 %v1929, %v1932
    %v1935 = vsub.f32 %v1930, %v1933
    %v1936 = vmax.f32 %v1934, -1.0
    %v1937 = vmax.f32 %v1935, -1.0
    %v1938 = vmin.f32 %v1936, 1.0
    %v1939 = vmin.f32 %v1937, 1.0
    %v1940 = vstv %s1766
    %v1941 = vmul.f32 %v1940, %v1938
    %v1942 = vmul.f32 %v1940, %v1939
    %v1943 = vstv %s1767
    %v1944 = vmul.f32 %v1943, %v1762
    %v1945 = vmul.f32 %v1943, %v1763
    %v1946 = vadd.f32 %v1941, %v1944
    %v1947 = vadd.f32 %v1942, %v1945
    %s1948 = scalar_lea.vmem [#allocation10], 128
    %v1949 = vld [vmem:[%s1948] sm:$0xff]
    %v1950 = vld [vmem:[%s1948 + $0x8] sm:$0xff]
    %v1951 = vstv %s1768
    %v1952 = vmul.f32 %v1951, %v1949
    %v1953 = vmul.f32 %v1951, %v1950
    %v1954 = vadd.f32 %v1946, %v1952
    %v1955 = vadd.f32 %v1947, %v1953
    %v1956 = vmul.f32 %v1954, %v144
    %v1957 = vmul.f32 %v1955, %v145
    %v1958 = vadd.f32 %v148, %v1956
    %v1959 = vadd.f32 %v149, %v1957
    %s1960 = sld [smem:[#allocation2 + $0x49]]
    %s1961 = sld [smem:[#allocation2 + $0x4a]]
    %s1962 = sld [smem:[#allocation2 + $0x4b]]
    %s1963 = sld [smem:[#allocation2 + $0x4c]]
    %s1964 = sld [smem:[#allocation2 + $0x4d]]
    %1965 = vmatprep.subr.mxu0 0.0
    %1966 = vmatpush1.msra.mxu0 %v152
    %1967 = vmatprep.subr.mxu0 0.0
    %1968 = vmatpush1.msra.mxu0 %v153
    %1969 = vmatprep.subr.mxu0 0.0
    %1970 = vmatpush1.msra.mxu0 %v154
    %1971 = vmatprep.subr.mxu0 0.0
    %1972 = vmatpush1.msra.mxu0 %v155
    %1973 = vmatprep.subr.mxu0 0.0
    %1974 = vmatpush1.msra.mxu0 %v156
    %1975 = vmatprep.subr.mxu0 0.0
    %1976 = vmatpush1.msra.mxu0 %v157
    %1977 = vmatprep.subr.mxu0 0.0
    %1978 = vmatpush1.msra.mxu0 %v158
    %1979 = vmatprep.subr.mxu0 0.0
    %1980 = vmatpush1.msra.mxu0 %v159
    %1981 = vmatprep.subr.mxu0 0.0
    %1982 = vmatpush1.msra.mxu0 %v160
    %1983 = vmatprep.subr.mxu0 0.0
    %1984 = vmatpush1.msra.mxu0 %v161
    %1985 = vmatprep.subr.mxu0 0.0
    %1986 = vmatpush1.msra.mxu0 %v162
    %1987 = vmatprep.subr.mxu0 0.0
    %1988 = vmatpush1.msra.mxu0 %v163
    %1989 = vmatprep.subr.mxu0 0.0
    %1990 = vmatpush1.msra.mxu0 %v164
    %1991 = vmatprep.subr.mxu0 0.0
    %1992 = vmatpush1.msra.mxu0 %v165
    %1993 = vmatprep.subr.mxu0 0.0
    %1994 = vmatpush1.msra.mxu0 %v166
    %1995 = vmatprep.subr.mxu0 0.0
    %1996 = vmatpush1.msra.mxu0 %v167
    %1997 = vmatprep.subr.mxu0 0.0
    %1998 = vmatpush1.msra.mxu0 0.0
    %1999 = vmatprep.subr.mxu0 0.0
    %2000 = vmatpush1.msra.mxu0 0.0
    %2001 = vmatprep.subr.mxu0 0.0
    %2002 = vmatpush1.msra.mxu0 0.0
    %2003 = vmatprep.subr.mxu0 0.0
    %2004 = vmatpush1.msra.mxu0 0.0
    %2005 = vmatprep.subr.mxu0 0.0
    %2006 = vmatpush1.msra.mxu0 0.0
    %2007 = vmatprep.subr.mxu0 0.0
    %2008 = vmatpush1.msra.mxu0 0.0
    %2009 = vmatprep.subr.mxu0 0.0
    %2010 = vmatpush1.msra.mxu0 0.0
    %2011 = vmatprep.subr.mxu0 0.0
    %2012 = vmatpush1.msra.mxu0 0.0
    %2013 = vmatprep.subr.mxu0 0.0
    %2014 = vmatpush1.msra.mxu0 0.0
    %2015 = vmatprep.subr.mxu0 0.0
    %2016 = vmatpush1.msra.mxu0 0.0
    %2017 = vmatprep.subr.mxu0 0.0
    %2018 = vmatpush1.msra.mxu0 0.0
    %2019 = vmatprep.subr.mxu0 0.0
    %2020 = vmatpush1.msra.mxu0 0.0
    %2021 = vmatprep.subr.mxu0 0.0
    %2022 = vmatpush1.msra.mxu0 0.0
    %2023 = vmatprep.subr.mxu0 0.0
    %2024 = vmatpush1.msra.mxu0 0.0
    %2025 = vmatprep.subr.mxu0 0.0
    %2026 = vmatpush1.msra.mxu0 0.0
    %2027 = vmatprep.subr.mxu0 0.0
    %2028 = vmatpush1.msra.mxu0 0.0
    %2029 = vmatprep.mubr.f32.mxu0 0.0
    %2030 = vmatmul.mubr.f32.gmra.mrb[0].mxu0 %v1958
    %v2031 = vpop.f32.mrb[0].mxu0
    %v2032 = vadd.f32 %v150, %v2031
    %v2033 = vpop.f32.mrb[0].mxu0
    %2034 = vmatprep.mubr.f32.mxu0 0.0
    %2035 = vmatmul.mubr.f32.gmra.mrb[0].mxu0 %v1959
    %v2036 = vpop.f32.mrb[0].mxu0
    %v2037 = vadd.f32 %v151, %v2036
    %v2038 = vpop.f32.mrb[0].mxu0
    %2039 = vdwg.mxu0
    %v2040 = vld [vmem:[#allocation13 + $0x9] sm:$0x1]
    %v2041 = vlaneseq
    %v2042 = vshrl.u32 %v2041, 7
    %v2043 = vsub.s32 0, %v2042
    %v2044 = vrot.slane %v2040, %v2043
    %v2045 = vadd.f32 %v2032, %v2044
    %v2046 = vadd.f32 %v2037, %v2044
    %v2047 = vtanh.pop %v2045
    %v2048 = vtanh.pop %v2046
    %2049 = vmatprep.subr.mxu0 0.0
    %2050 = vmatpush1.msra.mxu0 %v168
    %2051 = vmatprep.subr.mxu0 0.0
    %2052 = vmatpush1.msra.mxu0 %v169
    %2053 = vmatprep.subr.mxu0 0.0
    %2054 = vmatpush1.msra.mxu0 %v170
    %2055 = vmatprep.subr.mxu0 0.0
    %2056 = vmatpush1.msra.mxu0 %v171
    %2057 = vmatprep.subr.mxu0 0.0
    %2058 = vmatpush1.msra.mxu0 %v172
    %2059 = vmatprep.subr.mxu0 0.0
    %2060 = vmatpush1.msra.mxu0 %v173
    %2061 = vmatprep.subr.mxu0 0.0
    %2062 = vmatpush1.msra.mxu0 %v174
    %2063 = vmatprep.subr.mxu0 0.0
    %2064 = vmatpush1.msra.mxu0 %v175
    %2065 = vmatprep.subr.mxu0 0.0
    %2066 = vmatpush1.msra.mxu0 %v176
    %2067 = vmatprep.subr.mxu0 0.0
    %2068 = vmatpush1.msra.mxu0 %v177
    %2069 = vmatprep.subr.mxu0 0.0
    %2070 = vmatpush1.msra.mxu0 %v178
    %2071 = vmatprep.subr.mxu0 0.0
    %2072 = vmatpush1.msra.mxu0 %v179
    %2073 = vmatprep.subr.mxu0 0.0
    %2074 = vmatpush1.msra.mxu0 %v180
    %2075 = vmatprep.subr.mxu0 0.0
    %2076 = vmatpush1.msra.mxu0 %v181
    %2077 = vmatprep.subr.mxu0 0.0
    %2078 = vmatpush1.msra.mxu0 %v182
    %2079 = vmatprep.subr.mxu0 0.0
    %2080 = vmatpush1.msra.mxu0 %v183
    %2081 = vmatprep.subr.mxu0 0.0
    %2082 = vmatpush1.msra.mxu0 0.0
    %2083 = vmatprep.subr.mxu0 0.0
    %2084 = vmatpush1.msra.mxu0 0.0
    %2085 = vmatprep.subr.mxu0 0.0
    %2086 = vmatpush1.msra.mxu0 0.0
    %2087 = vmatprep.subr.mxu0 0.0
    %2088 = vmatpush1.msra.mxu0 0.0
    %2089 = vmatprep.subr.mxu0 0.0
    %2090 = vmatpush1.msra.mxu0 0.0
    %2091 = vmatprep.subr.mxu0 0.0
    %2092 = vmatpush1.msra.mxu0 0.0
    %2093 = vmatprep.subr.mxu0 0.0
    %2094 = vmatpush1.msra.mxu0 0.0
    %2095 = vmatprep.subr.mxu0 0.0
    %2096 = vmatpush1.msra.mxu0 0.0
    %2097 = vmatprep.subr.mxu0 0.0
    %2098 = vmatpush1.msra.mxu0 0.0
    %2099 = vmatprep.subr.mxu0 0.0
    %2100 = vmatpush1.msra.mxu0 0.0
    %2101 = vmatprep.subr.mxu0 0.0
    %2102 = vmatpush1.msra.mxu0 0.0
    %2103 = vmatprep.subr.mxu0 0.0
    %2104 = vmatpush1.msra.mxu0 0.0
    %2105 = vmatprep.subr.mxu0 0.0
    %2106 = vmatpush1.msra.mxu0 0.0
    %2107 = vmatprep.subr.mxu0 0.0
    %2108 = vmatpush1.msra.mxu0 0.0
    %2109 = vmatprep.subr.mxu0 0.0
    %2110 = vmatpush1.msra.mxu0 0.0
    %2111 = vmatprep.subr.mxu0 0.0
    %2112 = vmatpush1.msra.mxu0 0.0
    %2113 = vmatprep.mubr.f32.mxu0 0.0
    %2114 = vmatmul.mubr.f32.gmra.mrb[0].mxu0 %v2047
    %v2115 = vpop.f32.mrb[0].mxu0
    %v2116 = vadd.f32 %v284, %v2115
    %v2117 = vpop.f32.mrb[0].mxu0
    %2118 = vmatprep.mubr.f32.mxu0 0.0
    %2119 = vmatmul.mubr.f32.gmra.mrb[0].mxu0 %v2048
    %v2120 = vpop.f32.mrb[0].mxu0
    %v2121 = vadd.f32 %v284, %v2120
    %v2122 = vpop.f32.mrb[0].mxu0
    %2123 = vdwg.mxu0
    %v2124 = vstv %s1960
    %v2125 = vmul.f32 %v2124, %v1958
    %v2126 = vmul.f32 %v2124, %v1959
    %v2127 = vstv %s1961
    %v2128 = vmul.f32 %v2127, %v2116
    %v2129 = vmul.f32 %v2127, %v2121
    %v2130 = vsub.f32 %v2125, %v2128
    %v2131 = vsub.f32 %v2126, %v2129
    %v2132 = vmax.f32 %v2130, -1.0
    %v2133 = vmax.f32 %v2131, -1.0
    %v2134 = vmin.f32 %v2132, 1.0
    %v2135 = vmin.f32 %v2133, 1.0
    %v2136 = vstv %s1962
    %v2137 = vmul.f32 %v2136, %v2134
    %v2138 = vmul.f32 %v2136, %v2135
    %v2139 = vstv %s1963
    %v2140 = vmul.f32 %v2139, %v1958
    %v2141 = vmul.f32 %v2139, %v1959
    %v2142 = vadd.f32 %v2137, %v2140
    %v2143 = vadd.f32 %v2138, %v2141
    %s2144 = scalar_lea.vmem [#allocation10], 144
    %v2145 = vld [vmem:[%s2144] sm:$0xff]
    %v2146 = vld [vmem:[%s2144 + $0x8] sm:$0xff]
    %v2147 = vstv %s1964
    %v2148 = vmul.f32 %v2147, %v2145
    %v2149 = vmul.f32 %v2147, %v2146
    %v2150 = vadd.f32 %v2142, %v2148
    %v2151 = vadd.f32 %v2143, %v2149
    %v2152 = vmul.f32 %v2150, %v144
    %v2153 = vmul.f32 %v2151, %v145
    %v2154 = vadd.f32 %v148, %v2152
    %v2155 = vadd.f32 %v149, %v2153
    %s2156 = sld [smem:[#allocation2 + $0x51]]
    %s2157 = sld [smem:[#allocation2 + $0x52]]
    %s2158 = sld [smem:[#allocation2 + $0x53]]
    %s2159 = sld [smem:[#allocation2 + $0x54]]
    %s2160 = sld [smem:[#allocation2 + $0x55]]
    %2161 = vmatprep.subr.mxu0 0.0
    %2162 = vmatpush1.msra.mxu0 %v152
    %2163 = vmatprep.subr.mxu0 0.0
    %2164 = vmatpush1.msra.mxu0 %v153
    %2165 = vmatprep.subr.mxu0 0.0
    %2166 = vmatpush1.msra.mxu0 %v154
    %2167 = vmatprep.subr.mxu0 0.0
    %2168 = vmatpush1.msra.mxu0 %v155
    %2169 = vmatprep.subr.mxu0 0.0
    %2170 = vmatpush1.msra.mxu0 %v156
    %2171 = vmatprep.subr.mxu0 0.0
    %2172 = vmatpush1.msra.mxu0 %v157
    %2173 = vmatprep.subr.mxu0 0.0
    %2174 = vmatpush1.msra.mxu0 %v158
    %2175 = vmatprep.subr.mxu0 0.0
    %2176 = vmatpush1.msra.mxu0 %v159
    %2177 = vmatprep.subr.mxu0 0.0
    %2178 = vmatpush1.msra.mxu0 %v160
    %2179 = vmatprep.subr.mxu0 0.0
    %2180 = vmatpush1.msra.mxu0 %v161
    %2181 = vmatprep.subr.mxu0 0.0
    %2182 = vmatpush1.msra.mxu0 %v162
    %2183 = vmatprep.subr.mxu0 0.0
    %2184 = vmatpush1.msra.mxu0 %v163
    %2185 = vmatprep.subr.mxu0 0.0
    %2186 = vmatpush1.msra.mxu0 %v164
    %2187 = vmatprep.subr.mxu0 0.0
    %2188 = vmatpush1.msra.mxu0 %v165
    %2189 = vmatprep.subr.mxu0 0.0
    %2190 = vmatpush1.msra.mxu0 %v166
    %2191 = vmatprep.subr.mxu0 0.0
    %2192 = vmatpush1.msra.mxu0 %v167
    %2193 = vmatprep.subr.mxu0 0.0
    %2194 = vmatpush1.msra.mxu0 0.0
    %2195 = vmatprep.subr.mxu0 0.0
    %2196 = vmatpush1.msra.mxu0 0.0
    %2197 = vmatprep.subr.mxu0 0.0
    %2198 = vmatpush1.msra.mxu0 0.0
    %2199 = vmatprep.subr.mxu0 0.0
    %2200 = vmatpush1.msra.mxu0 0.0
    %2201 = vmatprep.subr.mxu0 0.0
    %2202 = vmatpush1.msra.mxu0 0.0
    %2203 = vmatprep.subr.mxu0 0.0
    %2204 = vmatpush1.msra.mxu0 0.0
    %2205 = vmatprep.subr.mxu0 0.0
    %2206 = vmatpush1.msra.mxu0 0.0
    %2207 = vmatprep.subr.mxu0 0.0
    %2208 = vmatpush1.msra.mxu0 0.0
    %2209 = vmatprep.subr.mxu0 0.0
    %2210 = vmatpush1.msra.mxu0 0.0
    %2211 = vmatprep.subr.mxu0 0.0
    %2212 = vmatpush1.msra.mxu0 0.0
    %2213 = vmatprep.subr.mxu0 0.0
    %2214 = vmatpush1.msra.mxu0 0.0
    %2215 = vmatprep.subr.mxu0 0.0
    %2216 = vmatpush1.msra.mxu0 0.0
    %2217 = vmatprep.subr.mxu0 0.0
    %2218 = vmatpush1.msra.mxu0 0.0
    %2219 = vmatprep.subr.mxu0 0.0
    %2220 = vmatpush1.msra.mxu0 0.0
    %2221 = vmatprep.subr.mxu0 0.0
    %2222 = vmatpush1.msra.mxu0 0.0
    %2223 = vmatprep.subr.mxu0 0.0
    %2224 = vmatpush1.msra.mxu0 0.0
    %2225 = vmatprep.mubr.f32.mxu0 0.0
    %2226 = vmatmul.mubr.f32.gmra.mrb[0].mxu0 %v2154
    %v2227 = vpop.f32.mrb[0].mxu0
    %v2228 = vadd.f32 %v150, %v2227
    %v2229 = vpop.f32.mrb[0].mxu0
    %2230 = vmatprep.mubr.f32.mxu0 0.0
    %2231 = vmatmul.mubr.f32.gmra.mrb[0].mxu0 %v2155
    %v2232 = vpop.f32.mrb[0].mxu0
    %v2233 = vadd.f32 %v151, %v2232
    %v2234 = vpop.f32.mrb[0].mxu0
    %2235 = vdwg.mxu0
    %v2236 = vld [vmem:[#allocation13 + $0xa] sm:$0x1]
    %v2237 = vlaneseq
    %v2238 = vshrl.u32 %v2237, 7
    %v2239 = vsub.s32 0, %v2238
    %v2240 = vrot.slane %v2236, %v2239
    %v2241 = vadd.f32 %v2228, %v2240
    %v2242 = vadd.f32 %v2233, %v2240
    %v2243 = vtanh.pop %v2241
    %v2244 = vtanh.pop %v2242
    %2245 = vmatprep.subr.mxu0 0.0
    %2246 = vmatpush1.msra.mxu0 %v168
    %2247 = vmatprep.subr.mxu0 0.0
    %2248 = vmatpush1.msra.mxu0 %v169
    %2249 = vmatprep.subr.mxu0 0.0
    %2250 = vmatpush1.msra.mxu0 %v170
    %2251 = vmatprep.subr.mxu0 0.0
    %2252 = vmatpush1.msra.mxu0 %v171
    %2253 = vmatprep.subr.mxu0 0.0
    %2254 = vmatpush1.msra.mxu0 %v172
    %2255 = vmatprep.subr.mxu0 0.0
    %2256 = vmatpush1.msra.mxu0 %v173
    %2257 = vmatprep.subr.mxu0 0.0
    %2258 = vmatpush1.msra.mxu0 %v174
    %2259 = vmatprep.subr.mxu0 0.0
    %2260 = vmatpush1.msra.mxu0 %v175
    %2261 = vmatprep.subr.mxu0 0.0
    %2262 = vmatpush1.msra.mxu0 %v176
    %2263 = vmatprep.subr.mxu0 0.0
    %2264 = vmatpush1.msra.mxu0 %v177
    %2265 = vmatprep.subr.mxu0 0.0
    %2266 = vmatpush1.msra.mxu0 %v178
    %2267 = vmatprep.subr.mxu0 0.0
    %2268 = vmatpush1.msra.mxu0 %v179
    %2269 = vmatprep.subr.mxu0 0.0
    %2270 = vmatpush1.msra.mxu0 %v180
    %2271 = vmatprep.subr.mxu0 0.0
    %2272 = vmatpush1.msra.mxu0 %v181
    %2273 = vmatprep.subr.mxu0 0.0
    %2274 = vmatpush1.msra.mxu0 %v182
    %2275 = vmatprep.subr.mxu0 0.0
    %2276 = vmatpush1.msra.mxu0 %v183
    %2277 = vmatprep.subr.mxu0 0.0
    %2278 = vmatpush1.msra.mxu0 0.0
    %2279 = vmatprep.subr.mxu0 0.0
    %2280 = vmatpush1.msra.mxu0 0.0
    %2281 = vmatprep.subr.mxu0 0.0
    %2282 = vmatpush1.msra.mxu0 0.0
    %2283 = vmatprep.subr.mxu0 0.0
    %2284 = vmatpush1.msra.mxu0 0.0
    %2285 = vmatprep.subr.mxu0 0.0
    %2286 = vmatpush1.msra.mxu0 0.0
    %2287 = vmatprep.subr.mxu0 0.0
    %2288 = vmatpush1.msra.mxu0 0.0
    %2289 = vmatprep.subr.mxu0 0.0
    %2290 = vmatpush1.msra.mxu0 0.0
    %2291 = vmatprep.subr.mxu0 0.0
    %2292 = vmatpush1.msra.mxu0 0.0
    %2293 = vmatprep.subr.mxu0 0.0
    %2294 = vmatpush1.msra.mxu0 0.0
    %2295 = vmatprep.subr.mxu0 0.0
    %2296 = vmatpush1.msra.mxu0 0.0
    %2297 = vmatprep.subr.mxu0 0.0
    %2298 = vmatpush1.msra.mxu0 0.0
    %2299 = vmatprep.subr.mxu0 0.0
    %2300 = vmatpush1.msra.mxu0 0.0
    %2301 = vmatprep.subr.mxu0 0.0
    %2302 = vmatpush1.msra.mxu0 0.0
    %2303 = vmatprep.subr.mxu0 0.0
    %2304 = vmatpush1.msra.mxu0 0.0
    %2305 = vmatprep.subr.mxu0 0.0
    %2306 = vmatpush1.msra.mxu0 0.0
    %2307 = vmatprep.subr.mxu0 0.0
    %2308 = vmatpush1.msra.mxu0 0.0
    %2309 = vmatprep.mubr.f32.mxu0 0.0
    %2310 = vmatmul.mubr.f32.gmra.mrb[0].mxu0 %v2243
    %v2311 = vpop.f32.mrb[0].mxu0
    %v2312 = vadd.f32 %v284, %v2311
    %v2313 = vpop.f32.mrb[0].mxu0
    %2314 = vmatprep.mubr.f32.mxu0 0.0
    %2315 = vmatmul.mubr.f32.gmra.mrb[0].mxu0 %v2244
    %v2316 = vpop.f32.mrb[0].mxu0
    %v2317 = vadd.f32 %v284, %v2316
    %v2318 = vpop.f32.mrb[0].mxu0
    %2319 = vdwg.mxu0
    %v2320 = vstv %s2156
    %v2321 = vmul.f32 %v2320, %v2154
    %v2322 = vmul.f32 %v2320, %v2155
    %v2323 = vstv %s2157
    %v2324 = vmul.f32 %v2323, %v2312
    %v2325 = vmul.f32 %v2323, %v2317
    %v2326 = vsub.f32 %v2321, %v2324
    %v2327 = vsub.f32 %v2322, %v2325
    %v2328 = vmax.f32 %v2326, -1.0
    %v2329 = vmax.f32 %v2327, -1.0
    %v2330 = vmin.f32 %v2328, 1.0
    %v2331 = vmin.f32 %v2329, 1.0
    %v2332 = vstv %s2158
    %v2333 = vmul.f32 %v2332, %v2330
    %v2334 = vmul.f32 %v2332, %v2331
    %v2335 = vstv %s2159
    %v2336 = vmul.f32 %v2335, %v2154
    %v2337 = vmul.f32 %v2335, %v2155
    %v2338 = vadd.f32 %v2333, %v2336
    %v2339 = vadd.f32 %v2334, %v2337
    %s2340 = scalar_lea.vmem [#allocation10], 160
    %v2341 = vld [vmem:[%s2340] sm:$0xff]
    %v2342 = vld [vmem:[%s2340 + $0x8] sm:$0xff]
    %v2343 = vstv %s2160
    %v2344 = vmul.f32 %v2343, %v2341
    %v2345 = vmul.f32 %v2343, %v2342
    %v2346 = vadd.f32 %v2338, %v2344
    %v2347 = vadd.f32 %v2339, %v2345
    %v2348 = vmul.f32 %v2346, %v144
    %v2349 = vmul.f32 %v2347, %v145
    %v2350 = vadd.f32 %v148, %v2348
    %v2351 = vadd.f32 %v149, %v2349
    %s2352 = sld [smem:[#allocation2 + $0x59]]
    %s2353 = sld [smem:[#allocation2 + $0x5a]]
    %s2354 = sld [smem:[#allocation2 + $0x5b]]
    %s2355 = sld [smem:[#allocation2 + $0x5c]]
    %s2356 = sld [smem:[#allocation2 + $0x5d]]
    %2357 = vmatprep.subr.mxu0 0.0
    %2358 = vmatpush1.msra.mxu0 %v152
    %2359 = vmatprep.subr.mxu0 0.0
    %2360 = vmatpush1.msra.mxu0 %v153
    %2361 = vmatprep.subr.mxu0 0.0
    %2362 = vmatpush1.msra.mxu0 %v154
    %2363 = vmatprep.subr.mxu0 0.0
    %2364 = vmatpush1.msra.mxu0 %v155
    %2365 = vmatprep.subr.mxu0 0.0
    %2366 = vmatpush1.msra.mxu0 %v156
    %2367 = vmatprep.subr.mxu0 0.0
    %2368 = vmatpush1.msra.mxu0 %v157
    %2369 = vmatprep.subr.mxu0 0.0
    %2370 = vmatpush1.msra.mxu0 %v158
    %2371 = vmatprep.subr.mxu0 0.0
    %2372 = vmatpush1.msra.mxu0 %v159
    %2373 = vmatprep.subr.mxu0 0.0
    %2374 = vmatpush1.msra.mxu0 %v160
    %2375 = vmatprep.subr.mxu0 0.0
    %2376 = vmatpush1.msra.mxu0 %v161
    %2377 = vmatprep.subr.mxu0 0.0
    %2378 = vmatpush1.msra.mxu0 %v162
    %2379 = vmatprep.subr.mxu0 0.0
    %2380 = vmatpush1.msra.mxu0 %v163
    %2381 = vmatprep.subr.mxu0 0.0
    %2382 = vmatpush1.msra.mxu0 %v164
    %2383 = vmatprep.subr.mxu0 0.0
    %2384 = vmatpush1.msra.mxu0 %v165
    %2385 = vmatprep.subr.mxu0 0.0
    %2386 = vmatpush1.msra.mxu0 %v166
    %2387 = vmatprep.subr.mxu0 0.0
    %2388 = vmatpush1.msra.mxu0 %v167
    %2389 = vmatprep.subr.mxu0 0.0
    %2390 = vmatpush1.msra.mxu0 0.0
    %2391 = vmatprep.subr.mxu0 0.0
    %2392 = vmatpush1.msra.mxu0 0.0
    %2393 = vmatprep.subr.mxu0 0.0
    %2394 = vmatpush1.msra.mxu0 0.0
    %2395 = vmatprep.subr.mxu0 0.0
    %2396 = vmatpush1.msra.mxu0 0.0
    %2397 = vmatprep.subr.mxu0 0.0
    %2398 = vmatpush1.msra.mxu0 0.0
    %2399 = vmatprep.subr.mxu0 0.0
    %2400 = vmatpush1.msra.mxu0 0.0
    %2401 = vmatprep.subr.mxu0 0.0
    %2402 = vmatpush1.msra.mxu0 0.0
    %2403 = vmatprep.subr.mxu0 0.0
    %2404 = vmatpush1.msra.mxu0 0.0
    %2405 = vmatprep.subr.mxu0 0.0
    %2406 = vmatpush1.msra.mxu0 0.0
    %2407 = vmatprep.subr.mxu0 0.0
    %2408 = vmatpush1.msra.mxu0 0.0
    %2409 = vmatprep.subr.mxu0 0.0
    %2410 = vmatpush1.msra.mxu0 0.0
    %2411 = vmatprep.subr.mxu0 0.0
    %2412 = vmatpush1.msra.mxu0 0.0
    %2413 = vmatprep.subr.mxu0 0.0
    %2414 = vmatpush1.msra.mxu0 0.0
    %2415 = vmatprep.subr.mxu0 0.0
    %2416 = vmatpush1.msra.mxu0 0.0
    %2417 = vmatprep.subr.mxu0 0.0
    %2418 = vmatpush1.msra.mxu0 0.0
    %2419 = vmatprep.subr.mxu0 0.0
    %2420 = vmatpush1.msra.mxu0 0.0
    %2421 = vmatprep.mubr.f32.mxu0 0.0
    %2422 = vmatmul.mubr.f32.gmra.mrb[0].mxu0 %v2350
    %v2423 = vpop.f32.mrb[0].mxu0
    %v2424 = vadd.f32 %v150, %v2423
    %v2425 = vpop.f32.mrb[0].mxu0
    %2426 = vmatprep.mubr.f32.mxu0 0.0
    %2427 = vmatmul.mubr.f32.gmra.mrb[0].mxu0 %v2351
    %v2428 = vpop.f32.mrb[0].mxu0
    %v2429 = vadd.f32 %v151, %v2428
    %v2430 = vpop.f32.mrb[0].mxu0
    %2431 = vdwg.mxu0
    %v2432 = vld [vmem:[#allocation13 + $0xb] sm:$0x1]
    %v2433 = vlaneseq
    %v2434 = vshrl.u32 %v2433, 7
    %v2435 = vsub.s32 0, %v2434
    %v2436 = vrot.slane %v2432, %v2435
    %v2437 = vadd.f32 %v2424, %v2436
    %v2438 = vadd.f32 %v2429, %v2436
    %v2439 = vtanh.pop %v2437
    %v2440 = vtanh.pop %v2438
    %2441 = vmatprep.subr.mxu0 0.0
    %2442 = vmatpush1.msra.mxu0 %v168
    %2443 = vmatprep.subr.mxu0 0.0
    %2444 = vmatpush1.msra.mxu0 %v169
    %2445 = vmatprep.subr.mxu0 0.0
    %2446 = vmatpush1.msra.mxu0 %v170
    %2447 = vmatprep.subr.mxu0 0.0
    %2448 = vmatpush1.msra.mxu0 %v171
    %2449 = vmatprep.subr.mxu0 0.0
    %2450 = vmatpush1.msra.mxu0 %v172
    %2451 = vmatprep.subr.mxu0 0.0
    %2452 = vmatpush1.msra.mxu0 %v173
    %2453 = vmatprep.subr.mxu0 0.0
    %2454 = vmatpush1.msra.mxu0 %v174
    %2455 = vmatprep.subr.mxu0 0.0
    %2456 = vmatpush1.msra.mxu0 %v175
    %2457 = vmatprep.subr.mxu0 0.0
    %2458 = vmatpush1.msra.mxu0 %v176
    %2459 = vmatprep.subr.mxu0 0.0
    %2460 = vmatpush1.msra.mxu0 %v177
    %2461 = vmatprep.subr.mxu0 0.0
    %2462 = vmatpush1.msra.mxu0 %v178
    %2463 = vmatprep.subr.mxu0 0.0
    %2464 = vmatpush1.msra.mxu0 %v179
    %2465 = vmatprep.subr.mxu0 0.0
    %2466 = vmatpush1.msra.mxu0 %v180
    %2467 = vmatprep.subr.mxu0 0.0
    %2468 = vmatpush1.msra.mxu0 %v181
    %2469 = vmatprep.subr.mxu0 0.0
    %2470 = vmatpush1.msra.mxu0 %v182
    %2471 = vmatprep.subr.mxu0 0.0
    %2472 = vmatpush1.msra.mxu0 %v183
    %2473 = vmatprep.subr.mxu0 0.0
    %2474 = vmatpush1.msra.mxu0 0.0
    %2475 = vmatprep.subr.mxu0 0.0
    %2476 = vmatpush1.msra.mxu0 0.0
    %2477 = vmatprep.subr.mxu0 0.0
    %2478 = vmatpush1.msra.mxu0 0.0
    %2479 = vmatprep.subr.mxu0 0.0
    %2480 = vmatpush1.msra.mxu0 0.0
    %2481 = vmatprep.subr.mxu0 0.0
    %2482 = vmatpush1.msra.mxu0 0.0
    %2483 = vmatprep.subr.mxu0 0.0
    %2484 = vmatpush1.msra.mxu0 0.0
    %2485 = vmatprep.subr.mxu0 0.0
    %2486 = vmatpush1.msra.mxu0 0.0
    %2487 = vmatprep.subr.mxu0 0.0
    %2488 = vmatpush1.msra.mxu0 0.0
    %2489 = vmatprep.subr.mxu0 0.0
    %2490 = vmatpush1.msra.mxu0 0.0
    %2491 = vmatprep.subr.mxu0 0.0
    %2492 = vmatpush1.msra.mxu0 0.0
    %2493 = vmatprep.subr.mxu0 0.0
    %2494 = vmatpush1.msra.mxu0 0.0
    %2495 = vmatprep.subr.mxu0 0.0
    %2496 = vmatpush1.msra.mxu0 0.0
    %2497 = vmatprep.subr.mxu0 0.0
    %2498 = vmatpush1.msra.mxu0 0.0
    %2499 = vmatprep.subr.mxu0 0.0
    %2500 = vmatpush1.msra.mxu0 0.0
    %2501 = vmatprep.subr.mxu0 0.0
    %2502 = vmatpush1.msra.mxu0 0.0
    %2503 = vmatprep.subr.mxu0 0.0
    %2504 = vmatpush1.msra.mxu0 0.0
    %2505 = vmatprep.mubr.f32.mxu0 0.0
    %2506 = vmatmul.mubr.f32.gmra.mrb[0].mxu0 %v2439
    %v2507 = vpop.f32.mrb[0].mxu0
    %v2508 = vadd.f32 %v284, %v2507
    %v2509 = vpop.f32.mrb[0].mxu0
    %2510 = vmatprep.mubr.f32.mxu0 0.0
    %2511 = vmatmul.mubr.f32.gmra.mrb[0].mxu0 %v2440
    %v2512 = vpop.f32.mrb[0].mxu0
    %v2513 = vadd.f32 %v284, %v2512
    %v2514 = vpop.f32.mrb[0].mxu0
    %2515 = vdwg.mxu0
    %v2516 = vstv %s2352
    %v2517 = vmul.f32 %v2516, %v2350
    %v2518 = vmul.f32 %v2516, %v2351
    %v2519 = vstv %s2353
    %v2520 = vmul.f32 %v2519, %v2508
    %v2521 = vmul.f32 %v2519, %v2513
    %v2522 = vsub.f32 %v2517, %v2520
    %v2523 = vsub.f32 %v2518, %v2521
    %v2524 = vmax.f32 %v2522, -1.0
    %v2525 = vmax.f32 %v2523, -1.0
    %v2526 = vmin.f32 %v2524, 1.0
    %v2527 = vmin.f32 %v2525, 1.0
    %v2528 = vstv %s2354
    %v2529 = vmul.f32 %v2528, %v2526
    %v2530 = vmul.f32 %v2528, %v2527
    %v2531 = vstv %s2355
    %v2532 = vmul.f32 %v2531, %v2350
    %v2533 = vmul.f32 %v2531, %v2351
    %v2534 = vadd.f32 %v2529, %v2532
    %v2535 = vadd.f32 %v2530, %v2533
    %s2536 = scalar_lea.vmem [#allocation10], 176
    %v2537 = vld [vmem:[%s2536] sm:$0xff]
    %v2538 = vld [vmem:[%s2536 + $0x8] sm:$0xff]
    %v2539 = vstv %s2356
    %v2540 = vmul.f32 %v2539, %v2537
    %v2541 = vmul.f32 %v2539, %v2538
    %v2542 = vadd.f32 %v2534, %v2540
    %v2543 = vadd.f32 %v2535, %v2541
    %v2544 = vmul.f32 %v2542, %v144
    %v2545 = vmul.f32 %v2543, %v145
    %v2546 = vadd.f32 %v148, %v2544
    %v2547 = vadd.f32 %v149, %v2545
    %s2548 = sld [smem:[#allocation2 + $0x61]]
    %s2549 = sld [smem:[#allocation2 + $0x62]]
    %s2550 = sld [smem:[#allocation2 + $0x63]]
    %s2551 = sld [smem:[#allocation2 + $0x64]]
    %s2552 = sld [smem:[#allocation2 + $0x65]]
    %2553 = vmatprep.subr.mxu0 0.0
    %2554 = vmatpush1.msra.mxu0 %v152
    %2555 = vmatprep.subr.mxu0 0.0
    %2556 = vmatpush1.msra.mxu0 %v153
    %2557 = vmatprep.subr.mxu0 0.0
    %2558 = vmatpush1.msra.mxu0 %v154
    %2559 = vmatprep.subr.mxu0 0.0
    %2560 = vmatpush1.msra.mxu0 %v155
    %2561 = vmatprep.subr.mxu0 0.0
    %2562 = vmatpush1.msra.mxu0 %v156
    %2563 = vmatprep.subr.mxu0 0.0
    %2564 = vmatpush1.msra.mxu0 %v157
    %2565 = vmatprep.subr.mxu0 0.0
    %2566 = vmatpush1.msra.mxu0 %v158
    %2567 = vmatprep.subr.mxu0 0.0
    %2568 = vmatpush1.msra.mxu0 %v159
    %2569 = vmatprep.subr.mxu0 0.0
    %2570 = vmatpush1.msra.mxu0 %v160
    %2571 = vmatprep.subr.mxu0 0.0
    %2572 = vmatpush1.msra.mxu0 %v161
    %2573 = vmatprep.subr.mxu0 0.0
    %2574 = vmatpush1.msra.mxu0 %v162
    %2575 = vmatprep.subr.mxu0 0.0
    %2576 = vmatpush1.msra.mxu0 %v163
    %2577 = vmatprep.subr.mxu0 0.0
    %2578 = vmatpush1.msra.mxu0 %v164
    %2579 = vmatprep.subr.mxu0 0.0
    %2580 = vmatpush1.msra.mxu0 %v165
    %2581 = vmatprep.subr.mxu0 0.0
    %2582 = vmatpush1.msra.mxu0 %v166
    %2583 = vmatprep.subr.mxu0 0.0
    %2584 = vmatpush1.msra.mxu0 %v167
    %2585 = vmatprep.subr.mxu0 0.0
    %2586 = vmatpush1.msra.mxu0 0.0
    %2587 = vmatprep.subr.mxu0 0.0
    %2588 = vmatpush1.msra.mxu0 0.0
    %2589 = vmatprep.subr.mxu0 0.0
    %2590 = vmatpush1.msra.mxu0 0.0
    %2591 = vmatprep.subr.mxu0 0.0
    %2592 = vmatpush1.msra.mxu0 0.0
    %2593 = vmatprep.subr.mxu0 0.0
    %2594 = vmatpush1.msra.mxu0 0.0
    %2595 = vmatprep.subr.mxu0 0.0
    %2596 = vmatpush1.msra.mxu0 0.0
    %2597 = vmatprep.subr.mxu0 0.0
    %2598 = vmatpush1.msra.mxu0 0.0
    %2599 = vmatprep.subr.mxu0 0.0
    %2600 = vmatpush1.msra.mxu0 0.0
    %2601 = vmatprep.subr.mxu0 0.0
    %2602 = vmatpush1.msra.mxu0 0.0
    %2603 = vmatprep.subr.mxu0 0.0
    %2604 = vmatpush1.msra.mxu0 0.0
    %2605 = vmatprep.subr.mxu0 0.0
    %2606 = vmatpush1.msra.mxu0 0.0
    %2607 = vmatprep.subr.mxu0 0.0
    %2608 = vmatpush1.msra.mxu0 0.0
    %2609 = vmatprep.subr.mxu0 0.0
    %2610 = vmatpush1.msra.mxu0 0.0
    %2611 = vmatprep.subr.mxu0 0.0
    %2612 = vmatpush1.msra.mxu0 0.0
    %2613 = vmatprep.subr.mxu0 0.0
    %2614 = vmatpush1.msra.mxu0 0.0
    %2615 = vmatprep.subr.mxu0 0.0
    %2616 = vmatpush1.msra.mxu0 0.0
    %2617 = vmatprep.mubr.f32.mxu0 0.0
    %2618 = vmatmul.mubr.f32.gmra.mrb[0].mxu0 %v2546
    %v2619 = vpop.f32.mrb[0].mxu0
    %v2620 = vadd.f32 %v150, %v2619
    %v2621 = vpop.f32.mrb[0].mxu0
    %2622 = vmatprep.mubr.f32.mxu0 0.0
    %2623 = vmatmul.mubr.f32.gmra.mrb[0].mxu0 %v2547
    %v2624 = vpop.f32.mrb[0].mxu0
    %v2625 = vadd.f32 %v151, %v2624
    %v2626 = vpop.f32.mrb[0].mxu0
    %2627 = vdwg.mxu0
    %v2628 = vld [vmem:[#allocation13 + $0xc] sm:$0x1]
    %v2629 = vlaneseq
    %v2630 = vshrl.u32 %v2629, 7
    %v2631 = vsub.s32 0, %v2630
    %v2632 = vrot.slane %v2628, %v2631
    %v2633 = vadd.f32 %v2620, %v2632
    %v2634 = vadd.f32 %v2625, %v2632
    %v2635 = vtanh.pop %v2633
    %v2636 = vtanh.pop %v2634
    %2637 = vmatprep.subr.mxu0 0.0
    %2638 = vmatpush1.msra.mxu0 %v168
    %2639 = vmatprep.subr.mxu0 0.0
    %2640 = vmatpush1.msra.mxu0 %v169
    %2641 = vmatprep.subr.mxu0 0.0
    %2642 = vmatpush1.msra.mxu0 %v170
    %2643 = vmatprep.subr.mxu0 0.0
    %2644 = vmatpush1.msra.mxu0 %v171
    %2645 = vmatprep.subr.mxu0 0.0
    %2646 = vmatpush1.msra.mxu0 %v172
    %2647 = vmatprep.subr.mxu0 0.0
    %2648 = vmatpush1.msra.mxu0 %v173
    %2649 = vmatprep.subr.mxu0 0.0
    %2650 = vmatpush1.msra.mxu0 %v174
    %2651 = vmatprep.subr.mxu0 0.0
    %2652 = vmatpush1.msra.mxu0 %v175
    %2653 = vmatprep.subr.mxu0 0.0
    %2654 = vmatpush1.msra.mxu0 %v176
    %2655 = vmatprep.subr.mxu0 0.0
    %2656 = vmatpush1.msra.mxu0 %v177
    %2657 = vmatprep.subr.mxu0 0.0
    %2658 = vmatpush1.msra.mxu0 %v178
    %2659 = vmatprep.subr.mxu0 0.0
    %2660 = vmatpush1.msra.mxu0 %v179
    %2661 = vmatprep.subr.mxu0 0.0
    %2662 = vmatpush1.msra.mxu0 %v180
    %2663 = vmatprep.subr.mxu0 0.0
    %2664 = vmatpush1.msra.mxu0 %v181
    %2665 = vmatprep.subr.mxu0 0.0
    %2666 = vmatpush1.msra.mxu0 %v182
    %2667 = vmatprep.subr.mxu0 0.0
    %2668 = vmatpush1.msra.mxu0 %v183
    %2669 = vmatprep.subr.mxu0 0.0
    %2670 = vmatpush1.msra.mxu0 0.0
    %2671 = vmatprep.subr.mxu0 0.0
    %2672 = vmatpush1.msra.mxu0 0.0
    %2673 = vmatprep.subr.mxu0 0.0
    %2674 = vmatpush1.msra.mxu0 0.0
    %2675 = vmatprep.subr.mxu0 0.0
    %2676 = vmatpush1.msra.mxu0 0.0
    %2677 = vmatprep.subr.mxu0 0.0
    %2678 = vmatpush1.msra.mxu0 0.0
    %2679 = vmatprep.subr.mxu0 0.0
    %2680 = vmatpush1.msra.mxu0 0.0
    %2681 = vmatprep.subr.mxu0 0.0
    %2682 = vmatpush1.msra.mxu0 0.0
    %2683 = vmatprep.subr.mxu0 0.0
    %2684 = vmatpush1.msra.mxu0 0.0
    %2685 = vmatprep.subr.mxu0 0.0
    %2686 = vmatpush1.msra.mxu0 0.0
    %2687 = vmatprep.subr.mxu0 0.0
    %2688 = vmatpush1.msra.mxu0 0.0
    %2689 = vmatprep.subr.mxu0 0.0
    %2690 = vmatpush1.msra.mxu0 0.0
    %2691 = vmatprep.subr.mxu0 0.0
    %2692 = vmatpush1.msra.mxu0 0.0
    %2693 = vmatprep.subr.mxu0 0.0
    %2694 = vmatpush1.msra.mxu0 0.0
    %2695 = vmatprep.subr.mxu0 0.0
    %2696 = vmatpush1.msra.mxu0 0.0
    %2697 = vmatprep.subr.mxu0 0.0
    %2698 = vmatpush1.msra.mxu0 0.0
    %2699 = vmatprep.subr.mxu0 0.0
    %2700 = vmatpush1.msra.mxu0 0.0
    %2701 = vmatprep.mubr.f32.mxu0 0.0
    %2702 = vmatmul.mubr.f32.gmra.mrb[0].mxu0 %v2635
    %v2703 = vpop.f32.mrb[0].mxu0
    %v2704 = vadd.f32 %v284, %v2703
    %v2705 = vpop.f32.mrb[0].mxu0
    %2706 = vmatprep.mubr.f32.mxu0 0.0
    %2707 = vmatmul.mubr.f32.gmra.mrb[0].mxu0 %v2636
    %v2708 = vpop.f32.mrb[0].mxu0
    %v2709 = vadd.f32 %v284, %v2708
    %v2710 = vpop.f32.mrb[0].mxu0
    %2711 = vdwg.mxu0
    %v2712 = vstv %s2548
    %v2713 = vmul.f32 %v2712, %v2546
    %v2714 = vmul.f32 %v2712, %v2547
    %v2715 = vstv %s2549
    %v2716 = vmul.f32 %v2715, %v2704
    %v2717 = vmul.f32 %v2715, %v2709
    %v2718 = vsub.f32 %v2713, %v2716
    %v2719 = vsub.f32 %v2714, %v2717
    %v2720 = vmax.f32 %v2718, -1.0
    %v2721 = vmax.f32 %v2719, -1.0
    %v2722 = vmin.f32 %v2720, 1.0
    %v2723 = vmin.f32 %v2721, 1.0
    %v2724 = vstv %s2550
    %v2725 = vmul.f32 %v2724, %v2722
    %v2726 = vmul.f32 %v2724, %v2723
    %v2727 = vstv %s2551
    %v2728 = vmul.f32 %v2727, %v2546
    %v2729 = vmul.f32 %v2727, %v2547
    %v2730 = vadd.f32 %v2725, %v2728
    %v2731 = vadd.f32 %v2726, %v2729
    %s2732 = scalar_lea.vmem [#allocation10], 192
    %v2733 = vld [vmem:[%s2732] sm:$0xff]
    %v2734 = vld [vmem:[%s2732 + $0x8] sm:$0xff]
    %v2735 = vstv %s2552
    %v2736 = vmul.f32 %v2735, %v2733
    %v2737 = vmul.f32 %v2735, %v2734
    %v2738 = vadd.f32 %v2730, %v2736
    %v2739 = vadd.f32 %v2731, %v2737
    %v2740 = vmul.f32 %v2738, %v144
    %v2741 = vmul.f32 %v2739, %v145
    %v2742 = vadd.f32 %v148, %v2740
    %v2743 = vadd.f32 %v149, %v2741
    %s2744 = sld [smem:[#allocation2 + $0x69]]
    %s2745 = sld [smem:[#allocation2 + $0x6a]]
    %s2746 = sld [smem:[#allocation2 + $0x6b]]
    %s2747 = sld [smem:[#allocation2 + $0x6c]]
    %s2748 = sld [smem:[#allocation2 + $0x6d]]
    %2749 = vmatprep.subr.mxu0 0.0
    %2750 = vmatpush1.msra.mxu0 %v152
    %2751 = vmatprep.subr.mxu0 0.0
    %2752 = vmatpush1.msra.mxu0 %v153
    %2753 = vmatprep.subr.mxu0 0.0
    %2754 = vmatpush1.msra.mxu0 %v154
    %2755 = vmatprep.subr.mxu0 0.0
    %2756 = vmatpush1.msra.mxu0 %v155
    %2757 = vmatprep.subr.mxu0 0.0
    %2758 = vmatpush1.msra.mxu0 %v156
    %2759 = vmatprep.subr.mxu0 0.0
    %2760 = vmatpush1.msra.mxu0 %v157
    %2761 = vmatprep.subr.mxu0 0.0
    %2762 = vmatpush1.msra.mxu0 %v158
    %2763 = vmatprep.subr.mxu0 0.0
    %2764 = vmatpush1.msra.mxu0 %v159
    %2765 = vmatprep.subr.mxu0 0.0
    %2766 = vmatpush1.msra.mxu0 %v160
    %2767 = vmatprep.subr.mxu0 0.0
    %2768 = vmatpush1.msra.mxu0 %v161
    %2769 = vmatprep.subr.mxu0 0.0
    %2770 = vmatpush1.msra.mxu0 %v162
    %2771 = vmatprep.subr.mxu0 0.0
    %2772 = vmatpush1.msra.mxu0 %v163
    %2773 = vmatprep.subr.mxu0 0.0
    %2774 = vmatpush1.msra.mxu0 %v164
    %2775 = vmatprep.subr.mxu0 0.0
    %2776 = vmatpush1.msra.mxu0 %v165
    %2777 = vmatprep.subr.mxu0 0.0
    %2778 = vmatpush1.msra.mxu0 %v166
    %2779 = vmatprep.subr.mxu0 0.0
    %2780 = vmatpush1.msra.mxu0 %v167
    %2781 = vmatprep.subr.mxu0 0.0
    %2782 = vmatpush1.msra.mxu0 0.0
    %2783 = vmatprep.subr.mxu0 0.0
    %2784 = vmatpush1.msra.mxu0 0.0
    %2785 = vmatprep.subr.mxu0 0.0
    %2786 = vmatpush1.msra.mxu0 0.0
    %2787 = vmatprep.subr.mxu0 0.0
    %2788 = vmatpush1.msra.mxu0 0.0
    %2789 = vmatprep.subr.mxu0 0.0
    %2790 = vmatpush1.msra.mxu0 0.0
    %2791 = vmatprep.subr.mxu0 0.0
    %2792 = vmatpush1.msra.mxu0 0.0
    %2793 = vmatprep.subr.mxu0 0.0
    %2794 = vmatpush1.msra.mxu0 0.0
    %2795 = vmatprep.subr.mxu0 0.0
    %2796 = vmatpush1.msra.mxu0 0.0
    %2797 = vmatprep.subr.mxu0 0.0
    %2798 = vmatpush1.msra.mxu0 0.0
    %2799 = vmatprep.subr.mxu0 0.0
    %2800 = vmatpush1.msra.mxu0 0.0
    %2801 = vmatprep.subr.mxu0 0.0
    %2802 = vmatpush1.msra.mxu0 0.0
    %2803 = vmatprep.subr.mxu0 0.0
    %2804 = vmatpush1.msra.mxu0 0.0
    %2805 = vmatprep.subr.mxu0 0.0
    %2806 = vmatpush1.msra.mxu0 0.0
    %2807 = vmatprep.subr.mxu0 0.0
    %2808 = vmatpush1.msra.mxu0 0.0
    %2809 = vmatprep.subr.mxu0 0.0
    %2810 = vmatpush1.msra.mxu0 0.0
    %2811 = vmatprep.subr.mxu0 0.0
    %2812 = vmatpush1.msra.mxu0 0.0
    %2813 = vmatprep.mubr.f32.mxu0 0.0
    %2814 = vmatmul.mubr.f32.gmra.mrb[0].mxu0 %v2742
    %v2815 = vpop.f32.mrb[0].mxu0
    %v2816 = vadd.f32 %v150, %v2815
    %v2817 = vpop.f32.mrb[0].mxu0
    %2818 = vmatprep.mubr.f32.mxu0 0.0
    %2819 = vmatmul.mubr.f32.gmra.mrb[0].mxu0 %v2743
    %v2820 = vpop.f32.mrb[0].mxu0
    %v2821 = vadd.f32 %v151, %v2820
    %v2822 = vpop.f32.mrb[0].mxu0
    %2823 = vdwg.mxu0
    %v2824 = vld [vmem:[#allocation13 + $0xd] sm:$0x1]
    %v2825 = vlaneseq
    %v2826 = vshrl.u32 %v2825, 7
    %v2827 = vsub.s32 0, %v2826
    %v2828 = vrot.slane %v2824, %v2827
    %v2829 = vadd.f32 %v2816, %v2828
    %v2830 = vadd.f32 %v2821, %v2828
    %v2831 = vtanh.pop %v2829
    %v2832 = vtanh.pop %v2830
    %2833 = vmatprep.subr.mxu0 0.0
    %2834 = vmatpush1.msra.mxu0 %v168
    %2835 = vmatprep.subr.mxu0 0.0
    %2836 = vmatpush1.msra.mxu0 %v169
    %2837 = vmatprep.subr.mxu0 0.0
    %2838 = vmatpush1.msra.mxu0 %v170
    %2839 = vmatprep.subr.mxu0 0.0
    %2840 = vmatpush1.msra.mxu0 %v171
    %2841 = vmatprep.subr.mxu0 0.0
    %2842 = vmatpush1.msra.mxu0 %v172
    %2843 = vmatprep.subr.mxu0 0.0
    %2844 = vmatpush1.msra.mxu0 %v173
    %2845 = vmatprep.subr.mxu0 0.0
    %2846 = vmatpush1.msra.mxu0 %v174
    %2847 = vmatprep.subr.mxu0 0.0
    %2848 = vmatpush1.msra.mxu0 %v175
    %2849 = vmatprep.subr.mxu0 0.0
    %2850 = vmatpush1.msra.mxu0 %v176
    %2851 = vmatprep.subr.mxu0 0.0
    %2852 = vmatpush1.msra.mxu0 %v177
    %2853 = vmatprep.subr.mxu0 0.0
    %2854 = vmatpush1.msra.mxu0 %v178
    %2855 = vmatprep.subr.mxu0 0.0
    %2856 = vmatpush1.msra.mxu0 %v179
    %2857 = vmatprep.subr.mxu0 0.0
    %2858 = vmatpush1.msra.mxu0 %v180
    %2859 = vmatprep.subr.mxu0 0.0
    %2860 = vmatpush1.msra.mxu0 %v181
    %2861 = vmatprep.subr.mxu0 0.0
    %2862 = vmatpush1.msra.mxu0 %v182
    %2863 = vmatprep.subr.mxu0 0.0
    %2864 = vmatpush1.msra.mxu0 %v183
    %2865 = vmatprep.subr.mxu0 0.0
    %2866 = vmatpush1.msra.mxu0 0.0
    %2867 = vmatprep.subr.mxu0 0.0
    %2868 = vmatpush1.msra.mxu0 0.0
    %2869 = vmatprep.subr.mxu0 0.0
    %2870 = vmatpush1.msra.mxu0 0.0
    %2871 = vmatprep.subr.mxu0 0.0
    %2872 = vmatpush1.msra.mxu0 0.0
    %2873 = vmatprep.subr.mxu0 0.0
    %2874 = vmatpush1.msra.mxu0 0.0
    %2875 = vmatprep.subr.mxu0 0.0
    %2876 = vmatpush1.msra.mxu0 0.0
    %2877 = vmatprep.subr.mxu0 0.0
    %2878 = vmatpush1.msra.mxu0 0.0
    %2879 = vmatprep.subr.mxu0 0.0
    %2880 = vmatpush1.msra.mxu0 0.0
    %2881 = vmatprep.subr.mxu0 0.0
    %2882 = vmatpush1.msra.mxu0 0.0
    %2883 = vmatprep.subr.mxu0 0.0
    %2884 = vmatpush1.msra.mxu0 0.0
    %2885 = vmatprep.subr.mxu0 0.0
    %2886 = vmatpush1.msra.mxu0 0.0
    %2887 = vmatprep.subr.mxu0 0.0
    %2888 = vmatpush1.msra.mxu0 0.0
    %2889 = vmatprep.subr.mxu0 0.0
    %2890 = vmatpush1.msra.mxu0 0.0
    %2891 = vmatprep.subr.mxu0 0.0
    %2892 = vmatpush1.msra.mxu0 0.0
    %2893 = vmatprep.subr.mxu0 0.0
    %2894 = vmatpush1.msra.mxu0 0.0
    %2895 = vmatprep.subr.mxu0 0.0
    %2896 = vmatpush1.msra.mxu0 0.0
    %2897 = vmatprep.mubr.f32.mxu0 0.0
    %2898 = vmatmul.mubr.f32.gmra.mrb[0].mxu0 %v2831
    %v2899 = vpop.f32.mrb[0].mxu0
    %v2900 = vadd.f32 %v284, %v2899
    %v2901 = vpop.f32.mrb[0].mxu0
    %2902 = vmatprep.mubr.f32.mxu0 0.0
    %2903 = vmatmul.mubr.f32.gmra.mrb[0].mxu0 %v2832
    %v2904 = vpop.f32.mrb[0].mxu0
    %v2905 = vadd.f32 %v284, %v2904
    %v2906 = vpop.f32.mrb[0].mxu0
    %2907 = vdwg.mxu0
    %v2908 = vstv %s2744
    %v2909 = vmul.f32 %v2908, %v2742
    %v2910 = vmul.f32 %v2908, %v2743
    %v2911 = vstv %s2745
    %v2912 = vmul.f32 %v2911, %v2900
    %v2913 = vmul.f32 %v2911, %v2905
    %v2914 = vsub.f32 %v2909, %v2912
    %v2915 = vsub.f32 %v2910, %v2913
    %v2916 = vmax.f32 %v2914, -1.0
    %v2917 = vmax.f32 %v2915, -1.0
    %v2918 = vmin.f32 %v2916, 1.0
    %v2919 = vmin.f32 %v2917, 1.0
    %v2920 = vstv %s2746
    %v2921 = vmul.f32 %v2920, %v2918
    %v2922 = vmul.f32 %v2920, %v2919
    %v2923 = vstv %s2747
    %v2924 = vmul.f32 %v2923, %v2742
    %v2925 = vmul.f32 %v2923, %v2743
    %v2926 = vadd.f32 %v2921, %v2924
    %v2927 = vadd.f32 %v2922, %v2925
    %s2928 = scalar_lea.vmem [#allocation10], 208
    %v2929 = vld [vmem:[%s2928] sm:$0xff]
    %v2930 = vld [vmem:[%s2928 + $0x8] sm:$0xff]
    %v2931 = vstv %s2748
    %v2932 = vmul.f32 %v2931, %v2929
    %v2933 = vmul.f32 %v2931, %v2930
    %v2934 = vadd.f32 %v2926, %v2932
    %v2935 = vadd.f32 %v2927, %v2933
    %v2936 = vmul.f32 %v2934, %v144
    %v2937 = vmul.f32 %v2935, %v145
    %v2938 = vadd.f32 %v148, %v2936
    %v2939 = vadd.f32 %v149, %v2937
    %s2940 = sld [smem:[#allocation2 + $0x71]]
    %s2941 = sld [smem:[#allocation2 + $0x72]]
    %s2942 = sld [smem:[#allocation2 + $0x73]]
    %s2943 = sld [smem:[#allocation2 + $0x74]]
    %s2944 = sld [smem:[#allocation2 + $0x75]]
    %2945 = vmatprep.subr.mxu0 0.0
    %2946 = vmatpush1.msra.mxu0 %v152
    %2947 = vmatprep.subr.mxu0 0.0
    %2948 = vmatpush1.msra.mxu0 %v153
    %2949 = vmatprep.subr.mxu0 0.0
    %2950 = vmatpush1.msra.mxu0 %v154
    %2951 = vmatprep.subr.mxu0 0.0
    %2952 = vmatpush1.msra.mxu0 %v155
    %2953 = vmatprep.subr.mxu0 0.0
    %2954 = vmatpush1.msra.mxu0 %v156
    %2955 = vmatprep.subr.mxu0 0.0
    %2956 = vmatpush1.msra.mxu0 %v157
    %2957 = vmatprep.subr.mxu0 0.0
    %2958 = vmatpush1.msra.mxu0 %v158
    %2959 = vmatprep.subr.mxu0 0.0
    %2960 = vmatpush1.msra.mxu0 %v159
    %2961 = vmatprep.subr.mxu0 0.0
    %2962 = vmatpush1.msra.mxu0 %v160
    %2963 = vmatprep.subr.mxu0 0.0
    %2964 = vmatpush1.msra.mxu0 %v161
    %2965 = vmatprep.subr.mxu0 0.0
    %2966 = vmatpush1.msra.mxu0 %v162
    %2967 = vmatprep.subr.mxu0 0.0
    %2968 = vmatpush1.msra.mxu0 %v163
    %2969 = vmatprep.subr.mxu0 0.0
    %2970 = vmatpush1.msra.mxu0 %v164
    %2971 = vmatprep.subr.mxu0 0.0
    %2972 = vmatpush1.msra.mxu0 %v165
    %2973 = vmatprep.subr.mxu0 0.0
    %2974 = vmatpush1.msra.mxu0 %v166
    %2975 = vmatprep.subr.mxu0 0.0
    %2976 = vmatpush1.msra.mxu0 %v167
    %2977 = vmatprep.subr.mxu0 0.0
    %2978 = vmatpush1.msra.mxu0 0.0
    %2979 = vmatprep.subr.mxu0 0.0
    %2980 = vmatpush1.msra.mxu0 0.0
    %2981 = vmatprep.subr.mxu0 0.0
    %2982 = vmatpush1.msra.mxu0 0.0
    %2983 = vmatprep.subr.mxu0 0.0
    %2984 = vmatpush1.msra.mxu0 0.0
    %2985 = vmatprep.subr.mxu0 0.0
    %2986 = vmatpush1.msra.mxu0 0.0
    %2987 = vmatprep.subr.mxu0 0.0
    %2988 = vmatpush1.msra.mxu0 0.0
    %2989 = vmatprep.subr.mxu0 0.0
    %2990 = vmatpush1.msra.mxu0 0.0
    %2991 = vmatprep.subr.mxu0 0.0
    %2992 = vmatpush1.msra.mxu0 0.0
    %2993 = vmatprep.subr.mxu0 0.0
    %2994 = vmatpush1.msra.mxu0 0.0
    %2995 = vmatprep.subr.mxu0 0.0
    %2996 = vmatpush1.msra.mxu0 0.0
    %2997 = vmatprep.subr.mxu0 0.0
    %2998 = vmatpush1.msra.mxu0 0.0
    %2999 = vmatprep.subr.mxu0 0.0
    %3000 = vmatpush1.msra.mxu0 0.0
    %3001 = vmatprep.subr.mxu0 0.0
    %3002 = vmatpush1.msra.mxu0 0.0
    %3003 = vmatprep.subr.mxu0 0.0
    %3004 = vmatpush1.msra.mxu0 0.0
    %3005 = vmatprep.subr.mxu0 0.0
    %3006 = vmatpush1.msra.mxu0 0.0
    %3007 = vmatprep.subr.mxu0 0.0
    %3008 = vmatpush1.msra.mxu0 0.0
    %3009 = vmatprep.mubr.f32.mxu0 0.0
    %3010 = vmatmul.mubr.f32.gmra.mrb[0].mxu0 %v2938
    %v3011 = vpop.f32.mrb[0].mxu0
    %v3012 = vadd.f32 %v150, %v3011
    %v3013 = vpop.f32.mrb[0].mxu0
    %3014 = vmatprep.mubr.f32.mxu0 0.0
    %3015 = vmatmul.mubr.f32.gmra.mrb[0].mxu0 %v2939
    %v3016 = vpop.f32.mrb[0].mxu0
    %v3017 = vadd.f32 %v151, %v3016
    %v3018 = vpop.f32.mrb[0].mxu0
    %3019 = vdwg.mxu0
    %v3020 = vld [vmem:[#allocation13 + $0xe] sm:$0x1]
    %v3021 = vlaneseq
    %v3022 = vshrl.u32 %v3021, 7
    %v3023 = vsub.s32 0, %v3022
    %v3024 = vrot.slane %v3020, %v3023
    %v3025 = vadd.f32 %v3012, %v3024
    %v3026 = vadd.f32 %v3017, %v3024
    %v3027 = vtanh.pop %v3025
    %v3028 = vtanh.pop %v3026
    %3029 = vmatprep.subr.mxu0 0.0
    %3030 = vmatpush1.msra.mxu0 %v168
    %3031 = vmatprep.subr.mxu0 0.0
    %3032 = vmatpush1.msra.mxu0 %v169
    %3033 = vmatprep.subr.mxu0 0.0
    %3034 = vmatpush1.msra.mxu0 %v170
    %3035 = vmatprep.subr.mxu0 0.0
    %3036 = vmatpush1.msra.mxu0 %v171
    %3037 = vmatprep.subr.mxu0 0.0
    %3038 = vmatpush1.msra.mxu0 %v172
    %3039 = vmatprep.subr.mxu0 0.0
    %3040 = vmatpush1.msra.mxu0 %v173
    %3041 = vmatprep.subr.mxu0 0.0
    %3042 = vmatpush1.msra.mxu0 %v174
    %3043 = vmatprep.subr.mxu0 0.0
    %3044 = vmatpush1.msra.mxu0 %v175
    %3045 = vmatprep.subr.mxu0 0.0
    %3046 = vmatpush1.msra.mxu0 %v176
    %3047 = vmatprep.subr.mxu0 0.0
    %3048 = vmatpush1.msra.mxu0 %v177
    %3049 = vmatprep.subr.mxu0 0.0
    %3050 = vmatpush1.msra.mxu0 %v178
    %3051 = vmatprep.subr.mxu0 0.0
    %3052 = vmatpush1.msra.mxu0 %v179
    %3053 = vmatprep.subr.mxu0 0.0
    %3054 = vmatpush1.msra.mxu0 %v180
    %3055 = vmatprep.subr.mxu0 0.0
    %3056 = vmatpush1.msra.mxu0 %v181
    %3057 = vmatprep.subr.mxu0 0.0
    %3058 = vmatpush1.msra.mxu0 %v182
    %3059 = vmatprep.subr.mxu0 0.0
    %3060 = vmatpush1.msra.mxu0 %v183
    %3061 = vmatprep.subr.mxu0 0.0
    %3062 = vmatpush1.msra.mxu0 0.0
    %3063 = vmatprep.subr.mxu0 0.0
    %3064 = vmatpush1.msra.mxu0 0.0
    %3065 = vmatprep.subr.mxu0 0.0
    %3066 = vmatpush1.msra.mxu0 0.0
    %3067 = vmatprep.subr.mxu0 0.0
    %3068 = vmatpush1.msra.mxu0 0.0
    %3069 = vmatprep.subr.mxu0 0.0
    %3070 = vmatpush1.msra.mxu0 0.0
    %3071 = vmatprep.subr.mxu0 0.0
    %3072 = vmatpush1.msra.mxu0 0.0
    %3073 = vmatprep.subr.mxu0 0.0
    %3074 = vmatpush1.msra.mxu0 0.0
    %3075 = vmatprep.subr.mxu0 0.0
    %3076 = vmatpush1.msra.mxu0 0.0
    %3077 = vmatprep.subr.mxu0 0.0
    %3078 = vmatpush1.msra.mxu0 0.0
    %3079 = vmatprep.subr.mxu0 0.0
    %3080 = vmatpush1.msra.mxu0 0.0
    %3081 = vmatprep.subr.mxu0 0.0
    %3082 = vmatpush1.msra.mxu0 0.0
    %3083 = vmatprep.subr.mxu0 0.0
    %3084 = vmatpush1.msra.mxu0 0.0
    %3085 = vmatprep.subr.mxu0 0.0
    %3086 = vmatpush1.msra.mxu0 0.0
    %3087 = vmatprep.subr.mxu0 0.0
    %3088 = vmatpush1.msra.mxu0 0.0
    %3089 = vmatprep.subr.mxu0 0.0
    %3090 = vmatpush1.msra.mxu0 0.0
    %3091 = vmatprep.subr.mxu0 0.0
    %3092 = vmatpush1.msra.mxu0 0.0
    %3093 = vmatprep.mubr.f32.mxu0 0.0
    %3094 = vmatmul.mubr.f32.gmra.mrb[0].mxu0 %v3027
    %v3095 = vpop.f32.mrb[0].mxu0
    %v3096 = vadd.f32 %v284, %v3095
    %v3097 = vpop.f32.mrb[0].mxu0
    %3098 = vmatprep.mubr.f32.mxu0 0.0
    %3099 = vmatmul.mubr.f32.gmra.mrb[0].mxu0 %v3028
    %v3100 = vpop.f32.mrb[0].mxu0
    %v3101 = vadd.f32 %v284, %v3100
    %v3102 = vpop.f32.mrb[0].mxu0
    %3103 = vdwg.mxu0
    %v3104 = vstv %s2940
    %v3105 = vmul.f32 %v3104, %v2938
    %v3106 = vmul.f32 %v3104, %v2939
    %v3107 = vstv %s2941
    %v3108 = vmul.f32 %v3107, %v3096
    %v3109 = vmul.f32 %v3107, %v3101
    %v3110 = vsub.f32 %v3105, %v3108
    %v3111 = vsub.f32 %v3106, %v3109
    %v3112 = vmax.f32 %v3110, -1.0
    %v3113 = vmax.f32 %v3111, -1.0
    %v3114 = vmin.f32 %v3112, 1.0
    %v3115 = vmin.f32 %v3113, 1.0
    %v3116 = vstv %s2942
    %v3117 = vmul.f32 %v3116, %v3114
    %v3118 = vmul.f32 %v3116, %v3115
    %v3119 = vstv %s2943
    %v3120 = vmul.f32 %v3119, %v2938
    %v3121 = vmul.f32 %v3119, %v2939
    %v3122 = vadd.f32 %v3117, %v3120
    %v3123 = vadd.f32 %v3118, %v3121
    %s3124 = scalar_lea.vmem [#allocation10], 224
    %v3125 = vld [vmem:[%s3124] sm:$0xff]
    %v3126 = vld [vmem:[%s3124 + $0x8] sm:$0xff]
    %v3127 = vstv %s2944
    %v3128 = vmul.f32 %v3127, %v3125
    %v3129 = vmul.f32 %v3127, %v3126
    %v3130 = vadd.f32 %v3122, %v3128
    %v3131 = vadd.f32 %v3123, %v3129
    %v3132 = vmul.f32 %v3130, %v144
    %v3133 = vmul.f32 %v3131, %v145
    %v3134 = vadd.f32 %v148, %v3132
    %v3135 = vadd.f32 %v149, %v3133
    %s3136 = sld [smem:[#allocation2 + $0x79]]
    %s3137 = sld [smem:[#allocation2 + $0x7a]]
    %s3138 = sld [smem:[#allocation2 + $0x7b]]
    %s3139 = sld [smem:[#allocation2 + $0x7c]]
    %s3140 = sld [smem:[#allocation2 + $0x7d]]
    %3141 = vmatprep.subr.mxu0 0.0
    %3142 = vmatpush1.msra.mxu0 %v152
    %3143 = vmatprep.subr.mxu0 0.0
    %3144 = vmatpush1.msra.mxu0 %v153
    %3145 = vmatprep.subr.mxu0 0.0
    %3146 = vmatpush1.msra.mxu0 %v154
    %3147 = vmatprep.subr.mxu0 0.0
    %3148 = vmatpush1.msra.mxu0 %v155
    %3149 = vmatprep.subr.mxu0 0.0
    %3150 = vmatpush1.msra.mxu0 %v156
    %3151 = vmatprep.subr.mxu0 0.0
    %3152 = vmatpush1.msra.mxu0 %v157
    %3153 = vmatprep.subr.mxu0 0.0
    %3154 = vmatpush1.msra.mxu0 %v158
    %3155 = vmatprep.subr.mxu0 0.0
    %3156 = vmatpush1.msra.mxu0 %v159
    %3157 = vmatprep.subr.mxu0 0.0
    %3158 = vmatpush1.msra.mxu0 %v160
    %3159 = vmatprep.subr.mxu0 0.0
    %3160 = vmatpush1.msra.mxu0 %v161
    %3161 = vmatprep.subr.mxu0 0.0
    %3162 = vmatpush1.msra.mxu0 %v162
    %3163 = vmatprep.subr.mxu0 0.0
    %3164 = vmatpush1.msra.mxu0 %v163
    %3165 = vmatprep.subr.mxu0 0.0
    %3166 = vmatpush1.msra.mxu0 %v164
    %3167 = vmatprep.subr.mxu0 0.0
    %3168 = vmatpush1.msra.mxu0 %v165
    %3169 = vmatprep.subr.mxu0 0.0
    %3170 = vmatpush1.msra.mxu0 %v166
    %3171 = vmatprep.subr.mxu0 0.0
    %3172 = vmatpush1.msra.mxu0 %v167
    %3173 = vmatprep.subr.mxu0 0.0
    %3174 = vmatpush1.msra.mxu0 0.0
    %3175 = vmatprep.subr.mxu0 0.0
    %3176 = vmatpush1.msra.mxu0 0.0
    %3177 = vmatprep.subr.mxu0 0.0
    %3178 = vmatpush1.msra.mxu0 0.0
    %3179 = vmatprep.subr.mxu0 0.0
    %3180 = vmatpush1.msra.mxu0 0.0
    %3181 = vmatprep.subr.mxu0 0.0
    %3182 = vmatpush1.msra.mxu0 0.0
    %3183 = vmatprep.subr.mxu0 0.0
    %3184 = vmatpush1.msra.mxu0 0.0
    %3185 = vmatprep.subr.mxu0 0.0
    %3186 = vmatpush1.msra.mxu0 0.0
    %3187 = vmatprep.subr.mxu0 0.0
    %3188 = vmatpush1.msra.mxu0 0.0
    %3189 = vmatprep.subr.mxu0 0.0
    %3190 = vmatpush1.msra.mxu0 0.0
    %3191 = vmatprep.subr.mxu0 0.0
    %3192 = vmatpush1.msra.mxu0 0.0
    %3193 = vmatprep.subr.mxu0 0.0
    %3194 = vmatpush1.msra.mxu0 0.0
    %3195 = vmatprep.subr.mxu0 0.0
    %3196 = vmatpush1.msra.mxu0 0.0
    %3197 = vmatprep.subr.mxu0 0.0
    %3198 = vmatpush1.msra.mxu0 0.0
    %3199 = vmatprep.subr.mxu0 0.0
    %3200 = vmatpush1.msra.mxu0 0.0
    %3201 = vmatprep.subr.mxu0 0.0
    %3202 = vmatpush1.msra.mxu0 0.0
    %3203 = vmatprep.subr.mxu0 0.0
    %3204 = vmatpush1.msra.mxu0 0.0
    %3205 = vmatprep.mubr.f32.mxu0 0.0
    %3206 = vmatmul.mubr.f32.gmra.mrb[0].mxu0 %v3134
    %v3207 = vpop.f32.mrb[0].mxu0
    %v3208 = vadd.f32 %v150, %v3207
    %v3209 = vpop.f32.mrb[0].mxu0
    %3210 = vmatprep.mubr.f32.mxu0 0.0
    %3211 = vmatmul.mubr.f32.gmra.mrb[0].mxu0 %v3135
    %v3212 = vpop.f32.mrb[0].mxu0
    %v3213 = vadd.f32 %v151, %v3212
    %v3214 = vpop.f32.mrb[0].mxu0
    %3215 = vdwg.mxu0
    %v3216 = vld [vmem:[#allocation13 + $0xf] sm:$0x1]
    %v3217 = vlaneseq
    %v3218 = vshrl.u32 %v3217, 7
    %v3219 = vsub.s32 0, %v3218
    %v3220 = vrot.slane %v3216, %v3219
    %v3221 = vadd.f32 %v3208, %v3220
    %v3222 = vadd.f32 %v3213, %v3220
    %v3223 = vtanh.pop %v3221
    %v3224 = vtanh.pop %v3222
    %3225 = vmatprep.subr.mxu0 0.0
    %3226 = vmatpush1.msra.mxu0 %v168
    %3227 = vmatprep.subr.mxu0 0.0
    %3228 = vmatpush1.msra.mxu0 %v169
    %3229 = vmatprep.subr.mxu0 0.0
    %3230 = vmatpush1.msra.mxu0 %v170
    %3231 = vmatprep.subr.mxu0 0.0
    %3232 = vmatpush1.msra.mxu0 %v171
    %3233 = vmatprep.subr.mxu0 0.0
    %3234 = vmatpush1.msra.mxu0 %v172
    %3235 = vmatprep.subr.mxu0 0.0
    %3236 = vmatpush1.msra.mxu0 %v173
    %3237 = vmatprep.subr.mxu0 0.0
    %3238 = vmatpush1.msra.mxu0 %v174
    %3239 = vmatprep.subr.mxu0 0.0
    %3240 = vmatpush1.msra.mxu0 %v175
    %3241 = vmatprep.subr.mxu0 0.0
    %3242 = vmatpush1.msra.mxu0 %v176
    %3243 = vmatprep.subr.mxu0 0.0
    %3244 = vmatpush1.msra.mxu0 %v177
    %3245 = vmatprep.subr.mxu0 0.0
    %3246 = vmatpush1.msra.mxu0 %v178
    %3247 = vmatprep.subr.mxu0 0.0
    %3248 = vmatpush1.msra.mxu0 %v179
    %3249 = vmatprep.subr.mxu0 0.0
    %3250 = vmatpush1.msra.mxu0 %v180
    %3251 = vmatprep.subr.mxu0 0.0
    %3252 = vmatpush1.msra.mxu0 %v181
    %3253 = vmatprep.subr.mxu0 0.0
    %3254 = vmatpush1.msra.mxu0 %v182
    %3255 = vmatprep.subr.mxu0 0.0
    %3256 = vmatpush1.msra.mxu0 %v183
    %3257 = vmatprep.subr.mxu0 0.0
    %3258 = vmatpush1.msra.mxu0 0.0
    %3259 = vmatprep.subr.mxu0 0.0
    %3260 = vmatpush1.msra.mxu0 0.0
    %3261 = vmatprep.subr.mxu0 0.0
    %3262 = vmatpush1.msra.mxu0 0.0
    %3263 = vmatprep.subr.mxu0 0.0
    %3264 = vmatpush1.msra.mxu0 0.0
    %3265 = vmatprep.subr.mxu0 0.0
    %3266 = vmatpush1.msra.mxu0 0.0
    %3267 = vmatprep.subr.mxu0 0.0
    %3268 = vmatpush1.msra.mxu0 0.0
    %3269 = vmatprep.subr.mxu0 0.0
    %3270 = vmatpush1.msra.mxu0 0.0
    %3271 = vmatprep.subr.mxu0 0.0
    %3272 = vmatpush1.msra.mxu0 0.0
    %3273 = vmatprep.subr.mxu0 0.0
    %3274 = vmatpush1.msra.mxu0 0.0
    %3275 = vmatprep.subr.mxu0 0.0
    %3276 = vmatpush1.msra.mxu0 0.0
    %3277 = vmatprep.subr.mxu0 0.0
    %3278 = vmatpush1.msra.mxu0 0.0
    %3279 = vmatprep.subr.mxu0 0.0
    %3280 = vmatpush1.msra.mxu0 0.0
    %3281 = vmatprep.subr.mxu0 0.0
    %3282 = vmatpush1.msra.mxu0 0.0
    %3283 = vmatprep.subr.mxu0 0.0
    %3284 = vmatpush1.msra.mxu0 0.0
    %3285 = vmatprep.subr.mxu0 0.0
    %3286 = vmatpush1.msra.mxu0 0.0
    %3287 = vmatprep.subr.mxu0 0.0
    %3288 = vmatpush1.msra.mxu0 0.0
    %3289 = vmatprep.mubr.f32.mxu0 0.0
    %3290 = vmatmul.mubr.f32.gmra.mrb[0].mxu0 %v3223
    %v3291 = vpop.f32.mrb[0].mxu0
    %v3292 = vadd.f32 %v284, %v3291
    %v3293 = vpop.f32.mrb[0].mxu0
    %3294 = vmatprep.mubr.f32.mxu0 0.0
    %3295 = vmatmul.mubr.f32.gmra.mrb[0].mxu0 %v3224
    %v3296 = vpop.f32.mrb[0].mxu0
    %v3297 = vadd.f32 %v284, %v3296
    %v3298 = vpop.f32.mrb[0].mxu0
    %3299 = vdwg.mxu0
    %v3300 = vstv %s3136
    %v3301 = vmul.f32 %v3300, %v3134
    %v3302 = vmul.f32 %v3300, %v3135
    %v3303 = vstv %s3137
    %v3304 = vmul.f32 %v3303, %v3292
    %v3305 = vmul.f32 %v3303, %v3297
    %v3306 = vsub.f32 %v3301, %v3304
    %v3307 = vsub.f32 %v3302, %v3305
    %v3308 = vmax.f32 %v3306, -1.0
    %v3309 = vmax.f32 %v3307, -1.0
    %v3310 = vmin.f32 %v3308, 1.0
    %v3311 = vmin.f32 %v3309, 1.0
    %v3312 = vstv %s3138
    %v3313 = vmul.f32 %v3312, %v3310
    %v3314 = vmul.f32 %v3312, %v3311
    %v3315 = vstv %s3139
    %v3316 = vmul.f32 %v3315, %v3134
    %v3317 = vmul.f32 %v3315, %v3135
    %v3318 = vadd.f32 %v3313, %v3316
    %v3319 = vadd.f32 %v3314, %v3317
    %s3320 = scalar_lea.vmem [#allocation10], 240
    %v3321 = vld [vmem:[%s3320] sm:$0xff]
    %v3322 = vld [vmem:[%s3320 + $0x8] sm:$0xff]
    %v3323 = vstv %s3140
    %v3324 = vmul.f32 %v3323, %v3321
    %v3325 = vmul.f32 %v3323, %v3322
    %v3326 = vadd.f32 %v3318, %v3324
    %v3327 = vadd.f32 %v3319, %v3325
    %v3328 = vmul.f32 %v3326, %v144
    %v3329 = vmul.f32 %v3327, %v145
    %v3330 = vadd.f32 %v148, %v3328
    %v3331 = vadd.f32 %v149, %v3329
    %s3332 = sld [smem:[#allocation2 + $0x81]]
    %s3333 = sld [smem:[#allocation2 + $0x82]]
    %s3334 = sld [smem:[#allocation2 + $0x83]]
    %s3335 = sld [smem:[#allocation2 + $0x84]]
    %s3336 = sld [smem:[#allocation2 + $0x85]]
    %3337 = vmatprep.subr.mxu0 0.0
    %3338 = vmatpush1.msra.mxu0 %v152
    %3339 = vmatprep.subr.mxu0 0.0
    %3340 = vmatpush1.msra.mxu0 %v153
    %3341 = vmatprep.subr.mxu0 0.0
    %3342 = vmatpush1.msra.mxu0 %v154
    %3343 = vmatprep.subr.mxu0 0.0
    %3344 = vmatpush1.msra.mxu0 %v155
    %3345 = vmatprep.subr.mxu0 0.0
    %3346 = vmatpush1.msra.mxu0 %v156
    %3347 = vmatprep.subr.mxu0 0.0
    %3348 = vmatpush1.msra.mxu0 %v157
    %3349 = vmatprep.subr.mxu0 0.0
    %3350 = vmatpush1.msra.mxu0 %v158
    %3351 = vmatprep.subr.mxu0 0.0
    %3352 = vmatpush1.msra.mxu0 %v159
    %3353 = vmatprep.subr.mxu0 0.0
    %3354 = vmatpush1.msra.mxu0 %v160
    %3355 = vmatprep.subr.mxu0 0.0
    %3356 = vmatpush1.msra.mxu0 %v161
    %3357 = vmatprep.subr.mxu0 0.0
    %3358 = vmatpush1.msra.mxu0 %v162
    %3359 = vmatprep.subr.mxu0 0.0
    %3360 = vmatpush1.msra.mxu0 %v163
    %3361 = vmatprep.subr.mxu0 0.0
    %3362 = vmatpush1.msra.mxu0 %v164
    %3363 = vmatprep.subr.mxu0 0.0
    %3364 = vmatpush1.msra.mxu0 %v165
    %3365 = vmatprep.subr.mxu0 0.0
    %3366 = vmatpush1.msra.mxu0 %v166
    %3367 = vmatprep.subr.mxu0 0.0
    %3368 = vmatpush1.msra.mxu0 %v167
    %3369 = vmatprep.subr.mxu0 0.0
    %3370 = vmatpush1.msra.mxu0 0.0
    %3371 = vmatprep.subr.mxu0 0.0
    %3372 = vmatpush1.msra.mxu0 0.0
    %3373 = vmatprep.subr.mxu0 0.0
    %3374 = vmatpush1.msra.mxu0 0.0
    %3375 = vmatprep.subr.mxu0 0.0
    %3376 = vmatpush1.msra.mxu0 0.0
    %3377 = vmatprep.subr.mxu0 0.0
    %3378 = vmatpush1.msra.mxu0 0.0
    %3379 = vmatprep.subr.mxu0 0.0
    %3380 = vmatpush1.msra.mxu0 0.0
    %3381 = vmatprep.subr.mxu0 0.0
    %3382 = vmatpush1.msra.mxu0 0.0
    %3383 = vmatprep.subr.mxu0 0.0
    %3384 = vmatpush1.msra.mxu0 0.0
    %3385 = vmatprep.subr.mxu0 0.0
    %3386 = vmatpush1.msra.mxu0 0.0
    %3387 = vmatprep.subr.mxu0 0.0
    %3388 = vmatpush1.msra.mxu0 0.0
    %3389 = vmatprep.subr.mxu0 0.0
    %3390 = vmatpush1.msra.mxu0 0.0
    %3391 = vmatprep.subr.mxu0 0.0
    %3392 = vmatpush1.msra.mxu0 0.0
    %3393 = vmatprep.subr.mxu0 0.0
    %3394 = vmatpush1.msra.mxu0 0.0
    %3395 = vmatprep.subr.mxu0 0.0
    %3396 = vmatpush1.msra.mxu0 0.0
    %3397 = vmatprep.subr.mxu0 0.0
    %3398 = vmatpush1.msra.mxu0 0.0
    %3399 = vmatprep.subr.mxu0 0.0
    %3400 = vmatpush1.msra.mxu0 0.0
    %3401 = vmatprep.mubr.f32.mxu0 0.0
    %3402 = vmatmul.mubr.f32.gmra.mrb[0].mxu0 %v3330
    %v3403 = vpop.f32.mrb[0].mxu0
    %v3404 = vadd.f32 %v150, %v3403
    %v3405 = vpop.f32.mrb[0].mxu0
    %3406 = vmatprep.mubr.f32.mxu0 0.0
    %3407 = vmatmul.mubr.f32.gmra.mrb[0].mxu0 %v3331
    %v3408 = vpop.f32.mrb[0].mxu0
    %v3409 = vadd.f32 %v151, %v3408
    %v3410 = vpop.f32.mrb[0].mxu0
    %3411 = vdwg.mxu0
    %v3412 = vld [vmem:[#allocation13 + $0x10] sm:$0x1]
    %v3413 = vlaneseq
    %v3414 = vshrl.u32 %v3413, 7
    %v3415 = vsub.s32 0, %v3414
    %v3416 = vrot.slane %v3412, %v3415
    %v3417 = vadd.f32 %v3404, %v3416
    %v3418 = vadd.f32 %v3409, %v3416
    %v3419 = vtanh.pop %v3417
    %v3420 = vtanh.pop %v3418
    %3421 = vmatprep.subr.mxu0 0.0
    %3422 = vmatpush1.msra.mxu0 %v168
    %3423 = vmatprep.subr.mxu0 0.0
    %3424 = vmatpush1.msra.mxu0 %v169
    %3425 = vmatprep.subr.mxu0 0.0
    %3426 = vmatpush1.msra.mxu0 %v170
    %3427 = vmatprep.subr.mxu0 0.0
    %3428 = vmatpush1.msra.mxu0 %v171
    %3429 = vmatprep.subr.mxu0 0.0
    %3430 = vmatpush1.msra.mxu0 %v172
    %3431 = vmatprep.subr.mxu0 0.0
    %3432 = vmatpush1.msra.mxu0 %v173
    %3433 = vmatprep.subr.mxu0 0.0
    %3434 = vmatpush1.msra.mxu0 %v174
    %3435 = vmatprep.subr.mxu0 0.0
    %3436 = vmatpush1.msra.mxu0 %v175
    %3437 = vmatprep.subr.mxu0 0.0
    %3438 = vmatpush1.msra.mxu0 %v176
    %3439 = vmatprep.subr.mxu0 0.0
    %3440 = vmatpush1.msra.mxu0 %v177
    %3441 = vmatprep.subr.mxu0 0.0
    %3442 = vmatpush1.msra.mxu0 %v178
    %3443 = vmatprep.subr.mxu0 0.0
    %3444 = vmatpush1.msra.mxu0 %v179
    %3445 = vmatprep.subr.mxu0 0.0
    %3446 = vmatpush1.msra.mxu0 %v180
    %3447 = vmatprep.subr.mxu0 0.0
    %3448 = vmatpush1.msra.mxu0 %v181
    %3449 = vmatprep.subr.mxu0 0.0
    %3450 = vmatpush1.msra.mxu0 %v182
    %3451 = vmatprep.subr.mxu0 0.0
    %3452 = vmatpush1.msra.mxu0 %v183
    %3453 = vmatprep.subr.mxu0 0.0
    %3454 = vmatpush1.msra.mxu0 0.0
    %3455 = vmatprep.subr.mxu0 0.0
    %3456 = vmatpush1.msra.mxu0 0.0
    %3457 = vmatprep.subr.mxu0 0.0
    %3458 = vmatpush1.msra.mxu0 0.0
    %3459 = vmatprep.subr.mxu0 0.0
    %3460 = vmatpush1.msra.mxu0 0.0
    %3461 = vmatprep.subr.mxu0 0.0
    %3462 = vmatpush1.msra.mxu0 0.0
    %3463 = vmatprep.subr.mxu0 0.0
    %3464 = vmatpush1.msra.mxu0 0.0
    %3465 = vmatprep.subr.mxu0 0.0
    %3466 = vmatpush1.msra.mxu0 0.0
    %3467 = vmatprep.subr.mxu0 0.0
    %3468 = vmatpush1.msra.mxu0 0.0
    %3469 = vmatprep.subr.mxu0 0.0
    %3470 = vmatpush1.msra.mxu0 0.0
    %3471 = vmatprep.subr.mxu0 0.0
    %3472 = vmatpush1.msra.mxu0 0.0
    %3473 = vmatprep.subr.mxu0 0.0
    %3474 = vmatpush1.msra.mxu0 0.0
    %3475 = vmatprep.subr.mxu0 0.0
    %3476 = vmatpush1.msra.mxu0 0.0
    %3477 = vmatprep.subr.mxu0 0.0
    %3478 = vmatpush1.msra.mxu0 0.0
    %3479 = vmatprep.subr.mxu0 0.0
    %3480 = vmatpush1.msra.mxu0 0.0
    %3481 = vmatprep.subr.mxu0 0.0
    %3482 = vmatpush1.msra.mxu0 0.0
    %3483 = vmatprep.subr.mxu0 0.0
    %3484 = vmatpush1.msra.mxu0 0.0
    %3485 = vmatprep.mubr.f32.mxu0 0.0
    %3486 = vmatmul.mubr.f32.gmra.mrb[0].mxu0 %v3419
    %v3487 = vpop.f32.mrb[0].mxu0
    %v3488 = vadd.f32 %v284, %v3487
    %v3489 = vpop.f32.mrb[0].mxu0
    %3490 = vmatprep.mubr.f32.mxu0 0.0
    %3491 = vmatmul.mubr.f32.gmra.mrb[0].mxu0 %v3420
    %v3492 = vpop.f32.mrb[0].mxu0
    %v3493 = vadd.f32 %v284, %v3492
    %v3494 = vpop.f32.mrb[0].mxu0
    %3495 = vdwg.mxu0
    %v3496 = vstv %s3332
    %v3497 = vmul.f32 %v3496, %v3330
    %v3498 = vmul.f32 %v3496, %v3331
    %v3499 = vstv %s3333
    %v3500 = vmul.f32 %v3499, %v3488
    %v3501 = vmul.f32 %v3499, %v3493
    %v3502 = vsub.f32 %v3497, %v3500
    %v3503 = vsub.f32 %v3498, %v3501
    %v3504 = vmax.f32 %v3502, -1.0
    %v3505 = vmax.f32 %v3503, -1.0
    %v3506 = vmin.f32 %v3504, 1.0
    %v3507 = vmin.f32 %v3505, 1.0
    %v3508 = vstv %s3334
    %v3509 = vmul.f32 %v3508, %v3506
    %v3510 = vmul.f32 %v3508, %v3507
    %v3511 = vstv %s3335
    %v3512 = vmul.f32 %v3511, %v3330
    %v3513 = vmul.f32 %v3511, %v3331
    %v3514 = vadd.f32 %v3509, %v3512
    %v3515 = vadd.f32 %v3510, %v3513
    %s3516 = scalar_lea.vmem [#allocation10], 256
    %v3517 = vld [vmem:[%s3516] sm:$0xff]
    %v3518 = vld [vmem:[%s3516 + $0x8] sm:$0xff]
    %v3519 = vstv %s3336
    %v3520 = vmul.f32 %v3519, %v3517
    %v3521 = vmul.f32 %v3519, %v3518
    %v3522 = vadd.f32 %v3514, %v3520
    %v3523 = vadd.f32 %v3515, %v3521
    %v3524 = vmul.f32 %v3522, %v144
    %v3525 = vmul.f32 %v3523, %v145
    %v3526 = vadd.f32 %v148, %v3524
    %v3527 = vadd.f32 %v149, %v3525
    %s3528 = sld [smem:[#allocation2 + $0x89]]
    %s3529 = sld [smem:[#allocation2 + $0x8a]]
    %s3530 = sld [smem:[#allocation2 + $0x8b]]
    %s3531 = sld [smem:[#allocation2 + $0x8c]]
    %s3532 = sld [smem:[#allocation2 + $0x8d]]
    %3533 = vmatprep.subr.mxu0 0.0
    %3534 = vmatpush1.msra.mxu0 %v152
    %3535 = vmatprep.subr.mxu0 0.0
    %3536 = vmatpush1.msra.mxu0 %v153
    %3537 = vmatprep.subr.mxu0 0.0
    %3538 = vmatpush1.msra.mxu0 %v154
    %3539 = vmatprep.subr.mxu0 0.0
    %3540 = vmatpush1.msra.mxu0 %v155
    %3541 = vmatprep.subr.mxu0 0.0
    %3542 = vmatpush1.msra.mxu0 %v156
    %3543 = vmatprep.subr.mxu0 0.0
    %3544 = vmatpush1.msra.mxu0 %v157
    %3545 = vmatprep.subr.mxu0 0.0
    %3546 = vmatpush1.msra.mxu0 %v158
    %3547 = vmatprep.subr.mxu0 0.0
    %3548 = vmatpush1.msra.mxu0 %v159
    %3549 = vmatprep.subr.mxu0 0.0
    %3550 = vmatpush1.msra.mxu0 %v160
    %3551 = vmatprep.subr.mxu0 0.0
    %3552 = vmatpush1.msra.mxu0 %v161
    %3553 = vmatprep.subr.mxu0 0.0
    %3554 = vmatpush1.msra.mxu0 %v162
    %3555 = vmatprep.subr.mxu0 0.0
    %3556 = vmatpush1.msra.mxu0 %v163
    %3557 = vmatprep.subr.mxu0 0.0
    %3558 = vmatpush1.msra.mxu0 %v164
    %3559 = vmatprep.subr.mxu0 0.0
    %3560 = vmatpush1.msra.mxu0 %v165
    %3561 = vmatprep.subr.mxu0 0.0
    %3562 = vmatpush1.msra.mxu0 %v166
    %3563 = vmatprep.subr.mxu0 0.0
    %3564 = vmatpush1.msra.mxu0 %v167
    %3565 = vmatprep.subr.mxu0 0.0
    %3566 = vmatpush1.msra.mxu0 0.0
    %3567 = vmatprep.subr.mxu0 0.0
    %3568 = vmatpush1.msra.mxu0 0.0
    %3569 = vmatprep.subr.mxu0 0.0
    %3570 = vmatpush1.msra.mxu0 0.0
    %3571 = vmatprep.subr.mxu0 0.0
    %3572 = vmatpush1.msra.mxu0 0.0
    %3573 = vmatprep.subr.mxu0 0.0
    %3574 = vmatpush1.msra.mxu0 0.0
    %3575 = vmatprep.subr.mxu0 0.0
    %3576 = vmatpush1.msra.mxu0 0.0
    %3577 = vmatprep.subr.mxu0 0.0
    %3578 = vmatpush1.msra.mxu0 0.0
    %3579 = vmatprep.subr.mxu0 0.0
    %3580 = vmatpush1.msra.mxu0 0.0
    %3581 = vmatprep.subr.mxu0 0.0
    %3582 = vmatpush1.msra.mxu0 0.0
    %3583 = vmatprep.subr.mxu0 0.0
    %3584 = vmatpush1.msra.mxu0 0.0
    %3585 = vmatprep.subr.mxu0 0.0
    %3586 = vmatpush1.msra.mxu0 0.0
    %3587 = vmatprep.subr.mxu0 0.0
    %3588 = vmatpush1.msra.mxu0 0.0
    %3589 = vmatprep.subr.mxu0 0.0
    %3590 = vmatpush1.msra.mxu0 0.0
    %3591 = vmatprep.subr.mxu0 0.0
    %3592 = vmatpush1.msra.mxu0 0.0
    %3593 = vmatprep.subr.mxu0 0.0
    %3594 = vmatpush1.msra.mxu0 0.0
    %3595 = vmatprep.subr.mxu0 0.0
    %3596 = vmatpush1.msra.mxu0 0.0
    %3597 = vmatprep.mubr.f32.mxu0 0.0
    %3598 = vmatmul.mubr.f32.gmra.mrb[0].mxu0 %v3526
    %v3599 = vpop.f32.mrb[0].mxu0
    %v3600 = vadd.f32 %v150, %v3599
    %v3601 = vpop.f32.mrb[0].mxu0
    %3602 = vmatprep.mubr.f32.mxu0 0.0
    %3603 = vmatmul.mubr.f32.gmra.mrb[0].mxu0 %v3527
    %v3604 = vpop.f32.mrb[0].mxu0
    %v3605 = vadd.f32 %v151, %v3604
    %v3606 = vpop.f32.mrb[0].mxu0
    %3607 = vdwg.mxu0
    %v3608 = vld [vmem:[#allocation13 + $0x11] sm:$0x1]
    %v3609 = vlaneseq
    %v3610 = vshrl.u32 %v3609, 7
    %v3611 = vsub.s32 0, %v3610
    %v3612 = vrot.slane %v3608, %v3611
    %v3613 = vadd.f32 %v3600, %v3612
    %v3614 = vadd.f32 %v3605, %v3612
    %v3615 = vtanh.pop %v3613
    %v3616 = vtanh.pop %v3614
    %3617 = vmatprep.subr.mxu0 0.0
    %3618 = vmatpush1.msra.mxu0 %v168
    %3619 = vmatprep.subr.mxu0 0.0
    %3620 = vmatpush1.msra.mxu0 %v169
    %3621 = vmatprep.subr.mxu0 0.0
    %3622 = vmatpush1.msra.mxu0 %v170
    %3623 = vmatprep.subr.mxu0 0.0
    %3624 = vmatpush1.msra.mxu0 %v171
    %3625 = vmatprep.subr.mxu0 0.0
    %3626 = vmatpush1.msra.mxu0 %v172
    %3627 = vmatprep.subr.mxu0 0.0
    %3628 = vmatpush1.msra.mxu0 %v173
    %3629 = vmatprep.subr.mxu0 0.0
    %3630 = vmatpush1.msra.mxu0 %v174
    %3631 = vmatprep.subr.mxu0 0.0
    %3632 = vmatpush1.msra.mxu0 %v175
    %3633 = vmatprep.subr.mxu0 0.0
    %3634 = vmatpush1.msra.mxu0 %v176
    %3635 = vmatprep.subr.mxu0 0.0
    %3636 = vmatpush1.msra.mxu0 %v177
    %3637 = vmatprep.subr.mxu0 0.0
    %3638 = vmatpush1.msra.mxu0 %v178
    %3639 = vmatprep.subr.mxu0 0.0
    %3640 = vmatpush1.msra.mxu0 %v179
    %3641 = vmatprep.subr.mxu0 0.0
    %3642 = vmatpush1.msra.mxu0 %v180
    %3643 = vmatprep.subr.mxu0 0.0
    %3644 = vmatpush1.msra.mxu0 %v181
    %3645 = vmatprep.subr.mxu0 0.0
    %3646 = vmatpush1.msra.mxu0 %v182
    %3647 = vmatprep.subr.mxu0 0.0
    %3648 = vmatpush1.msra.mxu0 %v183
    %3649 = vmatprep.subr.mxu0 0.0
    %3650 = vmatpush1.msra.mxu0 0.0
    %3651 = vmatprep.subr.mxu0 0.0
    %3652 = vmatpush1.msra.mxu0 0.0
    %3653 = vmatprep.subr.mxu0 0.0
    %3654 = vmatpush1.msra.mxu0 0.0
    %3655 = vmatprep.subr.mxu0 0.0
    %3656 = vmatpush1.msra.mxu0 0.0
    %3657 = vmatprep.subr.mxu0 0.0
    %3658 = vmatpush1.msra.mxu0 0.0
    %3659 = vmatprep.subr.mxu0 0.0
    %3660 = vmatpush1.msra.mxu0 0.0
    %3661 = vmatprep.subr.mxu0 0.0
    %3662 = vmatpush1.msra.mxu0 0.0
    %3663 = vmatprep.subr.mxu0 0.0
    %3664 = vmatpush1.msra.mxu0 0.0
    %3665 = vmatprep.subr.mxu0 0.0
    %3666 = vmatpush1.msra.mxu0 0.0
    %3667 = vmatprep.subr.mxu0 0.0
    %3668 = vmatpush1.msra.mxu0 0.0
    %3669 = vmatprep.subr.mxu0 0.0
    %3670 = vmatpush1.msra.mxu0 0.0
    %3671 = vmatprep.subr.mxu0 0.0
    %3672 = vmatpush1.msra.mxu0 0.0
    %3673 = vmatprep.subr.mxu0 0.0
    %3674 = vmatpush1.msra.mxu0 0.0
    %3675 = vmatprep.subr.mxu0 0.0
    %3676 = vmatpush1.msra.mxu0 0.0
    %3677 = vmatprep.subr.mxu0 0.0
    %3678 = vmatpush1.msra.mxu0 0.0
    %3679 = vmatprep.subr.mxu0 0.0
    %3680 = vmatpush1.msra.mxu0 0.0
    %3681 = vmatprep.mubr.f32.mxu0 0.0
    %3682 = vmatmul.mubr.f32.gmra.mrb[0].mxu0 %v3615
    %v3683 = vpop.f32.mrb[0].mxu0
    %v3684 = vadd.f32 %v284, %v3683
    %v3685 = vpop.f32.mrb[0].mxu0
    %3686 = vmatprep.mubr.f32.mxu0 0.0
    %3687 = vmatmul.mubr.f32.gmra.mrb[0].mxu0 %v3616
    %v3688 = vpop.f32.mrb[0].mxu0
    %v3689 = vadd.f32 %v284, %v3688
    %v3690 = vpop.f32.mrb[0].mxu0
    %3691 = vdwg.mxu0
    %v3692 = vstv %s3528
    %v3693 = vmul.f32 %v3692, %v3526
    %v3694 = vmul.f32 %v3692, %v3527
    %v3695 = vstv %s3529
    %v3696 = vmul.f32 %v3695, %v3684
    %v3697 = vmul.f32 %v3695, %v3689
    %v3698 = vsub.f32 %v3693, %v3696
    %v3699 = vsub.f32 %v3694, %v3697
    %v3700 = vmax.f32 %v3698, -1.0
    %v3701 = vmax.f32 %v3699, -1.0
    %v3702 = vmin.f32 %v3700, 1.0
    %v3703 = vmin.f32 %v3701, 1.0
    %v3704 = vstv %s3530
    %v3705 = vmul.f32 %v3704, %v3702
    %v3706 = vmul.f32 %v3704, %v3703
    %v3707 = vstv %s3531
    %v3708 = vmul.f32 %v3707, %v3526
    %v3709 = vmul.f32 %v3707, %v3527
    %v3710 = vadd.f32 %v3705, %v3708
    %v3711 = vadd.f32 %v3706, %v3709
    %s3712 = scalar_lea.vmem [#allocation10], 272
    %v3713 = vld [vmem:[%s3712] sm:$0xff]
    %v3714 = vld [vmem:[%s3712 + $0x8] sm:$0xff]
    %v3715 = vstv %s3532
    %v3716 = vmul.f32 %v3715, %v3713
    %v3717 = vmul.f32 %v3715, %v3714
    %v3718 = vadd.f32 %v3710, %v3716
    %v3719 = vadd.f32 %v3711, %v3717
    %v3720 = vmul.f32 %v3718, %v144
    %v3721 = vmul.f32 %v3719, %v145
    %v3722 = vadd.f32 %v148, %v3720
    %v3723 = vadd.f32 %v149, %v3721
    %s3724 = sld [smem:[#allocation2 + $0x91]]
    %s3725 = sld [smem:[#allocation2 + $0x92]]
    %s3726 = sld [smem:[#allocation2 + $0x93]]
    %s3727 = sld [smem:[#allocation2 + $0x94]]
    %s3728 = sld [smem:[#allocation2 + $0x95]]
    %3729 = vmatprep.subr.mxu0 0.0
    %3730 = vmatpush1.msra.mxu0 %v152
    %3731 = vmatprep.subr.mxu0 0.0
    %3732 = vmatpush1.msra.mxu0 %v153
    %3733 = vmatprep.subr.mxu0 0.0
    %3734 = vmatpush1.msra.mxu0 %v154
    %3735 = vmatprep.subr.mxu0 0.0
    %3736 = vmatpush1.msra.mxu0 %v155
    %3737 = vmatprep.subr.mxu0 0.0
    %3738 = vmatpush1.msra.mxu0 %v156
    %3739 = vmatprep.subr.mxu0 0.0
    %3740 = vmatpush1.msra.mxu0 %v157
    %3741 = vmatprep.subr.mxu0 0.0
    %3742 = vmatpush1.msra.mxu0 %v158
    %3743 = vmatprep.subr.mxu0 0.0
    %3744 = vmatpush1.msra.mxu0 %v159
    %3745 = vmatprep.subr.mxu0 0.0
    %3746 = vmatpush1.msra.mxu0 %v160
    %3747 = vmatprep.subr.mxu0 0.0
    %3748 = vmatpush1.msra.mxu0 %v161
    %3749 = vmatprep.subr.mxu0 0.0
    %3750 = vmatpush1.msra.mxu0 %v162
    %3751 = vmatprep.subr.mxu0 0.0
    %3752 = vmatpush1.msra.mxu0 %v163
    %3753 = vmatprep.subr.mxu0 0.0
    %3754 = vmatpush1.msra.mxu0 %v164
    %3755 = vmatprep.subr.mxu0 0.0
    %3756 = vmatpush1.msra.mxu0 %v165
    %3757 = vmatprep.subr.mxu0 0.0
    %3758 = vmatpush1.msra.mxu0 %v166
    %3759 = vmatprep.subr.mxu0 0.0
    %3760 = vmatpush1.msra.mxu0 %v167
    %3761 = vmatprep.subr.mxu0 0.0
    %3762 = vmatpush1.msra.mxu0 0.0
    %3763 = vmatprep.subr.mxu0 0.0
    %3764 = vmatpush1.msra.mxu0 0.0
    %3765 = vmatprep.subr.mxu0 0.0
    %3766 = vmatpush1.msra.mxu0 0.0
    %3767 = vmatprep.subr.mxu0 0.0
    %3768 = vmatpush1.msra.mxu0 0.0
    %3769 = vmatprep.subr.mxu0 0.0
    %3770 = vmatpush1.msra.mxu0 0.0
    %3771 = vmatprep.subr.mxu0 0.0
    %3772 = vmatpush1.msra.mxu0 0.0
    %3773 = vmatprep.subr.mxu0 0.0
    %3774 = vmatpush1.msra.mxu0 0.0
    %3775 = vmatprep.subr.mxu0 0.0
    %3776 = vmatpush1.msra.mxu0 0.0
    %3777 = vmatprep.subr.mxu0 0.0
    %3778 = vmatpush1.msra.mxu0 0.0
    %3779 = vmatprep.subr.mxu0 0.0
    %3780 = vmatpush1.msra.mxu0 0.0
    %3781 = vmatprep.subr.mxu0 0.0
    %3782 = vmatpush1.msra.mxu0 0.0
    %3783 = vmatprep.subr.mxu0 0.0
    %3784 = vmatpush1.msra.mxu0 0.0
    %3785 = vmatprep.subr.mxu0 0.0
    %3786 = vmatpush1.msra.mxu0 0.0
    %3787 = vmatprep.subr.mxu0 0.0
    %3788 = vmatpush1.msra.mxu0 0.0
    %3789 = vmatprep.subr.mxu0 0.0
    %3790 = vmatpush1.msra.mxu0 0.0
    %3791 = vmatprep.subr.mxu0 0.0
    %3792 = vmatpush1.msra.mxu0 0.0
    %3793 = vmatprep.mubr.f32.mxu0 0.0
    %3794 = vmatmul.mubr.f32.gmra.mrb[0].mxu0 %v3722
    %v3795 = vpop.f32.mrb[0].mxu0
    %v3796 = vadd.f32 %v150, %v3795
    %v3797 = vpop.f32.mrb[0].mxu0
    %3798 = vmatprep.mubr.f32.mxu0 0.0
    %3799 = vmatmul.mubr.f32.gmra.mrb[0].mxu0 %v3723
    %v3800 = vpop.f32.mrb[0].mxu0
    %v3801 = vadd.f32 %v151, %v3800
    %v3802 = vpop.f32.mrb[0].mxu0
    %3803 = vdwg.mxu0
    %v3804 = vld [vmem:[#allocation13 + $0x12] sm:$0x1]
    %v3805 = vlaneseq
    %v3806 = vshrl.u32 %v3805, 7
    %v3807 = vsub.s32 0, %v3806
    %v3808 = vrot.slane %v3804, %v3807
    %v3809 = vadd.f32 %v3796, %v3808
    %v3810 = vadd.f32 %v3801, %v3808
    %v3811 = vtanh.pop %v3809
    %v3812 = vtanh.pop %v3810
    %3813 = vmatprep.subr.mxu0 0.0
    %3814 = vmatpush1.msra.mxu0 %v168
    %3815 = vmatprep.subr.mxu0 0.0
    %3816 = vmatpush1.msra.mxu0 %v169
    %3817 = vmatprep.subr.mxu0 0.0
    %3818 = vmatpush1.msra.mxu0 %v170
    %3819 = vmatprep.subr.mxu0 0.0
    %3820 = vmatpush1.msra.mxu0 %v171
    %3821 = vmatprep.subr.mxu0 0.0
    %3822 = vmatpush1.msra.mxu0 %v172
    %3823 = vmatprep.subr.mxu0 0.0
    %3824 = vmatpush1.msra.mxu0 %v173
    %3825 = vmatprep.subr.mxu0 0.0
    %3826 = vmatpush1.msra.mxu0 %v174
    %3827 = vmatprep.subr.mxu0 0.0
    %3828 = vmatpush1.msra.mxu0 %v175
    %3829 = vmatprep.subr.mxu0 0.0
    %3830 = vmatpush1.msra.mxu0 %v176
    %3831 = vmatprep.subr.mxu0 0.0
    %3832 = vmatpush1.msra.mxu0 %v177
    %3833 = vmatprep.subr.mxu0 0.0
    %3834 = vmatpush1.msra.mxu0 %v178
    %3835 = vmatprep.subr.mxu0 0.0
    %3836 = vmatpush1.msra.mxu0 %v179
    %3837 = vmatprep.subr.mxu0 0.0
    %3838 = vmatpush1.msra.mxu0 %v180
    %3839 = vmatprep.subr.mxu0 0.0
    %3840 = vmatpush1.msra.mxu0 %v181
    %3841 = vmatprep.subr.mxu0 0.0
    %3842 = vmatpush1.msra.mxu0 %v182
    %3843 = vmatprep.subr.mxu0 0.0
    %3844 = vmatpush1.msra.mxu0 %v183
    %3845 = vmatprep.subr.mxu0 0.0
    %3846 = vmatpush1.msra.mxu0 0.0
    %3847 = vmatprep.subr.mxu0 0.0
    %3848 = vmatpush1.msra.mxu0 0.0
    %3849 = vmatprep.subr.mxu0 0.0
    %3850 = vmatpush1.msra.mxu0 0.0
    %3851 = vmatprep.subr.mxu0 0.0
    %3852 = vmatpush1.msra.mxu0 0.0
    %3853 = vmatprep.subr.mxu0 0.0
    %3854 = vmatpush1.msra.mxu0 0.0
    %3855 = vmatprep.subr.mxu0 0.0
    %3856 = vmatpush1.msra.mxu0 0.0
    %3857 = vmatprep.subr.mxu0 0.0
    %3858 = vmatpush1.msra.mxu0 0.0
    %3859 = vmatprep.subr.mxu0 0.0
    %3860 = vmatpush1.msra.mxu0 0.0
    %3861 = vmatprep.subr.mxu0 0.0
    %3862 = vmatpush1.msra.mxu0 0.0
    %3863 = vmatprep.subr.mxu0 0.0
    %3864 = vmatpush1.msra.mxu0 0.0
    %3865 = vmatprep.subr.mxu0 0.0
    %3866 = vmatpush1.msra.mxu0 0.0
    %3867 = vmatprep.subr.mxu0 0.0
    %3868 = vmatpush1.msra.mxu0 0.0
    %3869 = vmatprep.subr.mxu0 0.0
    %3870 = vmatpush1.msra.mxu0 0.0
    %3871 = vmatprep.subr.mxu0 0.0
    %3872 = vmatpush1.msra.mxu0 0.0
    %3873 = vmatprep.subr.mxu0 0.0
    %3874 = vmatpush1.msra.mxu0 0.0
    %3875 = vmatprep.subr.mxu0 0.0
    %3876 = vmatpush1.msra.mxu0 0.0
    %3877 = vmatprep.mubr.f32.mxu0 0.0
    %3878 = vmatmul.mubr.f32.gmra.mrb[0].mxu0 %v3811
    %v3879 = vpop.f32.mrb[0].mxu0
    %v3880 = vadd.f32 %v284, %v3879
    %v3881 = vpop.f32.mrb[0].mxu0
    %3882 = vmatprep.mubr.f32.mxu0 0.0
    %3883 = vmatmul.mubr.f32.gmra.mrb[0].mxu0 %v3812
    %v3884 = vpop.f32.mrb[0].mxu0
    %v3885 = vadd.f32 %v284, %v3884
    %v3886 = vpop.f32.mrb[0].mxu0
    %3887 = vdwg.mxu0
    %v3888 = vstv %s3724
    %v3889 = vmul.f32 %v3888, %v3722
    %v3890 = vmul.f32 %v3888, %v3723
    %v3891 = vstv %s3725
    %v3892 = vmul.f32 %v3891, %v3880
    %v3893 = vmul.f32 %v3891, %v3885
    %v3894 = vsub.f32 %v3889, %v3892
    %v3895 = vsub.f32 %v3890, %v3893
    %v3896 = vmax.f32 %v3894, -1.0
    %v3897 = vmax.f32 %v3895, -1.0
    %v3898 = vmin.f32 %v3896, 1.0
    %v3899 = vmin.f32 %v3897, 1.0
    %v3900 = vstv %s3726
    %v3901 = vmul.f32 %v3900, %v3898
    %v3902 = vmul.f32 %v3900, %v3899
    %v3903 = vstv %s3727
    %v3904 = vmul.f32 %v3903, %v3722
    %v3905 = vmul.f32 %v3903, %v3723
    %v3906 = vadd.f32 %v3901, %v3904
    %v3907 = vadd.f32 %v3902, %v3905
    %s3908 = scalar_lea.vmem [#allocation10], 288
    %v3909 = vld [vmem:[%s3908] sm:$0xff]
    %v3910 = vld [vmem:[%s3908 + $0x8] sm:$0xff]
    %v3911 = vstv %s3728
    %v3912 = vmul.f32 %v3911, %v3909
    %v3913 = vmul.f32 %v3911, %v3910
    %v3914 = vadd.f32 %v3906, %v3912
    %v3915 = vadd.f32 %v3907, %v3913
    %v3916 = vmul.f32 %v3914, %v144
    %v3917 = vmul.f32 %v3915, %v145
    %v3918 = vadd.f32 %v148, %v3916
    %v3919 = vadd.f32 %v149, %v3917
    %s3920 = sld [smem:[#allocation2 + $0x99]]
    %s3921 = sld [smem:[#allocation2 + $0x9a]]
    %s3922 = sld [smem:[#allocation2 + $0x9b]]
    %s3923 = sld [smem:[#allocation2 + $0x9c]]
    %s3924 = sld [smem:[#allocation2 + $0x9d]]
    %3925 = vmatprep.subr.mxu0 0.0
    %3926 = vmatpush1.msra.mxu0 %v152
    %3927 = vmatprep.subr.mxu0 0.0
    %3928 = vmatpush1.msra.mxu0 %v153
    %3929 = vmatprep.subr.mxu0 0.0
    %3930 = vmatpush1.msra.mxu0 %v154
    %3931 = vmatprep.subr.mxu0 0.0
    %3932 = vmatpush1.msra.mxu0 %v155
    %3933 = vmatprep.subr.mxu0 0.0
    %3934 = vmatpush1.msra.mxu0 %v156
    %3935 = vmatprep.subr.mxu0 0.0
    %3936 = vmatpush1.msra.mxu0 %v157
    %3937 = vmatprep.subr.mxu0 0.0
    %3938 = vmatpush1.msra.mxu0 %v158
    %3939 = vmatprep.subr.mxu0 0.0
    %3940 = vmatpush1.msra.mxu0 %v159
    %3941 = vmatprep.subr.mxu0 0.0
    %3942 = vmatpush1.msra.mxu0 %v160
    %3943 = vmatprep.subr.mxu0 0.0
    %3944 = vmatpush1.msra.mxu0 %v161
    %3945 = vmatprep.subr.mxu0 0.0
    %3946 = vmatpush1.msra.mxu0 %v162
    %3947 = vmatprep.subr.mxu0 0.0
    %3948 = vmatpush1.msra.mxu0 %v163
    %3949 = vmatprep.subr.mxu0 0.0
    %3950 = vmatpush1.msra.mxu0 %v164
    %3951 = vmatprep.subr.mxu0 0.0
    %3952 = vmatpush1.msra.mxu0 %v165
    %3953 = vmatprep.subr.mxu0 0.0
    %3954 = vmatpush1.msra.mxu0 %v166
    %3955 = vmatprep.subr.mxu0 0.0
    %3956 = vmatpush1.msra.mxu0 %v167
    %3957 = vmatprep.subr.mxu0 0.0
    %3958 = vmatpush1.msra.mxu0 0.0
    %3959 = vmatprep.subr.mxu0 0.0
    %3960 = vmatpush1.msra.mxu0 0.0
    %3961 = vmatprep.subr.mxu0 0.0
    %3962 = vmatpush1.msra.mxu0 0.0
    %3963 = vmatprep.subr.mxu0 0.0
    %3964 = vmatpush1.msra.mxu0 0.0
    %3965 = vmatprep.subr.mxu0 0.0
    %3966 = vmatpush1.msra.mxu0 0.0
    %3967 = vmatprep.subr.mxu0 0.0
    %3968 = vmatpush1.msra.mxu0 0.0
    %3969 = vmatprep.subr.mxu0 0.0
    %3970 = vmatpush1.msra.mxu0 0.0
    %3971 = vmatprep.subr.mxu0 0.0
    %3972 = vmatpush1.msra.mxu0 0.0
    %3973 = vmatprep.subr.mxu0 0.0
    %3974 = vmatpush1.msra.mxu0 0.0
    %3975 = vmatprep.subr.mxu0 0.0
    %3976 = vmatpush1.msra.mxu0 0.0
    %3977 = vmatprep.subr.mxu0 0.0
    %3978 = vmatpush1.msra.mxu0 0.0
    %3979 = vmatprep.subr.mxu0 0.0
    %3980 = vmatpush1.msra.mxu0 0.0
    %3981 = vmatprep.subr.mxu0 0.0
    %3982 = vmatpush1.msra.mxu0 0.0
    %3983 = vmatprep.subr.mxu0 0.0
    %3984 = vmatpush1.msra.mxu0 0.0
    %3985 = vmatprep.subr.mxu0 0.0
    %3986 = vmatpush1.msra.mxu0 0.0
    %3987 = vmatprep.subr.mxu0 0.0
    %3988 = vmatpush1.msra.mxu0 0.0
    %3989 = vmatprep.mubr.f32.mxu0 0.0
    %3990 = vmatmul.mubr.f32.gmra.mrb[0].mxu0 %v3918
    %v3991 = vpop.f32.mrb[0].mxu0
    %v3992 = vadd.f32 %v150, %v3991
    %v3993 = vpop.f32.mrb[0].mxu0
    %3994 = vmatprep.mubr.f32.mxu0 0.0
    %3995 = vmatmul.mubr.f32.gmra.mrb[0].mxu0 %v3919
    %v3996 = vpop.f32.mrb[0].mxu0
    %v3997 = vadd.f32 %v151, %v3996
    %v3998 = vpop.f32.mrb[0].mxu0
    %3999 = vdwg.mxu0
    %v4000 = vld [vmem:[#allocation13 + $0x13] sm:$0x1]
    %v4001 = vlaneseq
    %v4002 = vshrl.u32 %v4001, 7
    %v4003 = vsub.s32 0, %v4002
    %v4004 = vrot.slane %v4000, %v4003
    %v4005 = vadd.f32 %v3992, %v4004
    %v4006 = vadd.f32 %v3997, %v4004
    %v4007 = vtanh.pop %v4005
    %v4008 = vtanh.pop %v4006
    %4009 = vmatprep.subr.mxu0 0.0
    %4010 = vmatpush1.msra.mxu0 %v168
    %4011 = vmatprep.subr.mxu0 0.0
    %4012 = vmatpush1.msra.mxu0 %v169
    %4013 = vmatprep.subr.mxu0 0.0
    %4014 = vmatpush1.msra.mxu0 %v170
    %4015 = vmatprep.subr.mxu0 0.0
    %4016 = vmatpush1.msra.mxu0 %v171
    %4017 = vmatprep.subr.mxu0 0.0
    %4018 = vmatpush1.msra.mxu0 %v172
    %4019 = vmatprep.subr.mxu0 0.0
    %4020 = vmatpush1.msra.mxu0 %v173
    %4021 = vmatprep.subr.mxu0 0.0
    %4022 = vmatpush1.msra.mxu0 %v174
    %4023 = vmatprep.subr.mxu0 0.0
    %4024 = vmatpush1.msra.mxu0 %v175
    %4025 = vmatprep.subr.mxu0 0.0
    %4026 = vmatpush1.msra.mxu0 %v176
    %4027 = vmatprep.subr.mxu0 0.0
    %4028 = vmatpush1.msra.mxu0 %v177
    %4029 = vmatprep.subr.mxu0 0.0
    %4030 = vmatpush1.msra.mxu0 %v178
    %4031 = vmatprep.subr.mxu0 0.0
    %4032 = vmatpush1.msra.mxu0 %v179
    %4033 = vmatprep.subr.mxu0 0.0
    %4034 = vmatpush1.msra.mxu0 %v180
    %4035 = vmatprep.subr.mxu0 0.0
    %4036 = vmatpush1.msra.mxu0 %v181
    %4037 = vmatprep.subr.mxu0 0.0
    %4038 = vmatpush1.msra.mxu0 %v182
    %4039 = vmatprep.subr.mxu0 0.0
    %4040 = vmatpush1.msra.mxu0 %v183
    %4041 = vmatprep.subr.mxu0 0.0
    %4042 = vmatpush1.msra.mxu0 0.0
    %4043 = vmatprep.subr.mxu0 0.0
    %4044 = vmatpush1.msra.mxu0 0.0
    %4045 = vmatprep.subr.mxu0 0.0
    %4046 = vmatpush1.msra.mxu0 0.0
    %4047 = vmatprep.subr.mxu0 0.0
    %4048 = vmatpush1.msra.mxu0 0.0
    %4049 = vmatprep.subr.mxu0 0.0
    %4050 = vmatpush1.msra.mxu0 0.0
    %4051 = vmatprep.subr.mxu0 0.0
    %4052 = vmatpush1.msra.mxu0 0.0
    %4053 = vmatprep.subr.mxu0 0.0
    %4054 = vmatpush1.msra.mxu0 0.0
    %4055 = vmatprep.subr.mxu0 0.0
    %4056 = vmatpush1.msra.mxu0 0.0
    %4057 = vmatprep.subr.mxu0 0.0
    %4058 = vmatpush1.msra.mxu0 0.0
    %4059 = vmatprep.subr.mxu0 0.0
    %4060 = vmatpush1.msra.mxu0 0.0
    %4061 = vmatprep.subr.mxu0 0.0
    %4062 = vmatpush1.msra.mxu0 0.0
    %4063 = vmatprep.subr.mxu0 0.0
    %4064 = vmatpush1.msra.mxu0 0.0
    %4065 = vmatprep.subr.mxu0 0.0
    %4066 = vmatpush1.msra.mxu0 0.0
    %4067 = vmatprep.subr.mxu0 0.0
    %4068 = vmatpush1.msra.mxu0 0.0
    %4069 = vmatprep.subr.mxu0 0.0
    %4070 = vmatpush1.msra.mxu0 0.0
    %4071 = vmatprep.subr.mxu0 0.0
    %4072 = vmatpush1.msra.mxu0 0.0
    %4073 = vmatprep.mubr.f32.mxu0 0.0
    %4074 = vmatmul.mubr.f32.gmra.mrb[0].mxu0 %v4007
    %v4075 = vpop.f32.mrb[0].mxu0
    %v4076 = vadd.f32 %v284, %v4075
    %v4077 = vpop.f32.mrb[0].mxu0
    %4078 = vmatprep.mubr.f32.mxu0 0.0
    %4079 = vmatmul.mubr.f32.gmra.mrb[0].mxu0 %v4008
    %v4080 = vpop.f32.mrb[0].mxu0
    %v4081 = vadd.f32 %v284, %v4080
    %v4082 = vpop.f32.mrb[0].mxu0
    %4083 = vdwg.mxu0
    %v4084 = vstv %s3920
    %v4085 = vmul.f32 %v4084, %v3918
    %v4086 = vmul.f32 %v4084, %v3919
    %v4087 = vstv %s3921
    %v4088 = vmul.f32 %v4087, %v4076
    %v4089 = vmul.f32 %v4087, %v4081
    %v4090 = vsub.f32 %v4085, %v4088
    %v4091 = vsub.f32 %v4086, %v4089
    %v4092 = vmax.f32 %v4090, -1.0
    %v4093 = vmax.f32 %v4091, -1.0
    %v4094 = vmin.f32 %v4092, 1.0
    %v4095 = vmin.f32 %v4093, 1.0
    %v4096 = vstv %s3922
    %v4097 = vmul.f32 %v4096, %v4094
    %v4098 = vmul.f32 %v4096, %v4095
    %v4099 = vstv %s3923
    %v4100 = vmul.f32 %v4099, %v3918
    %v4101 = vmul.f32 %v4099, %v3919
    %v4102 = vadd.f32 %v4097, %v4100
    %v4103 = vadd.f32 %v4098, %v4101
    %s4104 = scalar_lea.vmem [#allocation10], 304
    %v4105 = vld [vmem:[%s4104] sm:$0xff]
    %v4106 = vld [vmem:[%s4104 + $0x8] sm:$0xff]
    %v4107 = vstv %s3924
    %v4108 = vmul.f32 %v4107, %v4105
    %v4109 = vmul.f32 %v4107, %v4106
    %v4110 = vadd.f32 %v4102, %v4108
    %v4111 = vadd.f32 %v4103, %v4109
    %v4112 = vmul.f32 %v4110, %v144
    %v4113 = vmul.f32 %v4111, %v145
    %v4114 = vadd.f32 %v148, %v4112
    %v4115 = vadd.f32 %v149, %v4113
    %4116 = vst [vmem:[#allocation16] sm:$0xff] %v4114
    %4117 = vst [vmem:[#allocation16 + $0x8] sm:$0xff] %v4115
    // Predicated region
    $region74: #{tpu_custom_call.1} parent=1 // pred_check
      _
    $region75: #{tpu_custom_call.1} parent=1 // pred_check_branch
      %4119 = sbr.rel (0) target = $region77
    $region76: #{tpu_custom_call.1} parent=1 // pred_region
      %s4121 = ssub.s32 256, 256
      %4122 = vsyncadd [#allocation4], %s4121
      %s4123 = sshll.u32 [#allocation16], 4
      %s4124 = int_to_ptr.vmem [resolvable:$true] %s4123
      %4129 = dma.vmem_to_hbm [thread:$0]  %s4124, 256, %s10, [#allocation4], 128, 128, 8
    $region77: #{tpu_custom_call.1} parent=1 // pred_fallthru
      _
    // Predicated region
    $region78: #{tpu_custom_call.1} parent=1 // pred_check
      _
    $region79: #{tpu_custom_call.1} parent=1 // pred_check_branch
      %4131 = sbr.rel (0) target = $region81
    $region80: #{tpu_custom_call.1} parent=1 // pred_region
      %4132 = dma.done [#allocation4], 256
    $region81: #{tpu_custom_call.1} parent=1 // pred_fallthru
      _
    %4133 = vsyncpa [#allocation3], 1
    %4134 = vsyncpa [#allocation8], 1
    %4135 = vsyncpa [#allocation11], 1
    %4136 = vsyncpa [#allocation14], 1
    %4137 = vsyncpa [#allocation4], 1
    %4138 = vsyncpa [#allocation5], 1

</llo_original>
